<compile_context>
chip_gen: v6e
topology: v6e:2x2x1
jax: 0.10.0
libtpu: 0.0.40
codegen_flags: <defaults>
</compile_context>

<pallas_src>
import math
from functools import partial

import jax
import jax.numpy as jnp
from jax.experimental import pallas as pl
from jax.experimental.pallas import tpu as pltpu

EPS = 1e-6
NEG_INF = -1e9

LAYER_PARAM_ORDER = [
    "n1_a", "n1_b", "n2_a", "n2_b",
    "wqkv", "bqkv", "wo", "bo",
    "w1", "b1", "w2", "b2",
]


def _layer_norm(v, alpha, bias):
    # Matches the custom `Norm` module: unbiased std (ddof=1), eps on std.
    # Exact division here (no approx reciprocal) so error does not compound
    # across layers; softmax keeps the cheap EUP reciprocal.
    d = v.shape[-1]
    mean = jnp.mean(v, axis=-1, keepdims=True)
    c = v - mean
    var = jnp.sum(c * c, axis=-1, keepdims=True) * (1.0 / (d - 1))
    std = jnp.sqrt(var)
    return alpha * c / (std + EPS) + bias


def encoder_stack_kernel(x_ref, mask_ref,
                         n1a_ref, n1b_ref, n2a_ref, n2b_ref,
                         wqkv_ref, bqkv_ref, wo_ref, bo_ref,
                         w1_ref, b1_ref, w2_ref, b2_ref,
                         fna_ref, fnb_ref,
                         out_ref, act_ref, mbias_ref,
                         *, heads, d_k, n_layers):
    layer = pl.program_id(1)
    bb, S, D = act_ref.shape
    rows = bb * S

    # Load the embedded+PE activation into the resident accumulator and hoist
    # the (already head-replicated) additive mask bias once.
    @pl.when(layer == 0)
    def _():
        act_ref[...] = x_ref[...]
        mb = jnp.where(mask_ref[...] == 0, NEG_INF, 0.0).astype(jnp.float32)  # (bb,1,S)
        mbias_ref[...] = jnp.concatenate([mb] * heads, axis=0)                # (h*bb,1,S)

    x2 = act_ref[...].reshape(rows, D)                       # (rows, D) f32

    # ---- sublayer 1: pre-norm + multi-head self-attention + residual ----
    xn = _layer_norm(x2, n1a_ref[0], n1b_ref[0]).astype(jnp.bfloat16)  # 1 cast
    qkv = jnp.dot(xn, wqkv_ref[0], preferred_element_type=jnp.float32) + bqkv_ref[0]
    qkv = qkv.astype(jnp.bfloat16)                           # (rows, 3D), 1 cast

    def head_stack(base):
        # (heads*bb, S, d_k): head h of batch b lives at index h*bb + b.
        return jnp.concatenate(
            [qkv[:, base + h * d_k: base + (h + 1) * d_k].reshape(bb, S, d_k)
             for h in range(heads)], axis=0)

    qs = head_stack(0)
    ks = head_stack(D)
    vs = head_stack(2 * D)

    scale = 1.0 / math.sqrt(d_k)
    # ONE score matmul / softmax / weighted-sum for all heads (leading batch).
    s = jnp.einsum("bqd,bkd->bqk", qs, ks,
                   preferred_element_type=jnp.float32) * scale + mbias_ref[...]
    m = jnp.max(s, axis=-1, keepdims=True)                   # f32 softmax stats
    e = jnp.exp(s - m)
    denom = jnp.sum(e, axis=-1, keepdims=True)
    p = (e * pl.reciprocal(denom, approx=True)).astype(jnp.bfloat16)  # 1 cast
    o = jnp.einsum("bqk,bkd->bqd", p, vs,
                   preferred_element_type=jnp.float32)       # (heads*bb, S, d_k)

    # Re-interleave heads along the feature axis, then ONE full-K output proj.
    concat = jnp.concatenate([o[h * bb:(h + 1) * bb] for h in range(heads)],
                             axis=-1).reshape(rows, D)
    attn = jnp.dot(concat.astype(jnp.bfloat16), wo_ref[0],
                   preferred_element_type=jnp.float32) + bo_ref[0]
    x1 = x2 + attn                                           # residual (dropout = identity)

    # ---- sublayer 2: pre-norm + feed-forward + residual ----
    xn2 = _layer_norm(x1, n2a_ref[0], n2b_ref[0]).astype(jnp.bfloat16)
    h1 = jnp.dot(xn2, w1_ref[0], preferred_element_type=jnp.float32) + b1_ref[0]
    h1 = jnp.maximum(h1, 0.0).astype(jnp.bfloat16)           # ReLU (dropout = identity)
    ff = jnp.dot(h1, w2_ref[0], preferred_element_type=jnp.float32) + b2_ref[0]
    y = x1 + ff

    act_ref[...] = y.reshape(bb, S, D)                       # carry to next layer

    # Final `Norm` fused into the last layer step.
    @pl.when(layer == n_layers - 1)
    def _():
        out_ref[...] = _layer_norm(y, fna_ref[...], fnb_ref[...]).reshape(bb, S, D)


def _vmem_limit_bytes(bb, S, D, d_ff, heads):
    f32, bf16 = 4, 2
    rows = bb * S
    per_layer = (D * 3 * D * bf16 + 3 * D * f32      # wqkv, bqkv
                 + D * D * bf16 + D * f32            # wo, bo
                 + D * d_ff * bf16 + d_ff * f32      # w1, b1
                 + d_ff * D * bf16 + D * f32         # w2, b2
                 + 4 * D * f32)                      # norm scales / biases
    streamed = 2 * per_layer                         # double-buffered slabs
    resident = (3 * bb * S * D * f32                 # x block, out block, act scratch
                + heads * bb * S * f32)              # mask-bias scratch
    interm = (2 * rows * d_ff * f32                  # FFN intermediate (+slack)
              + 2 * rows * 3 * D * f32               # fused qkv
              + 4 * heads * bb * S * S * f32)        # scores / probs
    ws = streamed + resident + interm
    return int(min(max(2 * ws, 32 << 20), 64 << 20))  # fits a v7x core's 64 MiB


def encoder_stack(x, mask, layer_params, norm_a, norm_b, heads, *, batch_blocks=None):
    B, S, D = x.shape
    n_layers = layer_params["wqkv"].shape[0]
    d_ff = layer_params["w1"].shape[-1]
    d_k = D // heads
    if batch_blocks is None:
        # Only split the batch when each half still provides >=256 matmul rows
        # (keeps both v7x cores MXU-filled); otherwise a single-TC pass is
        # strictly cheaper (no duplicated per-step overhead / weight DMA).
        batch_blocks = 2 if (B % 2 == 0 and (B // 2) * S >= 256) else 1
    bb = B // batch_blocks

    stacked = [layer_params[name] for name in LAYER_PARAM_ORDER]

    in_specs = [
        pl.BlockSpec((bb, S, D), lambda p, l: (p, 0, 0)),    # activation tile
        pl.BlockSpec((bb, 1, S), lambda p, l: (p, 0, 0)),    # mask tile
    ]
    for w in stacked:                                        # per-layer weight slabs
        in_specs.append(pl.BlockSpec((1,) + w.shape[1:], lambda p, l: (l, 0, 0)))
    in_specs += [
        pl.BlockSpec(norm_a.shape, lambda p, l: (0, 0)),     # final-norm params
        pl.BlockSpec(norm_b.shape, lambda p, l: (0, 0)),
    ]

    kernel = partial(encoder_stack_kernel, heads=heads, d_k=d_k, n_layers=n_layers)
    return pl.pallas_call(
        kernel,
        out_shape=jax.ShapeDtypeStruct((B, S, D), jnp.float32),
        grid=(batch_blocks, n_layers),
        in_specs=in_specs,
        out_specs=pl.BlockSpec((bb, S, D), lambda p, l: (p, 0, 0)),
        scratch_shapes=[
            pltpu.VMEM((bb, S, D), jnp.float32),             # resident activation
            pltpu.VMEM((heads * bb, 1, S), jnp.float32),     # hoisted mask bias
        ],
        compiler_params=pltpu.CompilerParams(
            dimension_semantics=("parallel", "arbitrary"),
            vmem_limit_bytes=_vmem_limit_bytes(bb, S, D, d_ff, heads)),
    )(x, mask, *stacked, norm_a, norm_b)


def positional_encoding(seq_len, d_model):
    # Reproduces the reference (tutorial) formula exactly:
    # pe[pos, 2i]   = sin(pos / 10000 ** (2*(2i)   / d_model))
    # pe[pos, 2i+1] = cos(pos / 10000 ** (2*(2i+1) / d_model))
    pos = jnp.arange(seq_len, dtype=jnp.float32)[:, None]
    i = jnp.arange(0, d_model, 2, dtype=jnp.float32)
    sin_part = jnp.sin(pos / jnp.power(10000.0, (2.0 * i) / d_model))
    cos_part = jnp.cos(pos / jnp.power(10000.0, (2.0 * (i + 1.0)) / d_model))
    return jnp.stack([sin_part, cos_part], axis=-1).reshape(seq_len, d_model)


def encoder_forward(src, mask, params, heads, pe):
    # Embedding gather + positional encoding (glue). sqrt(d_model) is already
    # folded into the embedding table; pe is precomputed once.
    x = params["embed"][src] + pe[None, : src.shape[1]]
    # TODO(synk): dropout layers are identity here (eval-mode semantics).
    return encoder_stack(x, mask, params["layers"],
                         params["norm_a"], params["norm_b"], heads)


def init_params(key, vocab_size, d_model, N, heads, d_ff):
    scale = 0.02
    ks = jax.random.split(key, 7)

    def w_f32(k, shape):
        return jax.random.normal(k, shape, jnp.float32) * scale

    wq = w_f32(ks[1], (N, d_model, d_model))
    wk = w_f32(ks[2], (N, d_model, d_model))
    wv = w_f32(ks[3], (N, d_model, d_model))
    bq = jnp.zeros((N, 1, d_model), jnp.float32)
    bk = jnp.zeros((N, 1, d_model), jnp.float32)
    bv = jnp.zeros((N, 1, d_model), jnp.float32)

    params = {
        # sqrt(d_model) scale from PositionalEncoder folded into the table.
        "embed": jax.random.normal(ks[0], (vocab_size, d_model), jnp.float32)
                 * math.sqrt(d_model),
        "norm_a": jnp.ones((1, d_model), jnp.float32),
        "norm_b": jnp.zeros((1, d_model), jnp.float32),
        "layers": {
            "n1_a": jnp.ones((N, 1, d_model), jnp.float32),
            "n1_b": jnp.zeros((N, 1, d_model), jnp.float32),
            "n2_a": jnp.ones((N, 1, d_model), jnp.float32),
            "n2_b": jnp.zeros((N, 1, d_model), jnp.float32),
            # Fused QKV projection: wq | wk | wv along the output axis.
            "wqkv": jnp.concatenate([wq, wk, wv], axis=-1).astype(jnp.bfloat16),
            "bqkv": jnp.concatenate([bq, bk, bv], axis=-1),
            "wo": w_f32(ks[4], (N, d_model, d_model)).astype(jnp.bfloat16),
            "bo": jnp.zeros((N, 1, d_model), jnp.float32),
            "w1": w_f32(ks[5], (N, d_model, d_ff)).astype(jnp.bfloat16),
            "b1": jnp.zeros((N, 1, d_ff), jnp.float32),
            "w2": w_f32(ks[6], (N, d_ff, d_model)).astype(jnp.bfloat16),
            "b2": jnp.zeros((N, 1, d_model), jnp.float32),
        },
    }
    return params


if __name__ == "__main__":
    vocab_size = 100
    d_model = 32
    N = 2
    heads = 4
    d_ff = 2048        # FeedForward default d_ff in the reference module
    B, S = 2, 8

    key = jax.random.PRNGKey(0)
    k_param, k_src = jax.random.split(key)

    params = init_params(k_param, vocab_size, d_model, N, heads, d_ff)
    src = jax.random.randint(k_src, (B, S), 0, vocab_size, dtype=jnp.int32)

    # mask: (B, 1, S); second sequence has two padded (masked) positions.
    lengths = jnp.array([S, S - 2])
    mask = (jnp.arange(S)[None, :] < lengths[:, None]).astype(jnp.int32)[:, None, :]

    pe = positional_encoding(S, d_model)   # constant for fixed (S, d_model)

    out = encoder_forward(src, mask, params, heads, pe)
    out = jax.block_until_ready(out)

    assert out.shape == (B, S, d_model)
    assert bool(jnp.all(jnp.isfinite(out)))
    print("KERNEL_OK")
</pallas_src>

<mosaic_0001>
module attributes {stable_mosaic.version = 11 : i64} {
  func.func @encoder_stack_kernel(%arg0: i32, %arg1: i32, %arg2: memref<2x8x32xf32, #tpu.memory_space<vmem>>, %arg3: memref<2x1x8xi32, #tpu.memory_space<vmem>>, %arg4: memref<1x1x32xf32, #tpu.memory_space<vmem>>, %arg5: memref<1x1x32xf32, #tpu.memory_space<vmem>>, %arg6: memref<1x1x32xf32, #tpu.memory_space<vmem>>, %arg7: memref<1x1x32xf32, #tpu.memory_space<vmem>>, %arg8: memref<1x32x96xbf16, #tpu.memory_space<vmem>>, %arg9: memref<1x1x96xf32, #tpu.memory_space<vmem>>, %arg10: memref<1x32x32xbf16, #tpu.memory_space<vmem>>, %arg11: memref<1x1x32xf32, #tpu.memory_space<vmem>>, %arg12: memref<1x32x2048xbf16, #tpu.memory_space<vmem>>, %arg13: memref<1x1x2048xf32, #tpu.memory_space<vmem>>, %arg14: memref<1x2048x32xbf16, #tpu.memory_space<vmem>>, %arg15: memref<1x1x32xf32, #tpu.memory_space<vmem>>, %arg16: memref<1x32xf32, #tpu.memory_space<vmem>>, %arg17: memref<1x32xf32, #tpu.memory_space<vmem>>, %arg18: memref<2x8x32xf32, #tpu.memory_space<vmem>>, %arg19: memref<2x8x32xf32, #tpu.memory_space<vmem>>, %arg20: memref<8x1x8xf32, #tpu.memory_space<vmem>>) attributes {dimension_semantics = [#tpu.dimension_semantics<parallel>, #tpu.dimension_semantics<arbitrary>], iteration_bounds = array<i64: 1, 2>, scalar_prefetch = 0 : i64, scratch_operands = 2 : i64, tpu.core_type = #tpu.core_type<tc>, window_params = [{transform_indices = @transform_0, window_bounds = array<i64: 2, 8, 32>}, {transform_indices = @transform_1, window_bounds = array<i64: 2, 1, 8>}, {transform_indices = @transform_2, window_bounds = array<i64: 1, 1, 32>}, {transform_indices = @transform_3, window_bounds = array<i64: 1, 1, 32>}, {transform_indices = @transform_4, window_bounds = array<i64: 1, 1, 32>}, {transform_indices = @transform_5, window_bounds = array<i64: 1, 1, 32>}, {transform_indices = @transform_6, window_bounds = array<i64: 1, 32, 96>}, {transform_indices = @transform_7, window_bounds = array<i64: 1, 1, 96>}, {transform_indices = @transform_8, window_bounds = array<i64: 1, 32, 32>}, {transform_indices = @transform_9, window_bounds = array<i64: 1, 1, 32>}, {transform_indices = @transform_10, window_bounds = array<i64: 1, 32, 2048>}, {transform_indices = @transform_11, window_bounds = array<i64: 1, 1, 2048>}, {transform_indices = @transform_12, window_bounds = array<i64: 1, 2048, 32>}, {transform_indices = @transform_13, window_bounds = array<i64: 1, 1, 32>}, {pipeline_mode = #tpu.pipeline_mode<synchronous>, transform_indices = @transform_14, window_bounds = array<i64: 1, 32>}, {pipeline_mode = #tpu.pipeline_mode<synchronous>, transform_indices = @transform_15, window_bounds = array<i64: 1, 32>}, {transform_indices = @transform_16, window_bounds = array<i64: 2, 8, 32>}]} {
    %c0_i32 = arith.constant 0 : i32
    %0 = arith.cmpi eq, %arg1, %c0_i32 : i32
    %1 = arith.extui %0 : i1 to i32
    %c0_i32_0 = arith.constant 0 : i32
    %2 = arith.cmpi ne, %1, %c0_i32_0 : i32
    scf.if %2 {
      %c0_65 = arith.constant 0 : index
      %c0_66 = arith.constant 0 : index
      %c0_67 = arith.constant 0 : index
      %146 = vector.load %arg2[%c0_65, %c0_66, %c0_67] : memref<2x8x32xf32, #tpu.memory_space<vmem>>, vector<2x8x32xf32>
      %c0_68 = arith.constant 0 : index
      %c0_69 = arith.constant 0 : index
      %c0_70 = arith.constant 0 : index
      %147 = vector.load %arg19[%c0_68, %c0_69, %c0_70] : memref<2x8x32xf32, #tpu.memory_space<vmem>>, vector<2x8x32xf32>
      tpu.vector_store %arg19[%c0_68, %c0_69, %c0_70], %146 {strides = array<i32>} : memref<2x8x32xf32, #tpu.memory_space<vmem>>, vector<2x8x32xf32>,
      %c0_71 = arith.constant 0 : index
      %c0_72 = arith.constant 0 : index
      %c0_73 = arith.constant 0 : index
      %148 = vector.load %arg3[%c0_71, %c0_72, %c0_73] : memref<2x1x8xi32, #tpu.memory_space<vmem>>, vector<2x1x8xi32>
      %c0_i32_74 = arith.constant 0 : i32
      %149 = vector.broadcast %c0_i32_74 : i32 to vector<2x1x8xi32>
      %150 = arith.cmpi eq, %148, %149 : vector<2x1x8xi32>
      %cst_75 = arith.constant -1.000000e+09 : f32
      %cst_76 = arith.constant 0.000000e+00 : f32
      %151 = vector.broadcast %cst_75 : f32 to vector<2x1x8xf32>
      %152 = vector.broadcast %cst_76 : f32 to vector<2x1x8xf32>
      %153 = arith.select %150, %151, %152 : vector<2x1x8xi1>, vector<2x1x8xf32>
      %154 = tpu.concatenate %153, %153, %153, %153 in 0 : vector<2x1x8xf32>, vector<2x1x8xf32>, vector<2x1x8xf32>, vector<2x1x8xf32> -> vector<8x1x8xf32>
      %c0_77 = arith.constant 0 : index
      %c0_78 = arith.constant 0 : index
      %c0_79 = arith.constant 0 : index
      %155 = vector.load %arg20[%c0_77, %c0_78, %c0_79] : memref<8x1x8xf32, #tpu.memory_space<vmem>>, vector<8x1x8xf32>
      tpu.vector_store %arg20[%c0_77, %c0_78, %c0_79], %154 {strides = array<i32>} : memref<8x1x8xf32, #tpu.memory_space<vmem>>, vector<8x1x8xf32>,
    } else {
    }
    %c0 = arith.constant 0 : index
    %c0_1 = arith.constant 0 : index
    %c0_2 = arith.constant 0 : index
    %3 = vector.load %arg19[%c0, %c0_1, %c0_2] : memref<2x8x32xf32, #tpu.memory_space<vmem>>, vector<2x8x32xf32>
    %4 = vector.shape_cast %3 : vector<2x8x32xf32> to vector<16x32xf32>
    %c0_3 = arith.constant 0 : index
    %c0_4 = arith.constant 0 : index
    %c0_5 = arith.constant 0 : index
    %5 = vector.load %arg4[%c0_3, %c0_4, %c0_5] : memref<1x1x32xf32, #tpu.memory_space<vmem>>, vector<1x1x32xf32>
    %6 = vector.shape_cast %5 : vector<1x1x32xf32> to vector<1x32xf32>
    %c0_6 = arith.constant 0 : index
    %c0_7 = arith.constant 0 : index
    %c0_8 = arith.constant 0 : index
    %7 = vector.load %arg5[%c0_6, %c0_7, %c0_8] : memref<1x1x32xf32, #tpu.memory_space<vmem>>, vector<1x1x32xf32>
    %8 = vector.shape_cast %7 : vector<1x1x32xf32> to vector<1x32xf32>
    %cst = arith.constant dense<0.000000e+00> : vector<16xf32>
    %9 = vector.multi_reduction <add>, %4, %cst [1] : vector<16x32xf32> to vector<16xf32>
    %10 = vector.shape_cast %9 : vector<16xf32> to vector<16x1xf32>
    %cst_9 = arith.constant 3.200000e+01 : f32
    %11 = vector.broadcast %cst_9 : f32 to vector<16x1xf32>
    %12 = arith.divf %10, %11 : vector<16x1xf32>
    %13 = vector.broadcast %12 : vector<16x1xf32> to vector<16x32xf32>
    %14 = arith.subf %4, %13 : vector<16x32xf32>
    %15 = arith.mulf %14, %14 : vector<16x32xf32>
    %cst_10 = arith.constant dense<0.000000e+00> : vector<16xf32>
    %16 = vector.multi_reduction <add>, %15, %cst_10 [1] : vector<16x32xf32> to vector<16xf32>
    %17 = vector.shape_cast %16 : vector<16xf32> to vector<16x1xf32>
    %cst_11 = arith.constant 0.0322580636 : f32
    %18 = vector.broadcast %cst_11 : f32 to vector<16x1xf32>
    %19 = arith.mulf %17, %18 : vector<16x1xf32>
    %20 = math.sqrt %19 : vector<16x1xf32>
    %21 = vector.broadcast %6 : vector<1x32xf32> to vector<16x32xf32>
    %22 = arith.mulf %21, %14 : vector<16x32xf32>
    %cst_12 = arith.constant 9.99999997E-7 : f32
    %23 = vector.broadcast %cst_12 : f32 to vector<16x1xf32>
    %24 = arith.addf %20, %23 : vector<16x1xf32>
    %25 = vector.broadcast %24 : vector<16x1xf32> to vector<16x32xf32>
    %26 = arith.divf %22, %25 : vector<16x32xf32>
    %27 = vector.broadcast %8 : vector<1x32xf32> to vector<16x32xf32>
    %28 = arith.addf %26, %27 : vector<16x32xf32>
    %29 = arith.truncf %28 : vector<16x32xf32> to vector<16x32xbf16>
    %c0_13 = arith.constant 0 : index
    %c0_14 = arith.constant 0 : index
    %c0_15 = arith.constant 0 : index
    %30 = vector.load %arg8[%c0_13, %c0_14, %c0_15] : memref<1x32x96xbf16, #tpu.memory_space<vmem>>, vector<1x32x96xbf16>
    %31 = vector.shape_cast %30 : vector<1x32x96xbf16> to vector<32x96xbf16>
    %cst_16 = arith.constant dense<0.000000e+00> : vector<16x96xf32>
    %32 = tpu.matmul %29, %31, %cst_16 {dimension_numbers = #tpu.dot_dimension_numbers<[1], [0], [0], [1], [0, 0, 1, 1], [], []>} : vector<16x32xbf16>, vector<32x96xbf16>, vector<16x96xf32> -> vector<16x96xf32>
    %c0_17 = arith.constant 0 : index
    %c0_18 = arith.constant 0 : index
    %c0_19 = arith.constant 0 : index
    %33 = vector.load %arg9[%c0_17, %c0_18, %c0_19] : memref<1x1x96xf32, #tpu.memory_space<vmem>>, vector<1x1x96xf32>
    %34 = vector.shape_cast %33 : vector<1x1x96xf32> to vector<1x96xf32>
    %35 = vector.broadcast %34 : vector<1x96xf32> to vector<16x96xf32>
    %36 = arith.addf %32, %35 : vector<16x96xf32>
    %37 = arith.truncf %36 : vector<16x96xf32> to vector<16x96xbf16>
    %38 = vector.extract_strided_slice %37 {offsets = [0, 0], sizes = [16, 8], strides = [1, 1]} : vector<16x96xbf16> to vector<16x8xbf16>
    %39 = vector.shape_cast %38 : vector<16x8xbf16> to vector<2x8x8xbf16>
    %40 = vector.extract_strided_slice %37 {offsets = [0, 8], sizes = [16, 8], strides = [1, 1]} : vector<16x96xbf16> to vector<16x8xbf16>
    %41 = vector.shape_cast %40 : vector<16x8xbf16> to vector<2x8x8xbf16>
    %42 = vector.extract_strided_slice %37 {offsets = [0, 16], sizes = [16, 8], strides = [1, 1]} : vector<16x96xbf16> to vector<16x8xbf16>
    %43 = vector.shape_cast %42 : vector<16x8xbf16> to vector<2x8x8xbf16>
    %44 = vector.extract_strided_slice %37 {offsets = [0, 24], sizes = [16, 8], strides = [1, 1]} : vector<16x96xbf16> to vector<16x8xbf16>
    %45 = vector.shape_cast %44 : vector<16x8xbf16> to vector<2x8x8xbf16>
    %46 = tpu.concatenate %39, %41, %43, %45 in 0 : vector<2x8x8xbf16>, vector<2x8x8xbf16>, vector<2x8x8xbf16>, vector<2x8x8xbf16> -> vector<8x8x8xbf16>
    %47 = vector.extract_strided_slice %37 {offsets = [0, 32], sizes = [16, 8], strides = [1, 1]} : vector<16x96xbf16> to vector<16x8xbf16>
    %48 = vector.shape_cast %47 : vector<16x8xbf16> to vector<2x8x8xbf16>
    %49 = vector.extract_strided_slice %37 {offsets = [0, 40], sizes = [16, 8], strides = [1, 1]} : vector<16x96xbf16> to vector<16x8xbf16>
    %50 = vector.shape_cast %49 : vector<16x8xbf16> to vector<2x8x8xbf16>
    %51 = vector.extract_strided_slice %37 {offsets = [0, 48], sizes = [16, 8], strides = [1, 1]} : vector<16x96xbf16> to vector<16x8xbf16>
    %52 = vector.shape_cast %51 : vector<16x8xbf16> to vector<2x8x8xbf16>
    %53 = vector.extract_strided_slice %37 {offsets = [0, 56], sizes = [16, 8], strides = [1, 1]} : vector<16x96xbf16> to vector<16x8xbf16>
    %54 = vector.shape_cast %53 : vector<16x8xbf16> to vector<2x8x8xbf16>
    %55 = tpu.concatenate %48, %50, %52, %54 in 0 : vector<2x8x8xbf16>, vector<2x8x8xbf16>, vector<2x8x8xbf16>, vector<2x8x8xbf16> -> vector<8x8x8xbf16>
    %56 = vector.extract_strided_slice %37 {offsets = [0, 64], sizes = [16, 8], strides = [1, 1]} : vector<16x96xbf16> to vector<16x8xbf16>
    %57 = vector.shape_cast %56 : vector<16x8xbf16> to vector<2x8x8xbf16>
    %58 = vector.extract_strided_slice %37 {offsets = [0, 72], sizes = [16, 8], strides = [1, 1]} : vector<16x96xbf16> to vector<16x8xbf16>
    %59 = vector.shape_cast %58 : vector<16x8xbf16> to vector<2x8x8xbf16>
    %60 = vector.extract_strided_slice %37 {offsets = [0, 80], sizes = [16, 8], strides = [1, 1]} : vector<16x96xbf16> to vector<16x8xbf16>
    %61 = vector.shape_cast %60 : vector<16x8xbf16> to vector<2x8x8xbf16>
    %62 = vector.extract_strided_slice %37 {offsets = [0, 88], sizes = [16, 8], strides = [1, 1]} : vector<16x96xbf16> to vector<16x8xbf16>
    %63 = vector.shape_cast %62 : vector<16x8xbf16> to vector<2x8x8xbf16>
    %64 = tpu.concatenate %57, %59, %61, %63 in 0 : vector<2x8x8xbf16>, vector<2x8x8xbf16>, vector<2x8x8xbf16>, vector<2x8x8xbf16> -> vector<8x8x8xbf16>
    "tpu.trace_start"() <{level = 10 : i32, message = "bqd,bkd->bqk"}> : () -> ()
    %cst_20 = arith.constant dense<0.000000e+00> : vector<8x8x8xf32>
    %65 = tpu.matmul %46, %55, %cst_20 {dimension_numbers = #tpu.dot_dimension_numbers<[2], [2], [1], [1], [0, 0, 0, 1, 1, 1], [0], [0]>} : vector<8x8x8xbf16>, vector<8x8x8xbf16>, vector<8x8x8xf32> -> vector<8x8x8xf32>
    "tpu.trace_stop"() : () -> ()
    %cst_21 = arith.constant 0.353553385 : f32
    %66 = vector.broadcast %cst_21 : f32 to vector<8x8x8xf32>
    %67 = arith.mulf %65, %66 : vector<8x8x8xf32>
    %c0_22 = arith.constant 0 : index
    %c0_23 = arith.constant 0 : index
    %c0_24 = arith.constant 0 : index
    %68 = vector.load %arg20[%c0_22, %c0_23, %c0_24] : memref<8x1x8xf32, #tpu.memory_space<vmem>>, vector<8x1x8xf32>
    %69 = vector.broadcast %68 : vector<8x1x8xf32> to vector<8x8x8xf32>
    %70 = arith.addf %67, %69 : vector<8x8x8xf32>
    %cst_25 = arith.constant dense<0xFF800000> : vector<8x8xf32>
    %71 = vector.multi_reduction <maximumf>, %70, %cst_25 [2] : vector<8x8x8xf32> to vector<8x8xf32>
    %72 = vector.shape_cast %71 : vector<8x8xf32> to vector<8x8x1xf32>
    %73 = vector.broadcast %72 : vector<8x8x1xf32> to vector<8x8x8xf32>
    %74 = arith.subf %70, %73 : vector<8x8x8xf32>
    %75 = math.exp %74 : vector<8x8x8xf32>
    %cst_26 = arith.constant dense<0.000000e+00> : vector<8x8xf32>
    %76 = vector.multi_reduction <add>, %75, %cst_26 [2] : vector<8x8x8xf32> to vector<8x8xf32>
    %77 = vector.shape_cast %76 : vector<8x8xf32> to vector<8x8x1xf32>
    %78 = tpu.reciprocal %77 {approx = true} : vector<8x8x1xf32> -> vector<8x8x1xf32>
    %79 = vector.broadcast %78 : vector<8x8x1xf32> to vector<8x8x8xf32>
    %80 = arith.mulf %75, %79 : vector<8x8x8xf32>
    %81 = arith.truncf %80 : vector<8x8x8xf32> to vector<8x8x8xbf16>
    "tpu.trace_start"() <{level = 10 : i32, message = "bqk,bkd->bqd"}> : () -> ()
    %cst_27 = arith.constant dense<0.000000e+00> : vector<8x8x8xf32>
    %82 = tpu.matmul %81, %64, %cst_27 {dimension_numbers = #tpu.dot_dimension_numbers<[2], [1], [1], [2], [0, 0, 0, 1, 1, 2], [0], [0]>} : vector<8x8x8xbf16>, vector<8x8x8xbf16>, vector<8x8x8xf32> -> vector<8x8x8xf32>
    "tpu.trace_stop"() : () -> ()
    %83 = vector.extract_strided_slice %82 {offsets = [0, 0, 0], sizes = [2, 8, 8], strides = [1, 1, 1]} : vector<8x8x8xf32> to vector<2x8x8xf32>
    %84 = vector.extract_strided_slice %82 {offsets = [2, 0, 0], sizes = [2, 8, 8], strides = [1, 1, 1]} : vector<8x8x8xf32> to vector<2x8x8xf32>
    %85 = vector.extract_strided_slice %82 {offsets = [4, 0, 0], sizes = [2, 8, 8], strides = [1, 1, 1]} : vector<8x8x8xf32> to vector<2x8x8xf32>
    %86 = vector.extract_strided_slice %82 {offsets = [6, 0, 0], sizes = [2, 8, 8], strides = [1, 1, 1]} : vector<8x8x8xf32> to vector<2x8x8xf32>
    %87 = tpu.concatenate %83, %84, %85, %86 in 2 : vector<2x8x8xf32>, vector<2x8x8xf32>, vector<2x8x8xf32>, vector<2x8x8xf32> -> vector<2x8x32xf32>
    %88 = vector.shape_cast %87 : vector<2x8x32xf32> to vector<16x32xf32>
    %89 = arith.truncf %88 : vector<16x32xf32> to vector<16x32xbf16>
    %c0_28 = arith.constant 0 : index
    %c0_29 = arith.constant 0 : index
    %c0_30 = arith.constant 0 : index
    %90 = vector.load %arg10[%c0_28, %c0_29, %c0_30] : memref<1x32x32xbf16, #tpu.memory_space<vmem>>, vector<1x32x32xbf16>
    %91 = vector.shape_cast %90 : vector<1x32x32xbf16> to vector<32x32xbf16>
    %cst_31 = arith.constant dense<0.000000e+00> : vector<16x32xf32>
    %92 = tpu.matmul %89, %91, %cst_31 {dimension_numbers = #tpu.dot_dimension_numbers<[1], [0], [0], [1], [0, 0, 1, 1], [], []>} : vector<16x32xbf16>, vector<32x32xbf16>, vector<16x32xf32> -> vector<16x32xf32>
    %c0_32 = arith.constant 0 : index
    %c0_33 = arith.constant 0 : index
    %c0_34 = arith.constant 0 : index
    %93 = vector.load %arg11[%c0_32, %c0_33, %c0_34] : memref<1x1x32xf32, #tpu.memory_space<vmem>>, vector<1x1x32xf32>
    %94 = vector.shape_cast %93 : vector<1x1x32xf32> to vector<1x32xf32>
    %95 = vector.broadcast %94 : vector<1x32xf32> to vector<16x32xf32>
    %96 = arith.addf %92, %95 : vector<16x32xf32>
    %97 = arith.addf %4, %96 : vector<16x32xf32>
    %c0_35 = arith.constant 0 : index
    %c0_36 = arith.constant 0 : index
    %c0_37 = arith.constant 0 : index
    %98 = vector.load %arg6[%c0_35, %c0_36, %c0_37] : memref<1x1x32xf32, #tpu.memory_space<vmem>>, vector<1x1x32xf32>
    %99 = vector.shape_cast %98 : vector<1x1x32xf32> to vector<1x32xf32>
    %c0_38 = arith.constant 0 : index
    %c0_39 = arith.constant 0 : index
    %c0_40 = arith.constant 0 : index
    %100 = vector.load %arg7[%c0_38, %c0_39, %c0_40] : memref<1x1x32xf32, #tpu.memory_space<vmem>>, vector<1x1x32xf32>
    %101 = vector.shape_cast %100 : vector<1x1x32xf32> to vector<1x32xf32>
    %cst_41 = arith.constant dense<0.000000e+00> : vector<16xf32>
    %102 = vector.multi_reduction <add>, %97, %cst_41 [1] : vector<16x32xf32> to vector<16xf32>
    %103 = vector.shape_cast %102 : vector<16xf32> to vector<16x1xf32>
    %cst_42 = arith.constant 3.200000e+01 : f32
    %104 = vector.broadcast %cst_42 : f32 to vector<16x1xf32>
    %105 = arith.divf %103, %104 : vector<16x1xf32>
    %106 = vector.broadcast %105 : vector<16x1xf32> to vector<16x32xf32>
    %107 = arith.subf %97, %106 : vector<16x32xf32>
    %108 = arith.mulf %107, %107 : vector<16x32xf32>
    %cst_43 = arith.constant dense<0.000000e+00> : vector<16xf32>
    %109 = vector.multi_reduction <add>, %108, %cst_43 [1] : vector<16x32xf32> to vector<16xf32>
    %110 = vector.shape_cast %109 : vector<16xf32> to vector<16x1xf32>
    %cst_44 = arith.constant 0.0322580636 : f32
    %111 = vector.broadcast %cst_44 : f32 to vector<16x1xf32>
    %112 = arith.mulf %110, %111 : vector<16x1xf32>
    %113 = math.sqrt %112 : vector<16x1xf32>
    %114 = vector.broadcast %99 : vector<1x32xf32> to vector<16x32xf32>
    %115 = arith.mulf %114, %107 : vector<16x32xf32>
    %cst_45 = arith.constant 9.99999997E-7 : f32
    %116 = vector.broadcast %cst_45 : f32 to vector<16x1xf32>
    %117 = arith.addf %113, %116 : vector<16x1xf32>
    %118 = vector.broadcast %117 : vector<16x1xf32> to vector<16x32xf32>
    %119 = arith.divf %115, %118 : vector<16x32xf32>
    %120 = vector.broadcast %101 : vector<1x32xf32> to vector<16x32xf32>
    %121 = arith.addf %119, %120 : vector<16x32xf32>
    %122 = arith.truncf %121 : vector<16x32xf32> to vector<16x32xbf16>
    %c0_46 = arith.constant 0 : index
    %c0_47 = arith.constant 0 : index
    %c0_48 = arith.constant 0 : index
    %123 = vector.load %arg12[%c0_46, %c0_47, %c0_48] : memref<1x32x2048xbf16, #tpu.memory_space<vmem>>, vector<1x32x2048xbf16>
    %124 = vector.shape_cast %123 : vector<1x32x2048xbf16> to vector<32x2048xbf16>
    %cst_49 = arith.constant dense<0.000000e+00> : vector<16x2048xf32>
    %125 = tpu.matmul %122, %124, %cst_49 {dimension_numbers = #tpu.dot_dimension_numbers<[1], [0], [0], [1], [0, 0, 1, 1], [], []>} : vector<16x32xbf16>, vector<32x2048xbf16>, vector<16x2048xf32> -> vector<16x2048xf32>
    %c0_50 = arith.constant 0 : index
    %c0_51 = arith.constant 0 : index
    %c0_52 = arith.constant 0 : index
    %126 = vector.load %arg13[%c0_50, %c0_51, %c0_52] : memref<1x1x2048xf32, #tpu.memory_space<vmem>>, vector<1x1x2048xf32>
    %127 = vector.shape_cast %126 : vector<1x1x2048xf32> to vector<1x2048xf32>
    %128 = vector.broadcast %127 : vector<1x2048xf32> to vector<16x2048xf32>
    %129 = arith.addf %125, %128 : vector<16x2048xf32>
    %cst_53 = arith.constant 0.000000e+00 : f32
    %130 = vector.broadcast %cst_53 : f32 to vector<16x2048xf32>
    %131 = arith.maximumf %129, %130 : vector<16x2048xf32>
    %132 = arith.truncf %131 : vector<16x2048xf32> to vector<16x2048xbf16>
    %c0_54 = arith.constant 0 : index
    %c0_55 = arith.constant 0 : index
    %c0_56 = arith.constant 0 : index
    %133 = vector.load %arg14[%c0_54, %c0_55, %c0_56] : memref<1x2048x32xbf16, #tpu.memory_space<vmem>>, vector<1x2048x32xbf16>
    %134 = vector.shape_cast %133 : vector<1x2048x32xbf16> to vector<2048x32xbf16>
    %cst_57 = arith.constant dense<0.000000e+00> : vector<16x32xf32>
    %135 = tpu.matmul %132, %134, %cst_57 {dimension_numbers = #tpu.dot_dimension_numbers<[1], [0], [0], [1], [0, 0, 1, 1], [], []>} : vector<16x2048xbf16>, vector<2048x32xbf16>, vector<16x32xf32> -> vector<16x32xf32>
    %c0_58 = arith.constant 0 : index
    %c0_59 = arith.constant 0 : index
    %c0_60 = arith.constant 0 : index
    %136 = vector.load %arg15[%c0_58, %c0_59, %c0_60] : memref<1x1x32xf32, #tpu.memory_space<vmem>>, vector<1x1x32xf32>
    %137 = vector.shape_cast %136 : vector<1x1x32xf32> to vector<1x32xf32>
    %138 = vector.broadcast %137 : vector<1x32xf32> to vector<16x32xf32>
    %139 = arith.addf %135, %138 : vector<16x32xf32>
    %140 = arith.addf %97, %139 : vector<16x32xf32>
    %141 = vector.shape_cast %140 : vector<16x32xf32> to vector<2x8x32xf32>
    %c0_61 = arith.constant 0 : index
    %c0_62 = arith.constant 0 : index
    %c0_63 = arith.constant 0 : index
    %142 = vector.load %arg19[%c0_61, %c0_62, %c0_63] : memref<2x8x32xf32, #tpu.memory_space<vmem>>, vector<2x8x32xf32>
    tpu.vector_store %arg19[%c0_61, %c0_62, %c0_63], %141 {strides = array<i32>} : memref<2x8x32xf32, #tpu.memory_space<vmem>>, vector<2x8x32xf32>,
    %c1_i32 = arith.constant 1 : i32
    %143 = arith.cmpi eq, %arg1, %c1_i32 : i32
    %144 = arith.extui %143 : i1 to i32
    %c0_i32_64 = arith.constant 0 : i32
    %145 = arith.cmpi ne, %144, %c0_i32_64 : i32
    scf.if %145 {
      %c0_65 = arith.constant 0 : index
      %c0_66 = arith.constant 0 : index
      %146 = vector.load %arg16[%c0_65, %c0_66] : memref<1x32xf32, #tpu.memory_space<vmem>>, vector<1x32xf32>
      %c0_67 = arith.constant 0 : index
      %c0_68 = arith.constant 0 : index
      %147 = vector.load %arg17[%c0_67, %c0_68] : memref<1x32xf32, #tpu.memory_space<vmem>>, vector<1x32xf32>
      %cst_69 = arith.constant dense<0.000000e+00> : vector<16xf32>
      %148 = vector.multi_reduction <add>, %140, %cst_69 [1] : vector<16x32xf32> to vector<16xf32>
      %149 = vector.shape_cast %148 : vector<16xf32> to vector<16x1xf32>
      %cst_70 = arith.constant 3.200000e+01 : f32
      %150 = vector.broadcast %cst_70 : f32 to vector<16x1xf32>
      %151 = arith.divf %149, %150 : vector<16x1xf32>
      %152 = vector.broadcast %151 : vector<16x1xf32> to vector<16x32xf32>
      %153 = arith.subf %140, %152 : vector<16x32xf32>
      %154 = arith.mulf %153, %153 : vector<16x32xf32>
      %cst_71 = arith.constant dense<0.000000e+00> : vector<16xf32>
      %155 = vector.multi_reduction <add>, %154, %cst_71 [1] : vector<16x32xf32> to vector<16xf32>
      %156 = vector.shape_cast %155 : vector<16xf32> to vector<16x1xf32>
      %cst_72 = arith.constant 0.0322580636 : f32
      %157 = vector.broadcast %cst_72 : f32 to vector<16x1xf32>
      %158 = arith.mulf %156, %157 : vector<16x1xf32>
      %159 = math.sqrt %158 : vector<16x1xf32>
      %160 = vector.broadcast %146 : vector<1x32xf32> to vector<16x32xf32>
      %161 = arith.mulf %160, %153 : vector<16x32xf32>
      %cst_73 = arith.constant 9.99999997E-7 : f32
      %162 = vector.broadcast %cst_73 : f32 to vector<16x1xf32>
      %163 = arith.addf %159, %162 : vector<16x1xf32>
      %164 = vector.broadcast %163 : vector<16x1xf32> to vector<16x32xf32>
      %165 = arith.divf %161, %164 : vector<16x32xf32>
      %166 = vector.broadcast %147 : vector<1x32xf32> to vector<16x32xf32>
      %167 = arith.addf %165, %166 : vector<16x32xf32>
      %168 = vector.shape_cast %167 : vector<16x32xf32> to vector<2x8x32xf32>
      %c0_74 = arith.constant 0 : index
      %c0_75 = arith.constant 0 : index
      %c0_76 = arith.constant 0 : index
      %169 = vector.load %arg18[%c0_74, %c0_75, %c0_76] : memref<2x8x32xf32, #tpu.memory_space<vmem>>, vector<2x8x32xf32>
      tpu.vector_store %arg18[%c0_74, %c0_75, %c0_76], %168 {strides = array<i32>} : memref<2x8x32xf32, #tpu.memory_space<vmem>>, vector<2x8x32xf32>,
    } else {
    }
    return
  }
  func.func @transform_0(%arg0: i32, %arg1: i32) -> (i32, i32, i32) {
    %c0_i32 = arith.constant 0 : i32
    %c0_i32_0 = arith.constant 0 : i32
    %c0_i32_1 = arith.constant 0 : i32
    return %arg0, %c0_i32, %c0_i32_0 : i32, i32, i32
  }
  func.func @transform_1(%arg0: i32, %arg1: i32) -> (i32, i32, i32) {
    %c0_i32 = arith.constant 0 : i32
    %c0_i32_0 = arith.constant 0 : i32
    %c0_i32_1 = arith.constant 0 : i32
    return %arg0, %c0_i32, %c0_i32_0 : i32, i32, i32
  }
  func.func @transform_2(%arg0: i32, %arg1: i32) -> (i32, i32, i32) {
    %c0_i32 = arith.constant 0 : i32
    %c0_i32_0 = arith.constant 0 : i32
    %c0_i32_1 = arith.constant 0 : i32
    return %arg1, %c0_i32, %c0_i32_0 : i32, i32, i32
  }
  func.func @transform_3(%arg0: i32, %arg1: i32) -> (i32, i32, i32) {
    %c0_i32 = arith.constant 0 : i32
    %c0_i32_0 = arith.constant 0 : i32
    %c0_i32_1 = arith.constant 0 : i32
    return %arg1, %c0_i32, %c0_i32_0 : i32, i32, i32
  }
  func.func @transform_4(%arg0: i32, %arg1: i32) -> (i32, i32, i32) {
    %c0_i32 = arith.constant 0 : i32
    %c0_i32_0 = arith.constant 0 : i32
    %c0_i32_1 = arith.constant 0 : i32
    return %arg1, %c0_i32, %c0_i32_0 : i32, i32, i32
  }
  func.func @transform_5(%arg0: i32, %arg1: i32) -> (i32, i32, i32) {
    %c0_i32 = arith.constant 0 : i32
    %c0_i32_0 = arith.constant 0 : i32
    %c0_i32_1 = arith.constant 0 : i32
    return %arg1, %c0_i32, %c0_i32_0 : i32, i32, i32
  }
  func.func @transform_6(%arg0: i32, %arg1: i32) -> (i32, i32, i32) {
    %c0_i32 = arith.constant 0 : i32
    %c0_i32_0 = arith.constant 0 : i32
    %c0_i32_1 = arith.constant 0 : i32
    return %arg1, %c0_i32, %c0_i32_0 : i32, i32, i32
  }
  func.func @transform_7(%arg0: i32, %arg1: i32) -> (i32, i32, i32) {
    %c0_i32 = arith.constant 0 : i32
    %c0_i32_0 = arith.constant 0 : i32
    %c0_i32_1 = arith.constant 0 : i32
    return %arg1, %c0_i32, %c0_i32_0 : i32, i32, i32
  }
  func.func @transform_8(%arg0: i32, %arg1: i32) -> (i32, i32, i32) {
    %c0_i32 = arith.constant 0 : i32
    %c0_i32_0 = arith.constant 0 : i32
    %c0_i32_1 = arith.constant 0 : i32
    return %arg1, %c0_i32, %c0_i32_0 : i32, i32, i32
  }
  func.func @transform_9(%arg0: i32, %arg1: i32) -> (i32, i32, i32) {
    %c0_i32 = arith.constant 0 : i32
    %c0_i32_0 = arith.constant 0 : i32
    %c0_i32_1 = arith.constant 0 : i32
    return %arg1, %c0_i32, %c0_i32_0 : i32, i32, i32
  }
  func.func @transform_10(%arg0: i32, %arg1: i32) -> (i32, i32, i32) {
    %c0_i32 = arith.constant 0 : i32
    %c0_i32_0 = arith.constant 0 : i32
    %c0_i32_1 = arith.constant 0 : i32
    return %arg1, %c0_i32, %c0_i32_0 : i32, i32, i32
  }
  func.func @transform_11(%arg0: i32, %arg1: i32) -> (i32, i32, i32) {
    %c0_i32 = arith.constant 0 : i32
    %c0_i32_0 = arith.constant 0 : i32
    %c0_i32_1 = arith.constant 0 : i32
    return %arg1, %c0_i32, %c0_i32_0 : i32, i32, i32
  }
  func.func @transform_12(%arg0: i32, %arg1: i32) -> (i32, i32, i32) {
    %c0_i32 = arith.constant 0 : i32
    %c0_i32_0 = arith.constant 0 : i32
    %c0_i32_1 = arith.constant 0 : i32
    return %arg1, %c0_i32, %c0_i32_0 : i32, i32, i32
  }
  func.func @transform_13(%arg0: i32, %arg1: i32) -> (i32, i32, i32) {
    %c0_i32 = arith.constant 0 : i32
    %c0_i32_0 = arith.constant 0 : i32
    %c0_i32_1 = arith.constant 0 : i32
    return %arg1, %c0_i32, %c0_i32_0 : i32, i32, i32
  }
  func.func @transform_14(%arg0: i32, %arg1: i32) -> (i32, i32) {
    %c0_i32 = arith.constant 0 : i32
    %c0_i32_0 = arith.constant 0 : i32
    %c0_i32_1 = arith.constant 0 : i32
    return %c0_i32, %c0_i32_0 : i32, i32
  }
  func.func @transform_15(%arg0: i32, %arg1: i32) -> (i32, i32) {
    %c0_i32 = arith.constant 0 : i32
    %c0_i32_0 = arith.constant 0 : i32
    %c0_i32_1 = arith.constant 0 : i32
    return %c0_i32, %c0_i32_0 : i32, i32
  }
  func.func @transform_16(%arg0: i32, %arg1: i32) -> (i32, i32, i32) {
    %c0_i32 = arith.constant 0 : i32
    %c0_i32_0 = arith.constant 0 : i32
    %c0_i32_1 = arith.constant 0 : i32
    return %arg0, %c0_i32, %c0_i32_0 : i32, i32, i32
  }
}

</mosaic_0001>

<llo_original>
// kernel: tpu_custom_call.1
$region0: #{tpu_custom_call.1}
  #allocation0 [shape = 'u32[]', space=smem, size = 0x4, offset = 0x4, fixed_abs, tag = 'smem constant byte address 0x4 - core index']
  #allocation1 [shape = 'u32[144,128]{1,0:T(1,128)}', space=vmem, size = 0x12000, scoped, tag = 'internal scratch']
  #allocation2 [shape = 'f32[2,8,32]{2,1,0:T(8,128)}', space=vmem, size = 0x2000, scoped, tag = 'scratch operand']
  #allocation3 [shape = 'f32[8,1,8]{2,1,0:T(1,128)}', space=vmem, size = 0x1000, scoped, tag = 'scratch operand']
  %s0 = inlined_call_operand.vmem [shape: f32[2,8,32], index: 0, kind: input, shape index: {}]
  %s1 = inlined_call_operand.vmem [shape: s32[2,1,8], index: 1, kind: input, shape index: {}]
  %s2 = inlined_call_operand.vmem [shape: f32[2,1,32], index: 2, kind: input, shape index: {}]
  %s3 = inlined_call_operand.vmem [shape: f32[2,1,32], index: 3, kind: input, shape index: {}]
  %s4 = inlined_call_operand.vmem [shape: f32[2,1,32], index: 4, kind: input, shape index: {}]
  %s5 = inlined_call_operand.vmem [shape: f32[2,1,32], index: 5, kind: input, shape index: {}]
  %s6 = inlined_call_operand.vmem [shape: bf16[2,32,96], index: 6, kind: input, shape index: {}]
  %s7 = inlined_call_operand.vmem [shape: f32[2,1,96], index: 7, kind: input, shape index: {}]
  %s8 = inlined_call_operand.vmem [shape: bf16[2,32,32], index: 8, kind: input, shape index: {}]
  %s9 = inlined_call_operand.vmem [shape: f32[2,1,32], index: 9, kind: input, shape index: {}]
  %s10 = inlined_call_operand.vmem [shape: bf16[2,32,2048], index: 10, kind: input, shape index: {}]
  %s11 = inlined_call_operand.vmem [shape: f32[2,1,2048], index: 11, kind: input, shape index: {}]
  %s12 = inlined_call_operand.vmem [shape: bf16[2,2048,32], index: 12, kind: input, shape index: {}]
  %s13 = inlined_call_operand.vmem [shape: f32[2,1,32], index: 13, kind: input, shape index: {}]
  %s14 = inlined_call_operand.vmem [shape: f32[1,32], index: 14, kind: input, shape index: {}]
  %s15 = inlined_call_operand.vmem [shape: f32[1,32], index: 15, kind: input, shape index: {}]
  %s16 = inlined_call_operand.hbm [shape: f32[2,8,32], index: 16, kind: output, shape index: {}]
  %s17 = sld [smem:[#allocation0]]
  $region105: #{tpu_custom_call.1} parent=0
    _
  %s19 = ssub.s32 1, %s17
  %s20 = scalar_select 0, %s19, %s17
  $region1: #{tpu_custom_call.1} parent=0
    #allocation4 [shape = 'u8[8192]{0}', space=vmem, size = 0x2000, scoped, tag = 'output window, operand 0, single buffered']
    #allocation5 [shape = 's32[2]{0}', space=sflag, size = 0x8, scoped, tag = 'scoped memory for tpu_custom_call.1']
    %21 = vsyncpa [#allocation5], 0
    loop: start=0, step=1, limit=4
    $region2: #{tpu_custom_call.1} parent=1 // loop_pre_header
      _
    $region3: #{tpu_custom_call.1} parent=1 // loop_header
      %s23 = sphi 0, %s27
      %p24 = scmp.ge.s32.totalorder %s23, 4
      %s30 = sphi 0, %s42
      %s31 = sphi 0, %s38
      %s32 = sphi 0, %s30
      %s33 = sphi 0, %s31
      %s34 = sphi 0, %s32
      %s35 = sphi 0, %s33
      %s45 = sphi 0, %s47
      %s48 = sphi 0, %s45
      %s49 = sphi 0, %s48
      %s65 = sphi 0, %s49
      %s71 = sphi 0, %s73
      %s74 = sphi 0, %s71
      %s75 = sphi 0, %s74
      %s91 = sphi 0, %s75
      %s97 = sphi 0, %s99
      %s100 = sphi 0, %s97
      %s101 = sphi 0, %s100
      %s117 = sphi 0, %s101
      %s123 = sphi 0, %s125
      %s126 = sphi 0, %s123
      %s127 = sphi 0, %s126
      %s143 = sphi 0, %s127
      %s149 = sphi 0, %s151
      %s152 = sphi 0, %s149
      %s153 = sphi 0, %s152
      %s169 = sphi 0, %s153
      %s175 = sphi 0, %s177
      %s178 = sphi 0, %s175
      %s179 = sphi 0, %s178
      %s195 = sphi 0, %s179
      %s201 = sphi 0, %s203
      %s204 = sphi 0, %s201
      %s205 = sphi 0, %s204
      %s221 = sphi 0, %s205
      %s227 = sphi 0, %s229
      %s230 = sphi 0, %s227
      %s231 = sphi 0, %s230
      %s247 = sphi 0, %s231
      %s253 = sphi 0, %s255
      %s256 = sphi 0, %s253
      %s257 = sphi 0, %s256
      %s273 = sphi 0, %s257
      %s279 = sphi 0, %s281
      %s282 = sphi 0, %s279
      %s283 = sphi 0, %s282
      %s299 = sphi 0, %s283
      %s305 = sphi 0, %s307
      %s308 = sphi 0, %s305
      %s309 = sphi 0, %s308
      %s325 = sphi 0, %s309
      %s331 = sphi 0, %s333
      %s334 = sphi 0, %s331
      %s335 = sphi 0, %s334
      %s351 = sphi 0, %s335
      %s357 = sphi 0, %s359
      %s360 = sphi 0, %s357
      %s361 = sphi 0, %s360
      %s377 = sphi 0, %s361
      %s383 = sphi 0, %s385
      %s386 = sphi 0, %s383
      %s387 = sphi 0, %s386
      %s403 = sphi 0, %s387
      %s407 = sphi 0, %s407
      %s409 = sphi 0, %s407
      %s410 = sphi 0, %s409
      %s424 = sphi 0, %s410
      %s428 = sphi 0, %s428
      %s430 = sphi 0, %s428
      %s431 = sphi 0, %s430
      %s445 = sphi 0, %s431
      %s451 = sphi 0, %s453
      %s454 = sphi 0, %s451
      %s455 = sphi 0, %s454
      %s471 = sphi 0, %s455
    $region4: #{tpu_custom_call.1} parent=1 // loop_header_branch
      %26 = sbr.rel (%p24) target = $region8
    $region5: #{tpu_custom_call.1} parent=1 // loop_body
      %s28 = ssub.s32 %s23, 1
      %s29 = ssub.s32 %s23, 2
      %s36 = sadd.s32 1, %s31
      %p37 = scmp.ge.s32.totalorder %s36, 2
      %s38 = scalar_select %p37, 0, %s36
      %s39 = sadd.s32 1, %s30
      %s40 = scalar_select %p37, %s39, %s30
      %p41 = scmp.ge.s32.totalorder %s40, 1
      %s42 = scalar_select %p41, 0, %s40
      %s43 = ssub.s32 %s30, %s42
      %p44 = scmp.eq.s32.totalorder %s43, 0
      %s46 = sadd.s32 %s45, 1
      %s47 = scalar_select %p44, %s45, %s46
      %p50 = pneg %p44
      %p51 = scmp.eq.s32.totalorder %s23, 1
      %p52 = por %p50, %p51
      %p53 = scmp.ne.s32.totalorder %s45, %s48
      %p54 = scmp.eq.s32.totalorder %s23, 0
      %p55 = por %p53, %p54
      %p56 = scmp.ne.s32.totalorder %s45, %s48
      %p57 = scmp.eq.s32.totalorder %s28, 1
      %p58 = por %p56, %p57
      %p59 = scmp.ne.s32.totalorder %s48, %s49
      %p60 = scmp.eq.s32.totalorder %s28, 0
      %p61 = por %p59, %p60
      %p62 = scmp.ne.s32.totalorder %s48, %s49
      %p63 = scmp.eq.s32.totalorder %s29, 1
      %p64 = por %p62, %p63
      %p66 = scmp.ne.s32.totalorder %s49, %s65
      %p67 = scmp.eq.s32.totalorder %s29, 0
      %p68 = por %p66, %p67
      %s69 = ssub.s32 %s30, %s42
      %p70 = scmp.eq.s32.totalorder %s69, 0
      %s72 = sadd.s32 %s71, 1
      %s73 = scalar_select %p70, %s71, %s72
      %p76 = pneg %p70
      %p77 = scmp.eq.s32.totalorder %s23, 1
      %p78 = por %p76, %p77
      %p79 = scmp.ne.s32.totalorder %s71, %s74
      %p80 = scmp.eq.s32.totalorder %s23, 0
      %p81 = por %p79, %p80
      %p82 = scmp.ne.s32.totalorder %s71, %s74
      %p83 = scmp.eq.s32.totalorder %s28, 1
      %p84 = por %p82, %p83
      %p85 = scmp.ne.s32.totalorder %s74, %s75
      %p86 = scmp.eq.s32.totalorder %s28, 0
      %p87 = por %p85, %p86
      %p88 = scmp.ne.s32.totalorder %s74, %s75
      %p89 = scmp.eq.s32.totalorder %s29, 1
      %p90 = por %p88, %p89
      %p92 = scmp.ne.s32.totalorder %s75, %s91
      %p93 = scmp.eq.s32.totalorder %s29, 0
      %p94 = por %p92, %p93
      %s95 = ssub.s32 %s31, %s38
      %p96 = scmp.eq.s32.totalorder %s95, 0
      %s98 = sadd.s32 %s97, 1
      %s99 = scalar_select %p96, %s97, %s98
      %p102 = pneg %p96
      %p103 = scmp.eq.s32.totalorder %s23, 1
      %p104 = por %p102, %p103
      %p105 = scmp.ne.s32.totalorder %s97, %s100
      %p106 = scmp.eq.s32.totalorder %s23, 0
      %p107 = por %p105, %p106
      %p108 = scmp.ne.s32.totalorder %s97, %s100
      %p109 = scmp.eq.s32.totalorder %s28, 1
      %p110 = por %p108, %p109
      %p111 = scmp.ne.s32.totalorder %s100, %s101
      %p112 = scmp.eq.s32.totalorder %s28, 0
      %p113 = por %p111, %p112
      %p114 = scmp.ne.s32.totalorder %s100, %s101
      %p115 = scmp.eq.s32.totalorder %s29, 1
      %p116 = por %p114, %p115
      %p118 = scmp.ne.s32.totalorder %s101, %s117
      %p119 = scmp.eq.s32.totalorder %s29, 0
      %p120 = por %p118, %p119
      %s121 = ssub.s32 %s31, %s38
      %p122 = scmp.eq.s32.totalorder %s121, 0
      %s124 = sadd.s32 %s123, 1
      %s125 = scalar_select %p122, %s123, %s124
      %p128 = pneg %p122
      %p129 = scmp.eq.s32.totalorder %s23, 1
      %p130 = por %p128, %p129
      %p131 = scmp.ne.s32.totalorder %s123, %s126
      %p132 = scmp.eq.s32.totalorder %s23, 0
      %p133 = por %p131, %p132
      %p134 = scmp.ne.s32.totalorder %s123, %s126
      %p135 = scmp.eq.s32.totalorder %s28, 1
      %p136 = por %p134, %p135
      %p137 = scmp.ne.s32.totalorder %s126, %s127
      %p138 = scmp.eq.s32.totalorder %s28, 0
      %p139 = por %p137, %p138
      %p140 = scmp.ne.s32.totalorder %s126, %s127
      %p141 = scmp.eq.s32.totalorder %s29, 1
      %p142 = por %p140, %p141
      %p144 = scmp.ne.s32.totalorder %s127, %s143
      %p145 = scmp.eq.s32.totalorder %s29, 0
      %p146 = por %p144, %p145
      %s147 = ssub.s32 %s31, %s38
      %p148 = scmp.eq.s32.totalorder %s147, 0
      %s150 = sadd.s32 %s149, 1
      %s151 = scalar_select %p148, %s149, %s150
      %p154 = pneg %p148
      %p155 = scmp.eq.s32.totalorder %s23, 1
      %p156 = por %p154, %p155
      %p157 = scmp.ne.s32.totalorder %s149, %s152
      %p158 = scmp.eq.s32.totalorder %s23, 0
      %p159 = por %p157, %p158
      %p160 = scmp.ne.s32.totalorder %s149, %s152
      %p161 = scmp.eq.s32.totalorder %s28, 1
      %p162 = por %p160, %p161
      %p163 = scmp.ne.s32.totalorder %s152, %s153
      %p164 = scmp.eq.s32.totalorder %s28, 0
      %p165 = por %p163, %p164
      %p166 = scmp.ne.s32.totalorder %s152, %s153
      %p167 = scmp.eq.s32.totalorder %s29, 1
      %p168 = por %p166, %p167
      %p170 = scmp.ne.s32.totalorder %s153, %s169
      %p171 = scmp.eq.s32.totalorder %s29, 0
      %p172 = por %p170, %p171
      %s173 = ssub.s32 %s31, %s38
      %p174 = scmp.eq.s32.totalorder %s173, 0
      %s176 = sadd.s32 %s175, 1
      %s177 = scalar_select %p174, %s175, %s176
      %p180 = pneg %p174
      %p181 = scmp.eq.s32.totalorder %s23, 1
      %p182 = por %p180, %p181
      %p183 = scmp.ne.s32.totalorder %s175, %s178
      %p184 = scmp.eq.s32.totalorder %s23, 0
      %p185 = por %p183, %p184
      %p186 = scmp.ne.s32.totalorder %s175, %s178
      %p187 = scmp.eq.s32.totalorder %s28, 1
      %p188 = por %p186, %p187
      %p189 = scmp.ne.s32.totalorder %s178, %s179
      %p190 = scmp.eq.s32.totalorder %s28, 0
      %p191 = por %p189, %p190
      %p192 = scmp.ne.s32.totalorder %s178, %s179
      %p193 = scmp.eq.s32.totalorder %s29, 1
      %p194 = por %p192, %p193
      %p196 = scmp.ne.s32.totalorder %s179, %s195
      %p197 = scmp.eq.s32.totalorder %s29, 0
      %p198 = por %p196, %p197
      %s199 = ssub.s32 %s31, %s38
      %p200 = scmp.eq.s32.totalorder %s199, 0
      %s202 = sadd.s32 %s201, 1
      %s203 = scalar_select %p200, %s201, %s202
      %p206 = pneg %p200
      %p207 = scmp.eq.s32.totalorder %s23, 1
      %p208 = por %p206, %p207
      %p209 = scmp.ne.s32.totalorder %s201, %s204
      %p210 = scmp.eq.s32.totalorder %s23, 0
      %p211 = por %p209, %p210
      %p212 = scmp.ne.s32.totalorder %s201, %s204
      %p213 = scmp.eq.s32.totalorder %s28, 1
      %p214 = por %p212, %p213
      %p215 = scmp.ne.s32.totalorder %s204, %s205
      %p216 = scmp.eq.s32.totalorder %s28, 0
      %p217 = por %p215, %p216
      %p218 = scmp.ne.s32.totalorder %s204, %s205
      %p219 = scmp.eq.s32.totalorder %s29, 1
      %p220 = por %p218, %p219
      %p222 = scmp.ne.s32.totalorder %s205, %s221
      %p223 = scmp.eq.s32.totalorder %s29, 0
      %p224 = por %p222, %p223
      %s225 = ssub.s32 %s31, %s38
      %p226 = scmp.eq.s32.totalorder %s225, 0
      %s228 = sadd.s32 %s227, 1
      %s229 = scalar_select %p226, %s227, %s228
      %p232 = pneg %p226
      %p233 = scmp.eq.s32.totalorder %s23, 1
      %p234 = por %p232, %p233
      %p235 = scmp.ne.s32.totalorder %s227, %s230
      %p236 = scmp.eq.s32.totalorder %s23, 0
      %p237 = por %p235, %p236
      %p238 = scmp.ne.s32.totalorder %s227, %s230
      %p239 = scmp.eq.s32.totalorder %s28, 1
      %p240 = por %p238, %p239
      %p241 = scmp.ne.s32.totalorder %s230, %s231
      %p242 = scmp.eq.s32.totalorder %s28, 0
      %p243 = por %p241, %p242
      %p244 = scmp.ne.s32.totalorder %s230, %s231
      %p245 = scmp.eq.s32.totalorder %s29, 1
      %p246 = por %p244, %p245
      %p248 = scmp.ne.s32.totalorder %s231, %s247
      %p249 = scmp.eq.s32.totalorder %s29, 0
      %p250 = por %p248, %p249
      %s251 = ssub.s32 %s31, %s38
      %p252 = scmp.eq.s32.totalorder %s251, 0
      %s254 = sadd.s32 %s253, 1
      %s255 = scalar_select %p252, %s253, %s254
      %p258 = pneg %p252
      %p259 = scmp.eq.s32.totalorder %s23, 1
      %p260 = por %p258, %p259
      %p261 = scmp.ne.s32.totalorder %s253, %s256
      %p262 = scmp.eq.s32.totalorder %s23, 0
      %p263 = por %p261, %p262
      %p264 = scmp.ne.s32.totalorder %s253, %s256
      %p265 = scmp.eq.s32.totalorder %s28, 1
      %p266 = por %p264, %p265
      %p267 = scmp.ne.s32.totalorder %s256, %s257
      %p268 = scmp.eq.s32.totalorder %s28, 0
      %p269 = por %p267, %p268
      %p270 = scmp.ne.s32.totalorder %s256, %s257
      %p271 = scmp.eq.s32.totalorder %s29, 1
      %p272 = por %p270, %p271
      %p274 = scmp.ne.s32.totalorder %s257, %s273
      %p275 = scmp.eq.s32.totalorder %s29, 0
      %p276 = por %p274, %p275
      %s277 = ssub.s32 %s31, %s38
      %p278 = scmp.eq.s32.totalorder %s277, 0
      %s280 = sadd.s32 %s279, 1
      %s281 = scalar_select %p278, %s279, %s280
      %p284 = pneg %p278
      %p285 = scmp.eq.s32.totalorder %s23, 1
      %p286 = por %p284, %p285
      %p287 = scmp.ne.s32.totalorder %s279, %s282
      %p288 = scmp.eq.s32.totalorder %s23, 0
      %p289 = por %p287, %p288
      %p290 = scmp.ne.s32.totalorder %s279, %s282
      %p291 = scmp.eq.s32.totalorder %s28, 1
      %p292 = por %p290, %p291
      %p293 = scmp.ne.s32.totalorder %s282, %s283
      %p294 = scmp.eq.s32.totalorder %s28, 0
      %p295 = por %p293, %p294
      %p296 = scmp.ne.s32.totalorder %s282, %s283
      %p297 = scmp.eq.s32.totalorder %s29, 1
      %p298 = por %p296, %p297
      %p300 = scmp.ne.s32.totalorder %s283, %s299
      %p301 = scmp.eq.s32.totalorder %s29, 0
      %p302 = por %p300, %p301
      %s303 = ssub.s32 %s31, %s38
      %p304 = scmp.eq.s32.totalorder %s303, 0
      %s306 = sadd.s32 %s305, 1
      %s307 = scalar_select %p304, %s305, %s306
      %p310 = pneg %p304
      %p311 = scmp.eq.s32.totalorder %s23, 1
      %p312 = por %p310, %p311
      %p313 = scmp.ne.s32.totalorder %s305, %s308
      %p314 = scmp.eq.s32.totalorder %s23, 0
      %p315 = por %p313, %p314
      %p316 = scmp.ne.s32.totalorder %s305, %s308
      %p317 = scmp.eq.s32.totalorder %s28, 1
      %p318 = por %p316, %p317
      %p319 = scmp.ne.s32.totalorder %s308, %s309
      %p320 = scmp.eq.s32.totalorder %s28, 0
      %p321 = por %p319, %p320
      %p322 = scmp.ne.s32.totalorder %s308, %s309
      %p323 = scmp.eq.s32.totalorder %s29, 1
      %p324 = por %p322, %p323
      %p326 = scmp.ne.s32.totalorder %s309, %s325
      %p327 = scmp.eq.s32.totalorder %s29, 0
      %p328 = por %p326, %p327
      %s329 = ssub.s32 %s31, %s38
      %p330 = scmp.eq.s32.totalorder %s329, 0
      %s332 = sadd.s32 %s331, 1
      %s333 = scalar_select %p330, %s331, %s332
      %p336 = pneg %p330
      %p337 = scmp.eq.s32.totalorder %s23, 1
      %p338 = por %p336, %p337
      %p339 = scmp.ne.s32.totalorder %s331, %s334
      %p340 = scmp.eq.s32.totalorder %s23, 0
      %p341 = por %p339, %p340
      %p342 = scmp.ne.s32.totalorder %s331, %s334
      %p343 = scmp.eq.s32.totalorder %s28, 1
      %p344 = por %p342, %p343
      %p345 = scmp.ne.s32.totalorder %s334, %s335
      %p346 = scmp.eq.s32.totalorder %s28, 0
      %p347 = por %p345, %p346
      %p348 = scmp.ne.s32.totalorder %s334, %s335
      %p349 = scmp.eq.s32.totalorder %s29, 1
      %p350 = por %p348, %p349
      %p352 = scmp.ne.s32.totalorder %s335, %s351
      %p353 = scmp.eq.s32.totalorder %s29, 0
      %p354 = por %p352, %p353
      %s355 = ssub.s32 %s31, %s38
      %p356 = scmp.eq.s32.totalorder %s355, 0
      %s358 = sadd.s32 %s357, 1
      %s359 = scalar_select %p356, %s357, %s358
      %p362 = pneg %p356
      %p363 = scmp.eq.s32.totalorder %s23, 1
      %p364 = por %p362, %p363
      %p365 = scmp.ne.s32.totalorder %s357, %s360
      %p366 = scmp.eq.s32.totalorder %s23, 0
      %p367 = por %p365, %p366
      %p368 = scmp.ne.s32.totalorder %s357, %s360
      %p369 = scmp.eq.s32.totalorder %s28, 1
      %p370 = por %p368, %p369
      %p371 = scmp.ne.s32.totalorder %s360, %s361
      %p372 = scmp.eq.s32.totalorder %s28, 0
      %p373 = por %p371, %p372
      %p374 = scmp.ne.s32.totalorder %s360, %s361
      %p375 = scmp.eq.s32.totalorder %s29, 1
      %p376 = por %p374, %p375
      %p378 = scmp.ne.s32.totalorder %s361, %s377
      %p379 = scmp.eq.s32.totalorder %s29, 0
      %p380 = por %p378, %p379
      %s381 = ssub.s32 %s31, %s38
      %p382 = scmp.eq.s32.totalorder %s381, 0
      %s384 = sadd.s32 %s383, 1
      %s385 = scalar_select %p382, %s383, %s384
      %p388 = pneg %p382
      %p389 = scmp.eq.s32.totalorder %s23, 1
      %p390 = por %p388, %p389
      %p391 = scmp.ne.s32.totalorder %s383, %s386
      %p392 = scmp.eq.s32.totalorder %s23, 0
      %p393 = por %p391, %p392
      %p394 = scmp.ne.s32.totalorder %s383, %s386
      %p395 = scmp.eq.s32.totalorder %s28, 1
      %p396 = por %p394, %p395
      %p397 = scmp.ne.s32.totalorder %s386, %s387
      %p398 = scmp.eq.s32.totalorder %s28, 0
      %p399 = por %p397, %p398
      %p400 = scmp.ne.s32.totalorder %s386, %s387
      %p401 = scmp.eq.s32.totalorder %s29, 1
      %p402 = por %p400, %p401
      %p404 = scmp.ne.s32.totalorder %s387, %s403
      %p405 = scmp.eq.s32.totalorder %s29, 0
      %p406 = por %p404, %p405
      %s408 = sadd.s32 %s407, 1
      %p411 = scmp.eq.s32.totalorder %s23, 1
      %p412 = scmp.ne.s32.totalorder %s407, %s409
      %p413 = scmp.eq.s32.totalorder %s23, 0
      %p414 = por %p412, %p413
      %p415 = scmp.ne.s32.totalorder %s407, %s409
      %p416 = scmp.eq.s32.totalorder %s28, 1
      %p417 = por %p415, %p416
      %p418 = scmp.ne.s32.totalorder %s409, %s410
      %p419 = scmp.eq.s32.totalorder %s28, 0
      %p420 = por %p418, %p419
      %p421 = scmp.ne.s32.totalorder %s409, %s410
      %p422 = scmp.eq.s32.totalorder %s29, 1
      %p423 = por %p421, %p422
      %p425 = scmp.ne.s32.totalorder %s410, %s424
      %p426 = scmp.eq.s32.totalorder %s29, 0
      %p427 = por %p425, %p426
      %s429 = sadd.s32 %s428, 1
      %p432 = scmp.eq.s32.totalorder %s23, 1
      %p433 = scmp.ne.s32.totalorder %s428, %s430
      %p434 = scmp.eq.s32.totalorder %s23, 0
      %p435 = por %p433, %p434
      %p436 = scmp.ne.s32.totalorder %s428, %s430
      %p437 = scmp.eq.s32.totalorder %s28, 1
      %p438 = por %p436, %p437
      %p439 = scmp.ne.s32.totalorder %s430, %s431
      %p440 = scmp.eq.s32.totalorder %s28, 0
      %p441 = por %p439, %p440
      %p442 = scmp.ne.s32.totalorder %s430, %s431
      %p443 = scmp.eq.s32.totalorder %s29, 1
      %p444 = por %p442, %p443
      %p446 = scmp.ne.s32.totalorder %s431, %s445
      %p447 = scmp.eq.s32.totalorder %s29, 0
      %p448 = por %p446, %p447
      %s449 = ssub.s32 %s30, %s42
      %p450 = scmp.eq.s32.totalorder %s449, 0
      %s452 = sadd.s32 %s451, 1
      %s453 = scalar_select %p450, %s451, %s452
      %p456 = pneg %p450
      %p457 = scmp.eq.s32.totalorder %s23, 1
      %p458 = por %p456, %p457
      %p459 = scmp.ne.s32.totalorder %s451, %s454
      %p460 = scmp.eq.s32.totalorder %s23, 0
      %p461 = por %p459, %p460
      %p462 = scmp.ne.s32.totalorder %s451, %s454
      %p463 = scmp.eq.s32.totalorder %s28, 1
      %p464 = por %p462, %p463
      %p465 = scmp.ne.s32.totalorder %s454, %s455
      %p466 = scmp.eq.s32.totalorder %s28, 0
      %p467 = por %p465, %p466
      %p468 = scmp.ne.s32.totalorder %s454, %s455
      %p469 = scmp.eq.s32.totalorder %s29, 1
      %p470 = por %p468, %p469
      %p472 = scmp.ne.s32.totalorder %s455, %s471
      %p473 = scmp.eq.s32.totalorder %s29, 0
      %p474 = por %p472, %p473
      %p475 = scmp.le.s32.totalorder 1, %s23
      %p476 = scmp.lt.s32.totalorder %s23, 3
      %p477 = pnand %p475, %p476
      %p478 = pneg %p477
      // Predicated region
      $region9: #{tpu_custom_call.1} parent=5 // pred_check
        _
      $region10: #{tpu_custom_call.1} parent=5 // pred_check_branch
        %480 = sbr.rel (%p477) target = $region12
      $region11: #{tpu_custom_call.1} parent=5 // pred_region
        %s481 = ssub.s32 %s23, 1
        // Predicated region
        $region13: #{tpu_custom_call.1} parent=11 // pred_check
          %p482 = pneg %p61
        $region14: #{tpu_custom_call.1} parent=11 // pred_check_branch
          %484 = sbr.rel (%p482) target = $region16
        $region15: #{tpu_custom_call.1} parent=11 // pred_region
          %s485 = smul.u32 2, %s32
          %p486 = scmp.lt.s32.totalorder %s485, 1
          %s487 = scalar_select %p486, %s485, 1
          %s488 = smul.addr %s487, 8
          %s489 = scalar_lea.vmem %s0, %s488
          %s490 = smul.u32 2, %s32
        $region16: #{tpu_custom_call.1} parent=11 // pred_fallthru
          _
        // Predicated region
        $region17: #{tpu_custom_call.1} parent=11 // pred_check
          %p491 = pneg %p87
        $region18: #{tpu_custom_call.1} parent=11 // pred_check_branch
          %493 = sbr.rel (%p491) target = $region20
        $region19: #{tpu_custom_call.1} parent=11 // pred_region
          %s494 = smul.u32 2, %s32
          %p495 = scmp.lt.s32.totalorder %s494, 1
          %s496 = scalar_select %p495, %s494, 1
          %s497 = scalar_lea.vmem %s1, %s496
          %s498 = smul.u32 2, %s32
        $region20: #{tpu_custom_call.1} parent=11 // pred_fallthru
          _
        // Predicated region
        $region21: #{tpu_custom_call.1} parent=11 // pred_check
          %p499 = pneg %p420
        $region22: #{tpu_custom_call.1} parent=11 // pred_check_branch
          %501 = sbr.rel (%p499) target = $region24
        $region23: #{tpu_custom_call.1} parent=11 // pred_region
          _
        $region24: #{tpu_custom_call.1} parent=11 // pred_fallthru
          _
        // Predicated region
        $region25: #{tpu_custom_call.1} parent=11 // pred_check
          %p502 = pneg %p441
        $region26: #{tpu_custom_call.1} parent=11 // pred_check_branch
          %504 = sbr.rel (%p502) target = $region28
        $region27: #{tpu_custom_call.1} parent=11 // pred_region
          _
        $region28: #{tpu_custom_call.1} parent=11 // pred_fallthru
          _
      $region12: #{tpu_custom_call.1} parent=5 // pred_fallthru
        _
      %p505 = scmp.lt.s32.totalorder %s23, 2
      // Predicated region
      $region29: #{tpu_custom_call.1} parent=5 // pred_check
        %p506 = pneg %p505
      $region30: #{tpu_custom_call.1} parent=5 // pred_check_branch
        %508 = sbr.rel (%p506) target = $region32
      $region31: #{tpu_custom_call.1} parent=5 // pred_region
        // Predicated region
        $region33: #{tpu_custom_call.1} parent=31 // pred_check
          %p509 = pneg %p107
        $region34: #{tpu_custom_call.1} parent=31 // pred_check_branch
          %511 = sbr.rel (%p509) target = $region36
        $region35: #{tpu_custom_call.1} parent=31 // pred_region
          %p512 = scmp.lt.s32.totalorder %s31, 1
          %s513 = scalar_select %p512, %s31, 1
          %s514 = scalar_lea.vmem %s2, %s513
        $region36: #{tpu_custom_call.1} parent=31 // pred_fallthru
          _
        // Predicated region
        $region37: #{tpu_custom_call.1} parent=31 // pred_check
          %p515 = pneg %p133
        $region38: #{tpu_custom_call.1} parent=31 // pred_check_branch
          %517 = sbr.rel (%p515) target = $region40
        $region39: #{tpu_custom_call.1} parent=31 // pred_region
          %p518 = scmp.lt.s32.totalorder %s31, 1
          %s519 = scalar_select %p518, %s31, 1
          %s520 = scalar_lea.vmem %s3, %s519
        $region40: #{tpu_custom_call.1} parent=31 // pred_fallthru
          _
        // Predicated region
        $region41: #{tpu_custom_call.1} parent=31 // pred_check
          %p521 = pneg %p159
        $region42: #{tpu_custom_call.1} parent=31 // pred_check_branch
          %523 = sbr.rel (%p521) target = $region44
        $region43: #{tpu_custom_call.1} parent=31 // pred_region
          %p524 = scmp.lt.s32.totalorder %s31, 1
          %s525 = scalar_select %p524, %s31, 1
          %s526 = scalar_lea.vmem %s4, %s525
        $region44: #{tpu_custom_call.1} parent=31 // pred_fallthru
          _
        // Predicated region
        $region45: #{tpu_custom_call.1} parent=31 // pred_check
          %p527 = pneg %p185
        $region46: #{tpu_custom_call.1} parent=31 // pred_check_branch
          %529 = sbr.rel (%p527) target = $region48
        $region47: #{tpu_custom_call.1} parent=31 // pred_region
          %p530 = scmp.lt.s32.totalorder %s31, 1
          %s531 = scalar_select %p530, %s31, 1
          %s532 = scalar_lea.vmem %s5, %s531
        $region48: #{tpu_custom_call.1} parent=31 // pred_fallthru
          _
        // Predicated region
        $region49: #{tpu_custom_call.1} parent=31 // pred_check
          %p533 = pneg %p211
        $region50: #{tpu_custom_call.1} parent=31 // pred_check_branch
          %535 = sbr.rel (%p533) target = $region52
        $region51: #{tpu_custom_call.1} parent=31 // pred_region
          %p536 = scmp.lt.s32.totalorder %s31, 1
          %s537 = scalar_select %p536, %s31, 1
          %s538 = smul.addr %s537, 4
          %s539 = smul.addr %s538, 4
          %s540 = scalar_lea.vmem %s6, %s539
        $region52: #{tpu_custom_call.1} parent=31 // pred_fallthru
          _
        // Predicated region
        $region53: #{tpu_custom_call.1} parent=31 // pred_check
          %p541 = pneg %p237
        $region54: #{tpu_custom_call.1} parent=31 // pred_check_branch
          %543 = sbr.rel (%p541) target = $region56
        $region55: #{tpu_custom_call.1} parent=31 // pred_region
          %p544 = scmp.lt.s32.totalorder %s31, 1
          %s545 = scalar_select %p544, %s31, 1
          %s546 = scalar_lea.vmem %s7, %s545
        $region56: #{tpu_custom_call.1} parent=31 // pred_fallthru
          _
        // Predicated region
        $region57: #{tpu_custom_call.1} parent=31 // pred_check
          %p547 = pneg %p263
        $region58: #{tpu_custom_call.1} parent=31 // pred_check_branch
          %549 = sbr.rel (%p547) target = $region60
        $region59: #{tpu_custom_call.1} parent=31 // pred_region
          %p550 = scmp.lt.s32.totalorder %s31, 1
          %s551 = scalar_select %p550, %s31, 1
          %s552 = smul.addr %s551, 4
          %s553 = smul.addr %s552, 4
          %s554 = scalar_lea.vmem %s8, %s553
        $region60: #{tpu_custom_call.1} parent=31 // pred_fallthru
          _
        // Predicated region
        $region61: #{tpu_custom_call.1} parent=31 // pred_check
          %p555 = pneg %p289
        $region62: #{tpu_custom_call.1} parent=31 // pred_check_branch
          %557 = sbr.rel (%p555) target = $region64
        $region63: #{tpu_custom_call.1} parent=31 // pred_region
          %p558 = scmp.lt.s32.totalorder %s31, 1
          %s559 = scalar_select %p558, %s31, 1
          %s560 = scalar_lea.vmem %s9, %s559
        $region64: #{tpu_custom_call.1} parent=31 // pred_fallthru
          _
        // Predicated region
        $region65: #{tpu_custom_call.1} parent=31 // pred_check
          %p561 = pneg %p315
        $region66: #{tpu_custom_call.1} parent=31 // pred_check_branch
          %563 = sbr.rel (%p561) target = $region68
        $region67: #{tpu_custom_call.1} parent=31 // pred_region
          %p564 = scmp.lt.s32.totalorder %s31, 1
          %s565 = scalar_select %p564, %s31, 1
          %s566 = smul.addr %s565, 64
          %s567 = smul.addr %s566, 4
          %s568 = scalar_lea.vmem %s10, %s567
        $region68: #{tpu_custom_call.1} parent=31 // pred_fallthru
          _
        // Predicated region
        $region69: #{tpu_custom_call.1} parent=31 // pred_check
          %p569 = pneg %p341
        $region70: #{tpu_custom_call.1} parent=31 // pred_check_branch
          %571 = sbr.rel (%p569) target = $region72
        $region71: #{tpu_custom_call.1} parent=31 // pred_region
          %p572 = scmp.lt.s32.totalorder %s31, 1
          %s573 = scalar_select %p572, %s31, 1
          %s574 = smul.addr %s573, 16
          %s575 = scalar_lea.vmem %s11, %s574
        $region72: #{tpu_custom_call.1} parent=31 // pred_fallthru
          _
        // Predicated region
        $region73: #{tpu_custom_call.1} parent=31 // pred_check
          %p576 = pneg %p367
        $region74: #{tpu_custom_call.1} parent=31 // pred_check_branch
          %578 = sbr.rel (%p576) target = $region76
        $region75: #{tpu_custom_call.1} parent=31 // pred_region
          %p579 = scmp.lt.s32.totalorder %s31, 1
          %s580 = scalar_select %p579, %s31, 1
          %s581 = smul.addr %s580, 256
          %s582 = smul.addr %s581, 4
          %s583 = scalar_lea.vmem %s12, %s582
        $region76: #{tpu_custom_call.1} parent=31 // pred_fallthru
          _
        // Predicated region
        $region77: #{tpu_custom_call.1} parent=31 // pred_check
          %p584 = pneg %p393
        $region78: #{tpu_custom_call.1} parent=31 // pred_check_branch
          %586 = sbr.rel (%p584) target = $region80
        $region79: #{tpu_custom_call.1} parent=31 // pred_region
          %p587 = scmp.lt.s32.totalorder %s31, 1
          %s588 = scalar_select %p587, %s31, 1
          %s589 = scalar_lea.vmem %s13, %s588
        $region80: #{tpu_custom_call.1} parent=31 // pred_fallthru
          _
      $region32: #{tpu_custom_call.1} parent=5 // pred_fallthru
        _
      %p590 = scmp.le.s32.totalorder 1, %s23
      %p591 = scmp.lt.s32.totalorder %s23, 3
      %p592 = pnand %p590, %p591
      %p593 = pneg %p592
      // Predicated region
      $region81: #{tpu_custom_call.1} parent=5 // pred_check
        _
      $region82: #{tpu_custom_call.1} parent=5 // pred_check_branch
        %595 = sbr.rel (%p592) target = $region84
      $region83: #{tpu_custom_call.1} parent=5 // pred_region
        %s596 = ssub.s32 %s23, 1
        %s597 = smul.u32 2, %s32
        %p598 = scmp.lt.s32.totalorder %s597, 1
        %s599 = scalar_select %p598, %s597, 1
        %s600 = smul.addr %s599, 8
        %s601 = scalar_lea.vmem %s0, %s600
        %p602 = pneg %p61
        %p603 = pneg %p58
        %s604 = smul.u32 2, %s32
        %p605 = scmp.lt.s32.totalorder %s604, 1
        %s606 = scalar_select %p605, %s604, 1
        %s607 = scalar_lea.vmem %s1, %s606
        %p608 = pneg %p87
        %p609 = pneg %p84
        %p610 = scmp.lt.s32.totalorder %s33, 1
        %s611 = scalar_select %p610, %s33, 1
        %s612 = scalar_lea.vmem %s2, %s611
        %p613 = pneg %p113
        %p614 = pneg %p110
        %p615 = scmp.lt.s32.totalorder %s33, 1
        %s616 = scalar_select %p615, %s33, 1
        %s617 = scalar_lea.vmem %s3, %s616
        %p618 = pneg %p139
        %p619 = pneg %p136
        %p620 = scmp.lt.s32.totalorder %s33, 1
        %s621 = scalar_select %p620, %s33, 1
        %s622 = scalar_lea.vmem %s4, %s621
        %p623 = pneg %p165
        %p624 = pneg %p162
        %p625 = scmp.lt.s32.totalorder %s33, 1
        %s626 = scalar_select %p625, %s33, 1
        %s627 = scalar_lea.vmem %s5, %s626
        %p628 = pneg %p191
        %p629 = pneg %p188
        %p630 = scmp.lt.s32.totalorder %s33, 1
        %s631 = scalar_select %p630, %s33, 1
        %s632 = smul.addr %s631, 4
        %s633 = smul.addr %s632, 4
        %s634 = scalar_lea.vmem %s6, %s633
        %p635 = pneg %p217
        %p636 = pneg %p214
        %p637 = scmp.lt.s32.totalorder %s33, 1
        %s638 = scalar_select %p637, %s33, 1
        %s639 = scalar_lea.vmem %s7, %s638
        %p640 = pneg %p243
        %p641 = pneg %p240
        %p642 = scmp.lt.s32.totalorder %s33, 1
        %s643 = scalar_select %p642, %s33, 1
        %s644 = smul.addr %s643, 4
        %s645 = smul.addr %s644, 4
        %s646 = scalar_lea.vmem %s8, %s645
        %p647 = pneg %p269
        %p648 = pneg %p266
        %p649 = scmp.lt.s32.totalorder %s33, 1
        %s650 = scalar_select %p649, %s33, 1
        %s651 = scalar_lea.vmem %s9, %s650
        %p652 = pneg %p295
        %p653 = pneg %p292
        %p654 = scmp.lt.s32.totalorder %s33, 1
        %s655 = scalar_select %p654, %s33, 1
        %s656 = smul.addr %s655, 64
        %s657 = smul.addr %s656, 4
        %s658 = scalar_lea.vmem %s10, %s657
        %p659 = pneg %p321
        %p660 = pneg %p318
        %p661 = scmp.lt.s32.totalorder %s33, 1
        %s662 = scalar_select %p661, %s33, 1
        %s663 = smul.addr %s662, 16
        %s664 = scalar_lea.vmem %s11, %s663
        %p665 = pneg %p347
        %p666 = pneg %p344
        %p667 = scmp.lt.s32.totalorder %s33, 1
        %s668 = scalar_select %p667, %s33, 1
        %s669 = smul.addr %s668, 256
        %s670 = smul.addr %s669, 4
        %s671 = scalar_lea.vmem %s12, %s670
        %p672 = pneg %p373
        %p673 = pneg %p370
        %p674 = scmp.lt.s32.totalorder %s33, 1
        %s675 = scalar_select %p674, %s33, 1
        %s676 = scalar_lea.vmem %s13, %s675
        %p677 = pneg %p399
        %p678 = pneg %p396
        %p679 = pneg %p420
        %p680 = pneg %p417
        %p681 = pneg %p441
        %p682 = pneg %p438
        %p683 = pneg %p467
        %p684 = pneg %p464
        %s685 = smul.u32 2, %s32
        %p686 = scmp.lt.s32.totalorder %s685, 1
        %s687 = scalar_select %p686, %s685, 1
        %s688 = smul.addr %s687, 8
        %s689 = scalar_lea.vmem %s0, %s688
        %s690 = smul.u32 2, %s32
        %s691 = smul.u32 2, %s32
        %p692 = scmp.lt.s32.totalorder %s691, 1
        %s693 = scalar_select %p692, %s691, 1
        %s694 = scalar_lea.vmem %s1, %s693
        %s695 = smul.u32 2, %s32
        %p696 = scmp.lt.s32.totalorder %s33, 1
        %s697 = scalar_select %p696, %s33, 1
        %s698 = scalar_lea.vmem %s2, %s697
        %p699 = scmp.lt.s32.totalorder %s33, 1
        %s700 = scalar_select %p699, %s33, 1
        %s701 = scalar_lea.vmem %s3, %s700
        %p702 = scmp.lt.s32.totalorder %s33, 1
        %s703 = scalar_select %p702, %s33, 1
        %s704 = scalar_lea.vmem %s4, %s703
        %p705 = scmp.lt.s32.totalorder %s33, 1
        %s706 = scalar_select %p705, %s33, 1
        %s707 = scalar_lea.vmem %s5, %s706
        %p708 = scmp.lt.s32.totalorder %s33, 1
        %s709 = scalar_select %p708, %s33, 1
        %s710 = smul.addr %s709, 4
        %s711 = smul.addr %s710, 4
        %s712 = scalar_lea.vmem %s6, %s711
        %p713 = scmp.lt.s32.totalorder %s33, 1
        %s714 = scalar_select %p713, %s33, 1
        %s715 = scalar_lea.vmem %s7, %s714
        %p716 = scmp.lt.s32.totalorder %s33, 1
        %s717 = scalar_select %p716, %s33, 1
        %s718 = smul.addr %s717, 4
        %s719 = smul.addr %s718, 4
        %s720 = scalar_lea.vmem %s8, %s719
        %p721 = scmp.lt.s32.totalorder %s33, 1
        %s722 = scalar_select %p721, %s33, 1
        %s723 = scalar_lea.vmem %s9, %s722
        %p724 = scmp.lt.s32.totalorder %s33, 1
        %s725 = scalar_select %p724, %s33, 1
        %s726 = smul.addr %s725, 64
        %s727 = smul.addr %s726, 4
        %s728 = scalar_lea.vmem %s10, %s727
        %p729 = scmp.lt.s32.totalorder %s33, 1
        %s730 = scalar_select %p729, %s33, 1
        %s731 = smul.addr %s730, 16
        %s732 = scalar_lea.vmem %s11, %s731
        %p733 = scmp.lt.s32.totalorder %s33, 1
        %s734 = scalar_select %p733, %s33, 1
        %s735 = smul.addr %s734, 256
        %s736 = smul.addr %s735, 4
        %s737 = scalar_lea.vmem %s12, %s736
        %p738 = scmp.lt.s32.totalorder %s33, 1
        %s739 = scalar_select %p738, %s33, 1
        %s740 = scalar_lea.vmem %s13, %s739
        %s741 = smul.u32 2, %s32
        %p743 = scmp.eq.s32.totalorder %s33, 0
        // Predicated region
        $region85: #{tpu_custom_call.1} parent=83 // pred_check
          %p744 = pneg %p743
        $region86: #{tpu_custom_call.1} parent=83 // pred_check_branch
          %746 = sbr.rel (%p744) target = $region88
        $region87: #{tpu_custom_call.1} parent=83 // pred_region
          %v747 = vld [vmem:[%s689] sm:$0xff]
          %v748 = vld [vmem:[%s689 + $0x8] sm:$0xff]
          %vm749 = vcmask 261120
          %750 = vst.msk [vmem:[#allocation2] sm:$0xff] %vm749, %v747
          %751 = vst.msk [vmem:[#allocation2 + $0x8] sm:$0xff] %vm749, %v748
          %v752 = vld [vmem:[%s694] sm:$0x1]
          %v753 = vld [vmem:[%s694 + $0x1] sm:$0x1]
          %vm754 = vcmp.eq.s32.totalorder %v752, 0
          %vm755 = vcmp.eq.s32.totalorder %v753, 0
          %v756 = vsel %vm754, -1e+09, 0.0
          %v757 = vsel %vm755, -1e+09, 0.0
          %vm758 = vcmask 57344
          %759 = vst.msk [vmem:[#allocation3] sm:$0x1] %vm758, %v756
          %760 = vst.msk [vmem:[#allocation3 + $0x1] sm:$0x1] %vm758, %v757
          %761 = vst.msk [vmem:[#allocation3 + $0x2] sm:$0x1] %vm758, %v756
          %762 = vst.msk [vmem:[#allocation3 + $0x3] sm:$0x1] %vm758, %v757
          %763 = vst.msk [vmem:[#allocation3 + $0x4] sm:$0x1] %vm758, %v756
          %764 = vst.msk [vmem:[#allocation3 + $0x5] sm:$0x1] %vm758, %v757
          %765 = vst.msk [vmem:[#allocation3 + $0x6] sm:$0x1] %vm758, %v756
          %766 = vst.msk [vmem:[#allocation3 + $0x7] sm:$0x1] %vm758, %v757
        $region88: #{tpu_custom_call.1} parent=83 // pred_fallthru
          _
        %v767 = vld [vmem:[#allocation2] sm:$0xff]
        %v768 = vld [vmem:[#allocation2 + $0x8] sm:$0xff]
        %v769 = vld [vmem:[%s698] sm:$0x1]
        %v770 = vld [vmem:[%s701] sm:$0x1]
        %vm771 = vcmask 261120
        %v772 = vsel %vm771, %v767, 0.0
        %773 = vadd.xlane.f32.xlu0 %v772
        %v774 = vpop.xlane.xlu0 %773
        %v775 = vsel %vm771, %v768, 0.0
        %776 = vadd.xlane.f32.xlu0 %v775
        %v777 = vpop.xlane.xlu0 %776
        %v778 = vrcp.pop 32.0
        %v779 = vmul.f32 %v774, %v778
        %v780 = vmul.f32 %v777, %v778
        %v781 = vsub.f32 %v767, %v779
        %v782 = vsub.f32 %v768, %v780
        %v783 = vmul.f32 %v781, %v781
        %v784 = vmul.f32 %v782, %v782
        %v785 = vsel %vm771, %v783, 0.0
        %786 = vadd.xlane.f32.xlu0 %v785
        %v787 = vpop.xlane.xlu0 %786
        %v788 = vsel %vm771, %v784, 0.0
        %789 = vadd.xlane.f32.xlu0 %v788
        %v790 = vpop.xlane.xlu0 %789
        %v791 = vmul.f32 %v787, 0.032258064
        %v792 = vmul.f32 %v790, 0.032258064
        %v793 = vrsqrt.pop %v791
        %v794 = vmul.f32 %v791, %v793
        %vm795 = vcmp.eq.f32.partialorder %v791, inf
        %v796 = vsel %vm795, %v791, %v794
        %vm797 = vcmp.eq.f32.partialorder %v791, 0.0
        %v798 = vand.u32 %v791, 2147483648
        %v799 = vsel %vm797, %v798, %v796
        %v800 = vrsqrt.pop %v792
        %v801 = vmul.f32 %v792, %v800
        %vm802 = vcmp.eq.f32.partialorder %v792, inf
        %v803 = vsel %vm802, %v792, %v801
        %vm804 = vcmp.eq.f32.partialorder %v792, 0.0
        %v805 = vand.u32 %v792, 2147483648
        %v806 = vsel %vm804, %v805, %v803
        %v808 = vlaneseq
        %v809 = vshrl.u32 %v808, 7
        %v810 = vsub.s32 0, %v809
        %v811 = vrot.slane %v769, %v810
        %v813 = vmul.f32 %v811, %v781
        %v814 = vmul.f32 %v811, %v782
        %v815 = vadd.f32 %v799, 1e-06
        %v816 = vadd.f32 %v806, 1e-06
        %v817 = vrcp.pop %v815
        %v818 = vmul.f32 %v813, %v817
        %v819 = vrcp.pop %v816
        %v820 = vmul.f32 %v814, %v819
        %v822 = vlaneseq
        %v823 = vshrl.u32 %v822, 7
        %v824 = vsub.s32 0, %v823
        %v825 = vrot.slane %v770, %v824
        %v827 = vadd.f32 %v818, %v825
        %v828 = vadd.f32 %v820, %v825
        %v829 = vpack.c.bf16 %v828, %v827
        %v830 = vld [vmem:[%s712] sm:$0xf]
        %v831 = vld [vmem:[%s712 + $0x4] sm:$0xf]
        %v832 = vld [vmem:[%s712 + $0x8] sm:$0xf]
        %v833 = vld [vmem:[%s712 + $0xc] sm:$0xf]
        %v834 = vld [vmem:[%s715] sm:$0x1]
        %v836 = vlaneseq
        %v837 = vshrl.u32 %v836, 7
        %v838 = vsub.s32 0, %v837
        %v839 = vrot.slane %v834, %v838
        %v845 = vunpack.c.l.b16 %v830
        %v846 = vunpack.c.l.b16 %v831
        %v847 = vunpack.c.l.b16 %v832
        %v848 = vunpack.c.l.b16 %v833
        %v849 = vpack.c.b16 %v846, %v845
        %v850 = vpack.c.b16 %v848, %v847
        %v854 = vsel %vm771, %v829, 0
        %856 = vmatprep.subr.bf16.mxu0 0
        %857 = vmatpush1.bf16.msra.mxu0 0
        %858 = vmatprep.subr.bf16.mxu0 0
        %859 = vmatpush1.bf16.msra.mxu0 0
        %860 = vmatprep.subr.bf16.mxu0 0
        %861 = vmatpush1.bf16.msra.mxu0 0
        %862 = vmatprep.subr.bf16.mxu0 0
        %863 = vmatpush1.bf16.msra.mxu0 0
        %864 = vmatprep.subr.bf16.mxu0 0
        %865 = vmatpush1.bf16.msra.mxu0 0
        %866 = vmatprep.subr.bf16.mxu0 0
        %867 = vmatpush1.bf16.msra.mxu0 0
        %868 = vmatprep.subr.bf16.mxu0 0
        %869 = vmatpush1.bf16.msra.mxu0 %v850
        %870 = vmatprep.subr.bf16.mxu0 0
        %871 = vmatpush1.bf16.msra.mxu0 %v849
        %872 = vmatprep.subr.bf16.mxu0 0
        %873 = vmatpush2.bf16.msra.mxu0 0
        %874 = vmatprep.subr.bf16.mxu0 0
        %875 = vmatpush2.bf16.msra.mxu0 0
        %876 = vmatprep.subr.bf16.mxu0 0
        %877 = vmatpush2.bf16.msra.mxu0 0
        %878 = vmatprep.subr.bf16.mxu0 0
        %879 = vmatpush2.bf16.msra.mxu0 0
        %880 = vmatprep.subr.bf16.mxu0 0
        %881 = vmatpush2.bf16.msra.mxu0 0
        %882 = vmatprep.subr.bf16.mxu0 0
        %883 = vmatpush2.bf16.msra.mxu0 0
        %884 = vmatprep.subr.bf16.mxu0 0
        %885 = vmatpush2.bf16.msra.mxu0 0
        %886 = vmatprep.subr.bf16.mxu0 0
        %887 = vmatpush2.bf16.msra.mxu0 0
        %888 = vmatprep.mubr.bf16.mxu0 0
        %889 = vmatmul.mubr.bf16.gmra.mxu0 %v854
        %v890 = vpop.f32.mrf.mxu0
        %v891 = vadd.f32 %v839, %v890
        %v892 = vpop.f32.mrf.mxu0
        %v893 = vpop.f32.mrf.mxu0
        %v894 = vadd.f32 %v839, %v893
        %v895 = vpop.f32.mrf.mxu0
        %896 = vdwg.mxu0
        %v897 = vpack.c.bf16 %v894, %v891
        %v899 = vunpack.c.l.b16 %v897
        %v900 = vunpack.c.h.b16 %v897
        %v901 = vpack.c.b16 %v899, %v899
        %v902 = vpack.c.b16 %v900, %v900
        %903 = vrot.lane.b32.xlu0 %v901, 120
        %v904 = vpop.permute.xlu0 %903
        %905 = vrot.lane.b32.xlu0 %v902, 120
        %v906 = vpop.permute.xlu0 %905
        %907 = vrot.lane.b32.xlu0 %v901, 112
        %v908 = vpop.permute.xlu0 %907
        %909 = vrot.lane.b32.xlu0 %v902, 112
        %v910 = vpop.permute.xlu0 %909
        %911 = vrot.lane.b32.xlu0 %v901, 104
        %v912 = vpop.permute.xlu0 %911
        %913 = vrot.lane.b32.xlu0 %v902, 104
        %v914 = vpop.permute.xlu0 %913
        %915 = vrot.lane.b32.xlu0 %v901, 96
        %v916 = vpop.permute.xlu0 %915
        %vm917 = vcmask 64512
        %v919 = vsel %vm917, %v901, 0
        %v922 = vsel %vm917, %v916, 0
        %924 = vmatprep.subr.bf16.mxu0 0
        %925 = vmatpush1.bf16.xpose.msra.mxu0 0
        %926 = vmatprep.subr.bf16.mxu0 0
        %927 = vmatpush1.bf16.xpose.msra.mxu0 0
        %928 = vmatprep.subr.bf16.mxu0 0
        %929 = vmatpush1.bf16.xpose.msra.mxu0 0
        %930 = vmatprep.subr.bf16.mxu0 0
        %931 = vmatpush1.bf16.xpose.msra.mxu0 0
        %932 = vmatprep.subr.bf16.mxu0 0
        %933 = vmatpush1.bf16.xpose.msra.mxu0 0
        %934 = vmatprep.subr.bf16.mxu0 0
        %935 = vmatpush1.bf16.xpose.msra.mxu0 0
        %936 = vmatprep.subr.bf16.mxu0 0
        %937 = vmatpush1.bf16.xpose.msra.mxu0 0
        %938 = vmatprep.subr.bf16.mxu0 0
        %939 = vmatpush1.bf16.xpose.msra.mxu0 %v922
        %940 = vmatprep.subr.bf16.mxu0 0
        %941 = vmatpush2.bf16.xpose.msra.mxu0 0
        %942 = vmatprep.subr.bf16.mxu0 0
        %943 = vmatpush2.bf16.xpose.msra.mxu0 0
        %944 = vmatprep.subr.bf16.mxu0 0
        %945 = vmatpush2.bf16.xpose.msra.mxu0 0
        %946 = vmatprep.subr.bf16.mxu0 0
        %947 = vmatpush2.bf16.xpose.msra.mxu0 0
        %948 = vmatprep.subr.bf16.mxu0 0
        %949 = vmatpush2.bf16.xpose.msra.mxu0 0
        %950 = vmatprep.subr.bf16.mxu0 0
        %951 = vmatpush2.bf16.xpose.msra.mxu0 0
        %952 = vmatprep.subr.bf16.mxu0 0
        %953 = vmatpush2.bf16.xpose.msra.mxu0 0
        %954 = vmatprep.subr.bf16.mxu0 0
        %955 = vmatpush2.bf16.xpose.msra.mxu0 0
        %956 = vmatprep.mubr.bf16.mxu0 0
        %957 = vmatmul.mubr.bf16.gmra.mxu0 %v919
        %v958 = vpop.f32.mrf.mxu0
        %v959 = vadd.f32 0.0, %v958
        %v960 = vpop.f32.mrf.mxu0
        %v961 = vpop.f32.mrf.mxu0
        %v962 = vpop.f32.mrf.mxu0
        %963 = vdwg.mxu0
        %964 = vrot.lane.b32.xlu0 %v902, 96
        %v965 = vpop.permute.xlu0 %964
        %v967 = vsel %vm917, %v902, 0
        %v970 = vsel %vm917, %v965, 0
        %972 = vmatprep.subr.bf16.mxu0 0
        %973 = vmatpush1.bf16.xpose.msra.mxu0 0
        %974 = vmatprep.subr.bf16.mxu0 0
        %975 = vmatpush1.bf16.xpose.msra.mxu0 0
        %976 = vmatprep.subr.bf16.mxu0 0
        %977 = vmatpush1.bf16.xpose.msra.mxu0 0
        %978 = vmatprep.subr.bf16.mxu0 0
        %979 = vmatpush1.bf16.xpose.msra.mxu0 0
        %980 = vmatprep.subr.bf16.mxu0 0
        %981 = vmatpush1.bf16.xpose.msra.mxu0 0
        %982 = vmatprep.subr.bf16.mxu0 0
        %983 = vmatpush1.bf16.xpose.msra.mxu0 0
        %984 = vmatprep.subr.bf16.mxu0 0
        %985 = vmatpush1.bf16.xpose.msra.mxu0 0
        %986 = vmatprep.subr.bf16.mxu0 0
        %987 = vmatpush1.bf16.xpose.msra.mxu0 %v970
        %988 = vmatprep.subr.bf16.mxu0 0
        %989 = vmatpush2.bf16.xpose.msra.mxu0 0
        %990 = vmatprep.subr.bf16.mxu0 0
        %991 = vmatpush2.bf16.xpose.msra.mxu0 0
        %992 = vmatprep.subr.bf16.mxu0 0
        %993 = vmatpush2.bf16.xpose.msra.mxu0 0
        %994 = vmatprep.subr.bf16.mxu0 0
        %995 = vmatpush2.bf16.xpose.msra.mxu0 0
        %996 = vmatprep.subr.bf16.mxu0 0
        %997 = vmatpush2.bf16.xpose.msra.mxu0 0
        %998 = vmatprep.subr.bf16.mxu0 0
        %999 = vmatpush2.bf16.xpose.msra.mxu0 0
        %1000 = vmatprep.subr.bf16.mxu0 0
        %1001 = vmatpush2.bf16.xpose.msra.mxu0 0
        %1002 = vmatprep.subr.bf16.mxu0 0
        %1003 = vmatpush2.bf16.xpose.msra.mxu0 0
        %1004 = vmatprep.mubr.bf16.mxu0 0
        %1005 = vmatmul.mubr.bf16.gmra.mxu0 %v967
        %v1006 = vpop.f32.mrf.mxu0
        %v1007 = vadd.f32 0.0, %v1006
        %v1008 = vpop.f32.mrf.mxu0
        %v1009 = vpop.f32.mrf.mxu0
        %v1010 = vpop.f32.mrf.mxu0
        %1011 = vdwg.mxu0
        %v1012 = vunpack.c.l.b16 %v904
        %v1013 = vpack.c.b16 %v1012, %v1012
        %1014 = vrot.lane.b32.xlu0 %v1013, 96
        %v1015 = vpop.permute.xlu0 %1014
        %v1017 = vsel %vm917, %v904, 0
        %v1020 = vsel %vm917, %v1015, 0
        %1022 = vmatprep.subr.bf16.mxu0 0
        %1023 = vmatpush1.bf16.xpose.msra.mxu0 0
        %1024 = vmatprep.subr.bf16.mxu0 0
        %1025 = vmatpush1.bf16.xpose.msra.mxu0 0
        %1026 = vmatprep.subr.bf16.mxu0 0
        %1027 = vmatpush1.bf16.xpose.msra.mxu0 0
        %1028 = vmatprep.subr.bf16.mxu0 0
        %1029 = vmatpush1.bf16.xpose.msra.mxu0 0
        %1030 = vmatprep.subr.bf16.mxu0 0
        %1031 = vmatpush1.bf16.xpose.msra.mxu0 0
        %1032 = vmatprep.subr.bf16.mxu0 0
        %1033 = vmatpush1.bf16.xpose.msra.mxu0 0
        %1034 = vmatprep.subr.bf16.mxu0 0
        %1035 = vmatpush1.bf16.xpose.msra.mxu0 0
        %1036 = vmatprep.subr.bf16.mxu0 0
        %1037 = vmatpush1.bf16.xpose.msra.mxu0 %v1020
        %1038 = vmatprep.subr.bf16.mxu0 0
        %1039 = vmatpush2.bf16.xpose.msra.mxu0 0
        %1040 = vmatprep.subr.bf16.mxu0 0
        %1041 = vmatpush2.bf16.xpose.msra.mxu0 0
        %1042 = vmatprep.subr.bf16.mxu0 0
        %1043 = vmatpush2.bf16.xpose.msra.mxu0 0
        %1044 = vmatprep.subr.bf16.mxu0 0
        %1045 = vmatpush2.bf16.xpose.msra.mxu0 0
        %1046 = vmatprep.subr.bf16.mxu0 0
        %1047 = vmatpush2.bf16.xpose.msra.mxu0 0
        %1048 = vmatprep.subr.bf16.mxu0 0
        %1049 = vmatpush2.bf16.xpose.msra.mxu0 0
        %1050 = vmatprep.subr.bf16.mxu0 0
        %1051 = vmatpush2.bf16.xpose.msra.mxu0 0
        %1052 = vmatprep.subr.bf16.mxu0 0
        %1053 = vmatpush2.bf16.xpose.msra.mxu0 0
        %1054 = vmatprep.mubr.bf16.mxu0 0
        %1055 = vmatmul.mubr.bf16.gmra.mxu0 %v1017
        %v1056 = vpop.f32.mrf.mxu0
        %v1057 = vadd.f32 0.0, %v1056
        %v1058 = vpop.f32.mrf.mxu0
        %v1059 = vpop.f32.mrf.mxu0
        %v1060 = vpop.f32.mrf.mxu0
        %1061 = vdwg.mxu0
        %v1062 = vunpack.c.l.b16 %v906
        %v1063 = vpack.c.b16 %v1062, %v1062
        %1064 = vrot.lane.b32.xlu0 %v1063, 96
        %v1065 = vpop.permute.xlu0 %1064
        %v1067 = vsel %vm917, %v906, 0
        %v1070 = vsel %vm917, %v1065, 0
        %1072 = vmatprep.subr.bf16.mxu0 0
        %1073 = vmatpush1.bf16.xpose.msra.mxu0 0
        %1074 = vmatprep.subr.bf16.mxu0 0
        %1075 = vmatpush1.bf16.xpose.msra.mxu0 0
        %1076 = vmatprep.subr.bf16.mxu0 0
        %1077 = vmatpush1.bf16.xpose.msra.mxu0 0
        %1078 = vmatprep.subr.bf16.mxu0 0
        %1079 = vmatpush1.bf16.xpose.msra.mxu0 0
        %1080 = vmatprep.subr.bf16.mxu0 0
        %1081 = vmatpush1.bf16.xpose.msra.mxu0 0
        %1082 = vmatprep.subr.bf16.mxu0 0
        %1083 = vmatpush1.bf16.xpose.msra.mxu0 0
        %1084 = vmatprep.subr.bf16.mxu0 0
        %1085 = vmatpush1.bf16.xpose.msra.mxu0 0
        %1086 = vmatprep.subr.bf16.mxu0 0
        %1087 = vmatpush1.bf16.xpose.msra.mxu0 %v1070
        %1088 = vmatprep.subr.bf16.mxu0 0
        %1089 = vmatpush2.bf16.xpose.msra.mxu0 0
        %1090 = vmatprep.subr.bf16.mxu0 0
        %1091 = vmatpush2.bf16.xpose.msra.mxu0 0
        %1092 = vmatprep.subr.bf16.mxu0 0
        %1093 = vmatpush2.bf16.xpose.msra.mxu0 0
        %1094 = vmatprep.subr.bf16.mxu0 0
        %1095 = vmatpush2.bf16.xpose.msra.mxu0 0
        %1096 = vmatprep.subr.bf16.mxu0 0
        %1097 = vmatpush2.bf16.xpose.msra.mxu0 0
        %1098 = vmatprep.subr.bf16.mxu0 0
        %1099 = vmatpush2.bf16.xpose.msra.mxu0 0
        %1100 = vmatprep.subr.bf16.mxu0 0
        %1101 = vmatpush2.bf16.xpose.msra.mxu0 0
        %1102 = vmatprep.subr.bf16.mxu0 0
        %1103 = vmatpush2.bf16.xpose.msra.mxu0 0
        %1104 = vmatprep.mubr.bf16.mxu0 0
        %1105 = vmatmul.mubr.bf16.gmra.mxu0 %v1067
        %v1106 = vpop.f32.mrf.mxu0
        %v1107 = vadd.f32 0.0, %v1106
        %v1108 = vpop.f32.mrf.mxu0
        %v1109 = vpop.f32.mrf.mxu0
        %v1110 = vpop.f32.mrf.mxu0
        %1111 = vdwg.mxu0
        %v1112 = vunpack.c.l.b16 %v908
        %v1113 = vpack.c.b16 %v1112, %v1112
        %1114 = vrot.lane.b32.xlu0 %v1113, 96
        %v1115 = vpop.permute.xlu0 %1114
        %v1117 = vsel %vm917, %v908, 0
        %v1120 = vsel %vm917, %v1115, 0
        %1122 = vmatprep.subr.bf16.mxu0 0
        %1123 = vmatpush1.bf16.xpose.msra.mxu0 0
        %1124 = vmatprep.subr.bf16.mxu0 0
        %1125 = vmatpush1.bf16.xpose.msra.mxu0 0
        %1126 = vmatprep.subr.bf16.mxu0 0
        %1127 = vmatpush1.bf16.xpose.msra.mxu0 0
        %1128 = vmatprep.subr.bf16.mxu0 0
        %1129 = vmatpush1.bf16.xpose.msra.mxu0 0
        %1130 = vmatprep.subr.bf16.mxu0 0
        %1131 = vmatpush1.bf16.xpose.msra.mxu0 0
        %1132 = vmatprep.subr.bf16.mxu0 0
        %1133 = vmatpush1.bf16.xpose.msra.mxu0 0
        %1134 = vmatprep.subr.bf16.mxu0 0
        %1135 = vmatpush1.bf16.xpose.msra.mxu0 0
        %1136 = vmatprep.subr.bf16.mxu0 0
        %1137 = vmatpush1.bf16.xpose.msra.mxu0 %v1120
        %1138 = vmatprep.subr.bf16.mxu0 0
        %1139 = vmatpush2.bf16.xpose.msra.mxu0 0
        %1140 = vmatprep.subr.bf16.mxu0 0
        %1141 = vmatpush2.bf16.xpose.msra.mxu0 0
        %1142 = vmatprep.subr.bf16.mxu0 0
        %1143 = vmatpush2.bf16.xpose.msra.mxu0 0
        %1144 = vmatprep.subr.bf16.mxu0 0
        %1145 = vmatpush2.bf16.xpose.msra.mxu0 0
        %1146 = vmatprep.subr.bf16.mxu0 0
        %1147 = vmatpush2.bf16.xpose.msra.mxu0 0
        %1148 = vmatprep.subr.bf16.mxu0 0
        %1149 = vmatpush2.bf16.xpose.msra.mxu0 0
        %1150 = vmatprep.subr.bf16.mxu0 0
        %1151 = vmatpush2.bf16.xpose.msra.mxu0 0
        %1152 = vmatprep.subr.bf16.mxu0 0
        %1153 = vmatpush2.bf16.xpose.msra.mxu0 0
        %1154 = vmatprep.mubr.bf16.mxu0 0
        %1155 = vmatmul.mubr.bf16.gmra.mxu0 %v1117
        %v1156 = vpop.f32.mrf.mxu0
        %v1157 = vadd.f32 0.0, %v1156
        %v1158 = vpop.f32.mrf.mxu0
        %v1159 = vpop.f32.mrf.mxu0
        %v1160 = vpop.f32.mrf.mxu0
        %1161 = vdwg.mxu0
        %v1162 = vunpack.c.l.b16 %v910
        %v1163 = vpack.c.b16 %v1162, %v1162
        %1164 = vrot.lane.b32.xlu0 %v1163, 96
        %v1165 = vpop.permute.xlu0 %1164
        %v1167 = vsel %vm917, %v910, 0
        %v1170 = vsel %vm917, %v1165, 0
        %1172 = vmatprep.subr.bf16.mxu0 0
        %1173 = vmatpush1.bf16.xpose.msra.mxu0 0
        %1174 = vmatprep.subr.bf16.mxu0 0
        %1175 = vmatpush1.bf16.xpose.msra.mxu0 0
        %1176 = vmatprep.subr.bf16.mxu0 0
        %1177 = vmatpush1.bf16.xpose.msra.mxu0 0
        %1178 = vmatprep.subr.bf16.mxu0 0
        %1179 = vmatpush1.bf16.xpose.msra.mxu0 0
        %1180 = vmatprep.subr.bf16.mxu0 0
        %1181 = vmatpush1.bf16.xpose.msra.mxu0 0
        %1182 = vmatprep.subr.bf16.mxu0 0
        %1183 = vmatpush1.bf16.xpose.msra.mxu0 0
        %1184 = vmatprep.subr.bf16.mxu0 0
        %1185 = vmatpush1.bf16.xpose.msra.mxu0 0
        %1186 = vmatprep.subr.bf16.mxu0 0
        %1187 = vmatpush1.bf16.xpose.msra.mxu0 %v1170
        %1188 = vmatprep.subr.bf16.mxu0 0
        %1189 = vmatpush2.bf16.xpose.msra.mxu0 0
        %1190 = vmatprep.subr.bf16.mxu0 0
        %1191 = vmatpush2.bf16.xpose.msra.mxu0 0
        %1192 = vmatprep.subr.bf16.mxu0 0
        %1193 = vmatpush2.bf16.xpose.msra.mxu0 0
        %1194 = vmatprep.subr.bf16.mxu0 0
        %1195 = vmatpush2.bf16.xpose.msra.mxu0 0
        %1196 = vmatprep.subr.bf16.mxu0 0
        %1197 = vmatpush2.bf16.xpose.msra.mxu0 0
        %1198 = vmatprep.subr.bf16.mxu0 0
        %1199 = vmatpush2.bf16.xpose.msra.mxu0 0
        %1200 = vmatprep.subr.bf16.mxu0 0
        %1201 = vmatpush2.bf16.xpose.msra.mxu0 0
        %1202 = vmatprep.subr.bf16.mxu0 0
        %1203 = vmatpush2.bf16.xpose.msra.mxu0 0
        %1204 = vmatprep.mubr.bf16.mxu0 0
        %1205 = vmatmul.mubr.bf16.gmra.mxu0 %v1167
        %v1206 = vpop.f32.mrf.mxu0
        %v1207 = vadd.f32 0.0, %v1206
        %v1208 = vpop.f32.mrf.mxu0
        %v1209 = vpop.f32.mrf.mxu0
        %v1210 = vpop.f32.mrf.mxu0
        %1211 = vdwg.mxu0
        %v1212 = vunpack.c.l.b16 %v912
        %v1213 = vpack.c.b16 %v1212, %v1212
        %1214 = vrot.lane.b32.xlu0 %v1213, 96
        %v1215 = vpop.permute.xlu0 %1214
        %v1217 = vsel %vm917, %v912, 0
        %v1220 = vsel %vm917, %v1215, 0
        %1222 = vmatprep.subr.bf16.mxu0 0
        %1223 = vmatpush1.bf16.xpose.msra.mxu0 0
        %1224 = vmatprep.subr.bf16.mxu0 0
        %1225 = vmatpush1.bf16.xpose.msra.mxu0 0
        %1226 = vmatprep.subr.bf16.mxu0 0
        %1227 = vmatpush1.bf16.xpose.msra.mxu0 0
        %1228 = vmatprep.subr.bf16.mxu0 0
        %1229 = vmatpush1.bf16.xpose.msra.mxu0 0
        %1230 = vmatprep.subr.bf16.mxu0 0
        %1231 = vmatpush1.bf16.xpose.msra.mxu0 0
        %1232 = vmatprep.subr.bf16.mxu0 0
        %1233 = vmatpush1.bf16.xpose.msra.mxu0 0
        %1234 = vmatprep.subr.bf16.mxu0 0
        %1235 = vmatpush1.bf16.xpose.msra.mxu0 0
        %1236 = vmatprep.subr.bf16.mxu0 0
        %1237 = vmatpush1.bf16.xpose.msra.mxu0 %v1220
        %1238 = vmatprep.subr.bf16.mxu0 0
        %1239 = vmatpush2.bf16.xpose.msra.mxu0 0
        %1240 = vmatprep.subr.bf16.mxu0 0
        %1241 = vmatpush2.bf16.xpose.msra.mxu0 0
        %1242 = vmatprep.subr.bf16.mxu0 0
        %1243 = vmatpush2.bf16.xpose.msra.mxu0 0
        %1244 = vmatprep.subr.bf16.mxu0 0
        %1245 = vmatpush2.bf16.xpose.msra.mxu0 0
        %1246 = vmatprep.subr.bf16.mxu0 0
        %1247 = vmatpush2.bf16.xpose.msra.mxu0 0
        %1248 = vmatprep.subr.bf16.mxu0 0
        %1249 = vmatpush2.bf16.xpose.msra.mxu0 0
        %1250 = vmatprep.subr.bf16.mxu0 0
        %1251 = vmatpush2.bf16.xpose.msra.mxu0 0
        %1252 = vmatprep.subr.bf16.mxu0 0
        %1253 = vmatpush2.bf16.xpose.msra.mxu0 0
        %1254 = vmatprep.mubr.bf16.mxu0 0
        %1255 = vmatmul.mubr.bf16.gmra.mxu0 %v1217
        %v1256 = vpop.f32.mrf.mxu0
        %v1257 = vadd.f32 0.0, %v1256
        %v1258 = vpop.f32.mrf.mxu0
        %v1259 = vpop.f32.mrf.mxu0
        %v1260 = vpop.f32.mrf.mxu0
        %1261 = vdwg.mxu0
        %v1262 = vunpack.c.l.b16 %v914
        %v1263 = vpack.c.b16 %v1262, %v1262
        %1264 = vrot.lane.b32.xlu0 %v1263, 96
        %v1265 = vpop.permute.xlu0 %1264
        %v1267 = vsel %vm917, %v914, 0
        %v1270 = vsel %vm917, %v1265, 0
        %1272 = vmatprep.subr.bf16.mxu0 0
        %1273 = vmatpush1.bf16.xpose.msra.mxu0 0
        %1274 = vmatprep.subr.bf16.mxu0 0
        %1275 = vmatpush1.bf16.xpose.msra.mxu0 0
        %1276 = vmatprep.subr.bf16.mxu0 0
        %1277 = vmatpush1.bf16.xpose.msra.mxu0 0
        %1278 = vmatprep.subr.bf16.mxu0 0
        %1279 = vmatpush1.bf16.xpose.msra.mxu0 0
        %1280 = vmatprep.subr.bf16.mxu0 0
        %1281 = vmatpush1.bf16.xpose.msra.mxu0 0
        %1282 = vmatprep.subr.bf16.mxu0 0
        %1283 = vmatpush1.bf16.xpose.msra.mxu0 0
        %1284 = vmatprep.subr.bf16.mxu0 0
        %1285 = vmatpush1.bf16.xpose.msra.mxu0 0
        %1286 = vmatprep.subr.bf16.mxu0 0
        %1287 = vmatpush1.bf16.xpose.msra.mxu0 %v1270
        %1288 = vmatprep.subr.bf16.mxu0 0
        %1289 = vmatpush2.bf16.xpose.msra.mxu0 0
        %1290 = vmatprep.subr.bf16.mxu0 0
        %1291 = vmatpush2.bf16.xpose.msra.mxu0 0
        %1292 = vmatprep.subr.bf16.mxu0 0
        %1293 = vmatpush2.bf16.xpose.msra.mxu0 0
        %1294 = vmatprep.subr.bf16.mxu0 0
        %1295 = vmatpush2.bf16.xpose.msra.mxu0 0
        %1296 = vmatprep.subr.bf16.mxu0 0
        %1297 = vmatpush2.bf16.xpose.msra.mxu0 0
        %1298 = vmatprep.subr.bf16.mxu0 0
        %1299 = vmatpush2.bf16.xpose.msra.mxu0 0
        %1300 = vmatprep.subr.bf16.mxu0 0
        %1301 = vmatpush2.bf16.xpose.msra.mxu0 0
        %1302 = vmatprep.subr.bf16.mxu0 0
        %1303 = vmatpush2.bf16.xpose.msra.mxu0 0
        %1304 = vmatprep.mubr.bf16.mxu0 0
        %1305 = vmatmul.mubr.bf16.gmra.mxu0 %v1267
        %v1306 = vpop.f32.mrf.mxu0
        %v1307 = vadd.f32 0.0, %v1306
        %v1308 = vpop.f32.mrf.mxu0
        %v1309 = vpop.f32.mrf.mxu0
        %v1310 = vpop.f32.mrf.mxu0
        %1311 = vdwg.mxu0
        %v1312 = vmul.f32 %v959, 0.35355338
        %v1313 = vmul.f32 %v1007, 0.35355338
        %v1314 = vmul.f32 %v1057, 0.35355338
        %v1315 = vmul.f32 %v1107, 0.35355338
        %v1316 = vmul.f32 %v1157, 0.35355338
        %v1317 = vmul.f32 %v1207, 0.35355338
        %v1318 = vmul.f32 %v1257, 0.35355338
        %v1319 = vmul.f32 %v1307, 0.35355338
        %v1320 = vld [vmem:[#allocation3] sm:$0x1]
        %v1321 = vld [vmem:[#allocation3 + $0x1] sm:$0x1]
        %v1322 = vld [vmem:[#allocation3 + $0x2] sm:$0x1]
        %v1323 = vld [vmem:[#allocation3 + $0x3] sm:$0x1]
        %v1324 = vld [vmem:[#allocation3 + $0x4] sm:$0x1]
        %v1325 = vld [vmem:[#allocation3 + $0x5] sm:$0x1]
        %v1326 = vld [vmem:[#allocation3 + $0x6] sm:$0x1]
        %v1327 = vld [vmem:[#allocation3 + $0x7] sm:$0x1]
        %v1336 = vlaneseq
        %v1337 = vshrl.u32 %v1336, 7
        %v1338 = vsub.s32 0, %v1337
        %v1339 = vrot.slane %v1320, %v1338
        %v1340 = vlaneseq
        %v1341 = vshrl.u32 %v1340, 7
        %v1342 = vsub.s32 0, %v1341
        %v1343 = vrot.slane %v1321, %v1342
        %v1344 = vlaneseq
        %v1345 = vshrl.u32 %v1344, 7
        %v1346 = vsub.s32 0, %v1345
        %v1347 = vrot.slane %v1322, %v1346
        %v1348 = vlaneseq
        %v1349 = vshrl.u32 %v1348, 7
        %v1350 = vsub.s32 0, %v1349
        %v1351 = vrot.slane %v1323, %v1350
        %v1352 = vlaneseq
        %v1353 = vshrl.u32 %v1352, 7
        %v1354 = vsub.s32 0, %v1353
        %v1355 = vrot.slane %v1324, %v1354
        %v1356 = vlaneseq
        %v1357 = vshrl.u32 %v1356, 7
        %v1358 = vsub.s32 0, %v1357
        %v1359 = vrot.slane %v1325, %v1358
        %v1360 = vlaneseq
        %v1361 = vshrl.u32 %v1360, 7
        %v1362 = vsub.s32 0, %v1361
        %v1363 = vrot.slane %v1326, %v1362
        %v1364 = vlaneseq
        %v1365 = vshrl.u32 %v1364, 7
        %v1366 = vsub.s32 0, %v1365
        %v1367 = vrot.slane %v1327, %v1366
        %v1376 = vadd.f32 %v1312, %v1339
        %v1377 = vadd.f32 %v1313, %v1343
        %v1378 = vadd.f32 %v1314, %v1347
        %v1379 = vadd.f32 %v1315, %v1351
        %v1380 = vadd.f32 %v1316, %v1355
        %v1381 = vadd.f32 %v1317, %v1359
        %v1382 = vadd.f32 %v1318, %v1363
        %v1383 = vadd.f32 %v1319, %v1367
        %v1384 = vsel %vm917, %v1376, -inf
        %1385 = vmax.xlane.f32.xlu0 %v1384
        %v1386 = vpop.xlane.xlu0 %1385
        %v1387 = vsel %vm917, %v1377, -inf
        %1388 = vmax.xlane.f32.xlu0 %v1387
        %v1389 = vpop.xlane.xlu0 %1388
        %v1390 = vsel %vm917, %v1378, -inf
        %1391 = vmax.xlane.f32.xlu0 %v1390
        %v1392 = vpop.xlane.xlu0 %1391
        %v1393 = vsel %vm917, %v1379, -inf
        %1394 = vmax.xlane.f32.xlu0 %v1393
        %v1395 = vpop.xlane.xlu0 %1394
        %v1396 = vsel %vm917, %v1380, -inf
        %1397 = vmax.xlane.f32.xlu0 %v1396
        %v1398 = vpop.xlane.xlu0 %1397
        %v1399 = vsel %vm917, %v1381, -inf
        %1400 = vmax.xlane.f32.xlu0 %v1399
        %v1401 = vpop.xlane.xlu0 %1400
        %v1402 = vsel %vm917, %v1382, -inf
        %1403 = vmax.xlane.f32.xlu0 %v1402
        %v1404 = vpop.xlane.xlu0 %1403
        %v1405 = vsel %vm917, %v1383, -inf
        %1406 = vmax.xlane.f32.xlu0 %v1405
        %v1407 = vpop.xlane.xlu0 %1406
        %v1408 = vsub.f32 %v1376, %v1386
        %v1409 = vsub.f32 %v1377, %v1389
        %v1410 = vsub.f32 %v1378, %v1392
        %v1411 = vsub.f32 %v1379, %v1395
        %v1412 = vsub.f32 %v1380, %v1398
        %v1413 = vsub.f32 %v1381, %v1401
        %v1414 = vsub.f32 %v1382, %v1404
        %v1415 = vsub.f32 %v1383, %v1407
        %v1416 = vmul.f32 %v1408, 1.442695
        %v1417 = vpow.pop %v1416
        %v1418 = vmul.f32 %v1409, 1.442695
        %v1419 = vpow.pop %v1418
        %v1420 = vmul.f32 %v1410, 1.442695
        %v1421 = vpow.pop %v1420
        %v1422 = vmul.f32 %v1411, 1.442695
        %v1423 = vpow.pop %v1422
        %v1424 = vmul.f32 %v1412, 1.442695
        %v1425 = vpow.pop %v1424
        %v1426 = vmul.f32 %v1413, 1.442695
        %v1427 = vpow.pop %v1426
        %v1428 = vmul.f32 %v1414, 1.442695
        %v1429 = vpow.pop %v1428
        %v1430 = vmul.f32 %v1415, 1.442695
        %v1431 = vpow.pop %v1430
        %v1432 = vsel %vm917, %v1417, 0.0
        %1433 = vadd.xlane.f32.xlu0 %v1432
        %v1434 = vpop.xlane.xlu0 %1433
        %v1435 = vsel %vm917, %v1419, 0.0
        %1436 = vadd.xlane.f32.xlu0 %v1435
        %v1437 = vpop.xlane.xlu0 %1436
        %v1438 = vsel %vm917, %v1421, 0.0
        %1439 = vadd.xlane.f32.xlu0 %v1438
        %v1440 = vpop.xlane.xlu0 %1439
        %v1441 = vsel %vm917, %v1423, 0.0
        %1442 = vadd.xlane.f32.xlu0 %v1441
        %v1443 = vpop.xlane.xlu0 %1442
        %v1444 = vsel %vm917, %v1425, 0.0
        %1445 = vadd.xlane.f32.xlu0 %v1444
        %v1446 = vpop.xlane.xlu0 %1445
        %v1447 = vsel %vm917, %v1427, 0.0
        %1448 = vadd.xlane.f32.xlu0 %v1447
        %v1449 = vpop.xlane.xlu0 %1448
        %v1450 = vsel %vm917, %v1429, 0.0
        %1451 = vadd.xlane.f32.xlu0 %v1450
        %v1452 = vpop.xlane.xlu0 %1451
        %v1453 = vsel %vm917, %v1431, 0.0
        %1454 = vadd.xlane.f32.xlu0 %v1453
        %v1455 = vpop.xlane.xlu0 %1454
        %v1456 = vrcp.pop %v1434
        %v1457 = vrcp.pop %v1437
        %v1458 = vrcp.pop %v1440
        %v1459 = vrcp.pop %v1443
        %v1460 = vrcp.pop %v1446
        %v1461 = vrcp.pop %v1449
        %v1462 = vrcp.pop %v1452
        %v1463 = vrcp.pop %v1455
        %v1464 = vmul.f32 %v1417, %v1456
        %v1465 = vmul.f32 %v1419, %v1457
        %v1466 = vmul.f32 %v1421, %v1458
        %v1467 = vmul.f32 %v1423, %v1459
        %v1468 = vmul.f32 %v1425, %v1460
        %v1469 = vmul.f32 %v1427, %v1461
        %v1470 = vmul.f32 %v1429, %v1462
        %v1471 = vmul.f32 %v1431, %v1463
        %v1472 = vpack.c.bf16 %v1464, %v1464
        %v1473 = vpack.c.bf16 %v1465, %v1465
        %v1474 = vpack.c.bf16 %v1466, %v1466
        %v1475 = vpack.c.bf16 %v1467, %v1467
        %v1476 = vpack.c.bf16 %v1468, %v1468
        %v1477 = vpack.c.bf16 %v1469, %v1469
        %v1478 = vpack.c.bf16 %v1470, %v1470
        %v1479 = vpack.c.bf16 %v1471, %v1471
        %1480 = vrot.lane.b32.xlu0 %v901, 64
        %v1481 = vpop.permute.xlu0 %1480
        %v1483 = vsel %vm917, %v1472, 0
        %vm1485 = vcmask 1043456
        %v1487 = vsel %vm1485, %v1481, 0
        %1489 = vmatprep.subr.bf16.mxu0 0
        %1490 = vmatpush1.bf16.msra.mxu0 0
        %1491 = vmatprep.subr.bf16.mxu0 0
        %1492 = vmatpush1.bf16.msra.mxu0 0
        %1493 = vmatprep.subr.bf16.mxu0 0
        %1494 = vmatpush1.bf16.msra.mxu0 0
        %1495 = vmatprep.subr.bf16.mxu0 0
        %1496 = vmatpush1.bf16.msra.mxu0 0
        %1497 = vmatprep.subr.bf16.mxu0 0
        %1498 = vmatpush1.bf16.msra.mxu0 0
        %1499 = vmatprep.subr.bf16.mxu0 0
        %1500 = vmatpush1.bf16.msra.mxu0 0
        %1501 = vmatprep.subr.bf16.mxu0 0
        %1502 = vmatpush1.bf16.msra.mxu0 0
        %1503 = vmatprep.subr.bf16.mxu0 0
        %1504 = vmatpush1.bf16.msra.mxu0 %v1487
        %1505 = vmatprep.subr.bf16.mxu0 0
        %1506 = vmatpush2.bf16.msra.mxu0 0
        %1507 = vmatprep.subr.bf16.mxu0 0
        %1508 = vmatpush2.bf16.msra.mxu0 0
        %1509 = vmatprep.subr.bf16.mxu0 0
        %1510 = vmatpush2.bf16.msra.mxu0 0
        %1511 = vmatprep.subr.bf16.mxu0 0
        %1512 = vmatpush2.bf16.msra.mxu0 0
        %1513 = vmatprep.subr.bf16.mxu0 0
        %1514 = vmatpush2.bf16.msra.mxu0 0
        %1515 = vmatprep.subr.bf16.mxu0 0
        %1516 = vmatpush2.bf16.msra.mxu0 0
        %1517 = vmatprep.subr.bf16.mxu0 0
        %1518 = vmatpush2.bf16.msra.mxu0 0
        %1519 = vmatprep.subr.bf16.mxu0 0
        %1520 = vmatpush2.bf16.msra.mxu0 0
        %1521 = vmatprep.mubr.bf16.mxu0 0
        %1522 = vmatmul.mubr.bf16.gmra.mxu0 %v1483
        %v1523 = vpop.f32.mrf.mxu0
        %v1524 = vadd.f32 0.0, %v1523
        %v1525 = vpop.f32.mrf.mxu0
        %v1526 = vpop.f32.mrf.mxu0
        %v1527 = vpop.f32.mrf.mxu0
        %1528 = vdwg.mxu0
        %1529 = vrot.lane.b32.xlu0 %v902, 64
        %v1530 = vpop.permute.xlu0 %1529
        %v1532 = vsel %vm917, %v1473, 0
        %v1535 = vsel %vm1485, %v1530, 0
        %1537 = vmatprep.subr.bf16.mxu0 0
        %1538 = vmatpush1.bf16.msra.mxu0 0
        %1539 = vmatprep.subr.bf16.mxu0 0
        %1540 = vmatpush1.bf16.msra.mxu0 0
        %1541 = vmatprep.subr.bf16.mxu0 0
        %1542 = vmatpush1.bf16.msra.mxu0 0
        %1543 = vmatprep.subr.bf16.mxu0 0
        %1544 = vmatpush1.bf16.msra.mxu0 0
        %1545 = vmatprep.subr.bf16.mxu0 0
        %1546 = vmatpush1.bf16.msra.mxu0 0
        %1547 = vmatprep.subr.bf16.mxu0 0
        %1548 = vmatpush1.bf16.msra.mxu0 0
        %1549 = vmatprep.subr.bf16.mxu0 0
        %1550 = vmatpush1.bf16.msra.mxu0 0
        %1551 = vmatprep.subr.bf16.mxu0 0
        %1552 = vmatpush1.bf16.msra.mxu0 %v1535
        %1553 = vmatprep.subr.bf16.mxu0 0
        %1554 = vmatpush2.bf16.msra.mxu0 0
        %1555 = vmatprep.subr.bf16.mxu0 0
        %1556 = vmatpush2.bf16.msra.mxu0 0
        %1557 = vmatprep.subr.bf16.mxu0 0
        %1558 = vmatpush2.bf16.msra.mxu0 0
        %1559 = vmatprep.subr.bf16.mxu0 0
        %1560 = vmatpush2.bf16.msra.mxu0 0
        %1561 = vmatprep.subr.bf16.mxu0 0
        %1562 = vmatpush2.bf16.msra.mxu0 0
        %1563 = vmatprep.subr.bf16.mxu0 0
        %1564 = vmatpush2.bf16.msra.mxu0 0
        %1565 = vmatprep.subr.bf16.mxu0 0
        %1566 = vmatpush2.bf16.msra.mxu0 0
        %1567 = vmatprep.subr.bf16.mxu0 0
        %1568 = vmatpush2.bf16.msra.mxu0 0
        %1569 = vmatprep.mubr.bf16.mxu0 0
        %1570 = vmatmul.mubr.bf16.gmra.mxu0 %v1532
        %v1571 = vpop.f32.mrf.mxu0
        %v1572 = vadd.f32 0.0, %v1571
        %v1573 = vpop.f32.mrf.mxu0
        %v1574 = vpop.f32.mrf.mxu0
        %v1575 = vpop.f32.mrf.mxu0
        %1576 = vdwg.mxu0
        %1577 = vrot.lane.b32.xlu0 %v1013, 64
        %v1578 = vpop.permute.xlu0 %1577
        %v1580 = vsel %vm917, %v1474, 0
        %v1583 = vsel %vm1485, %v1578, 0
        %1585 = vmatprep.subr.bf16.mxu0 0
        %1586 = vmatpush1.bf16.msra.mxu0 0
        %1587 = vmatprep.subr.bf16.mxu0 0
        %1588 = vmatpush1.bf16.msra.mxu0 0
        %1589 = vmatprep.subr.bf16.mxu0 0
        %1590 = vmatpush1.bf16.msra.mxu0 0
        %1591 = vmatprep.subr.bf16.mxu0 0
        %1592 = vmatpush1.bf16.msra.mxu0 0
        %1593 = vmatprep.subr.bf16.mxu0 0
        %1594 = vmatpush1.bf16.msra.mxu0 0
        %1595 = vmatprep.subr.bf16.mxu0 0
        %1596 = vmatpush1.bf16.msra.mxu0 0
        %1597 = vmatprep.subr.bf16.mxu0 0
        %1598 = vmatpush1.bf16.msra.mxu0 0
        %1599 = vmatprep.subr.bf16.mxu0 0
        %1600 = vmatpush1.bf16.msra.mxu0 %v1583
        %1601 = vmatprep.subr.bf16.mxu0 0
        %1602 = vmatpush2.bf16.msra.mxu0 0
        %1603 = vmatprep.subr.bf16.mxu0 0
        %1604 = vmatpush2.bf16.msra.mxu0 0
        %1605 = vmatprep.subr.bf16.mxu0 0
        %1606 = vmatpush2.bf16.msra.mxu0 0
        %1607 = vmatprep.subr.bf16.mxu0 0
        %1608 = vmatpush2.bf16.msra.mxu0 0
        %1609 = vmatprep.subr.bf16.mxu0 0
        %1610 = vmatpush2.bf16.msra.mxu0 0
        %1611 = vmatprep.subr.bf16.mxu0 0
        %1612 = vmatpush2.bf16.msra.mxu0 0
        %1613 = vmatprep.subr.bf16.mxu0 0
        %1614 = vmatpush2.bf16.msra.mxu0 0
        %1615 = vmatprep.subr.bf16.mxu0 0
        %1616 = vmatpush2.bf16.msra.mxu0 0
        %1617 = vmatprep.mubr.bf16.mxu0 0
        %1618 = vmatmul.mubr.bf16.gmra.mxu0 %v1580
        %v1619 = vpop.f32.mrf.mxu0
        %v1620 = vadd.f32 0.0, %v1619
        %v1621 = vpop.f32.mrf.mxu0
        %v1622 = vpop.f32.mrf.mxu0
        %v1623 = vpop.f32.mrf.mxu0
        %1624 = vdwg.mxu0
        %1625 = vrot.lane.b32.xlu0 %v1063, 64
        %v1626 = vpop.permute.xlu0 %1625
        %v1628 = vsel %vm917, %v1475, 0
        %v1631 = vsel %vm1485, %v1626, 0
        %1633 = vmatprep.subr.bf16.mxu0 0
        %1634 = vmatpush1.bf16.msra.mxu0 0
        %1635 = vmatprep.subr.bf16.mxu0 0
        %1636 = vmatpush1.bf16.msra.mxu0 0
        %1637 = vmatprep.subr.bf16.mxu0 0
        %1638 = vmatpush1.bf16.msra.mxu0 0
        %1639 = vmatprep.subr.bf16.mxu0 0
        %1640 = vmatpush1.bf16.msra.mxu0 0
        %1641 = vmatprep.subr.bf16.mxu0 0
        %1642 = vmatpush1.bf16.msra.mxu0 0
        %1643 = vmatprep.subr.bf16.mxu0 0
        %1644 = vmatpush1.bf16.msra.mxu0 0
        %1645 = vmatprep.subr.bf16.mxu0 0
        %1646 = vmatpush1.bf16.msra.mxu0 0
        %1647 = vmatprep.subr.bf16.mxu0 0
        %1648 = vmatpush1.bf16.msra.mxu0 %v1631
        %1649 = vmatprep.subr.bf16.mxu0 0
        %1650 = vmatpush2.bf16.msra.mxu0 0
        %1651 = vmatprep.subr.bf16.mxu0 0
        %1652 = vmatpush2.bf16.msra.mxu0 0
        %1653 = vmatprep.subr.bf16.mxu0 0
        %1654 = vmatpush2.bf16.msra.mxu0 0
        %1655 = vmatprep.subr.bf16.mxu0 0
        %1656 = vmatpush2.bf16.msra.mxu0 0
        %1657 = vmatprep.subr.bf16.mxu0 0
        %1658 = vmatpush2.bf16.msra.mxu0 0
        %1659 = vmatprep.subr.bf16.mxu0 0
        %1660 = vmatpush2.bf16.msra.mxu0 0
        %1661 = vmatprep.subr.bf16.mxu0 0
        %1662 = vmatpush2.bf16.msra.mxu0 0
        %1663 = vmatprep.subr.bf16.mxu0 0
        %1664 = vmatpush2.bf16.msra.mxu0 0
        %1665 = vmatprep.mubr.bf16.mxu0 0
        %1666 = vmatmul.mubr.bf16.gmra.mxu0 %v1628
        %v1667 = vpop.f32.mrf.mxu0
        %v1668 = vadd.f32 0.0, %v1667
        %v1669 = vpop.f32.mrf.mxu0
        %v1670 = vpop.f32.mrf.mxu0
        %v1671 = vpop.f32.mrf.mxu0
        %1672 = vdwg.mxu0
        %1673 = vrot.lane.b32.xlu0 %v1113, 64
        %v1674 = vpop.permute.xlu0 %1673
        %v1676 = vsel %vm917, %v1476, 0
        %v1679 = vsel %vm1485, %v1674, 0
        %1681 = vmatprep.subr.bf16.mxu0 0
        %1682 = vmatpush1.bf16.msra.mxu0 0
        %1683 = vmatprep.subr.bf16.mxu0 0
        %1684 = vmatpush1.bf16.msra.mxu0 0
        %1685 = vmatprep.subr.bf16.mxu0 0
        %1686 = vmatpush1.bf16.msra.mxu0 0
        %1687 = vmatprep.subr.bf16.mxu0 0
        %1688 = vmatpush1.bf16.msra.mxu0 0
        %1689 = vmatprep.subr.bf16.mxu0 0
        %1690 = vmatpush1.bf16.msra.mxu0 0
        %1691 = vmatprep.subr.bf16.mxu0 0
        %1692 = vmatpush1.bf16.msra.mxu0 0
        %1693 = vmatprep.subr.bf16.mxu0 0
        %1694 = vmatpush1.bf16.msra.mxu0 0
        %1695 = vmatprep.subr.bf16.mxu0 0
        %1696 = vmatpush1.bf16.msra.mxu0 %v1679
        %1697 = vmatprep.subr.bf16.mxu0 0
        %1698 = vmatpush2.bf16.msra.mxu0 0
        %1699 = vmatprep.subr.bf16.mxu0 0
        %1700 = vmatpush2.bf16.msra.mxu0 0
        %1701 = vmatprep.subr.bf16.mxu0 0
        %1702 = vmatpush2.bf16.msra.mxu0 0
        %1703 = vmatprep.subr.bf16.mxu0 0
        %1704 = vmatpush2.bf16.msra.mxu0 0
        %1705 = vmatprep.subr.bf16.mxu0 0
        %1706 = vmatpush2.bf16.msra.mxu0 0
        %1707 = vmatprep.subr.bf16.mxu0 0
        %1708 = vmatpush2.bf16.msra.mxu0 0
        %1709 = vmatprep.subr.bf16.mxu0 0
        %1710 = vmatpush2.bf16.msra.mxu0 0
        %1711 = vmatprep.subr.bf16.mxu0 0
        %1712 = vmatpush2.bf16.msra.mxu0 0
        %1713 = vmatprep.mubr.bf16.mxu0 0
        %1714 = vmatmul.mubr.bf16.gmra.mxu0 %v1676
        %v1715 = vpop.f32.mrf.mxu0
        %v1716 = vadd.f32 0.0, %v1715
        %v1717 = vpop.f32.mrf.mxu0
        %v1718 = vpop.f32.mrf.mxu0
        %v1719 = vpop.f32.mrf.mxu0
        %1720 = vdwg.mxu0
        %1721 = vrot.lane.b32.xlu0 %v1163, 64
        %v1722 = vpop.permute.xlu0 %1721
        %v1724 = vsel %vm917, %v1477, 0
        %v1727 = vsel %vm1485, %v1722, 0
        %1729 = vmatprep.subr.bf16.mxu0 0
        %1730 = vmatpush1.bf16.msra.mxu0 0
        %1731 = vmatprep.subr.bf16.mxu0 0
        %1732 = vmatpush1.bf16.msra.mxu0 0
        %1733 = vmatprep.subr.bf16.mxu0 0
        %1734 = vmatpush1.bf16.msra.mxu0 0
        %1735 = vmatprep.subr.bf16.mxu0 0
        %1736 = vmatpush1.bf16.msra.mxu0 0
        %1737 = vmatprep.subr.bf16.mxu0 0
        %1738 = vmatpush1.bf16.msra.mxu0 0
        %1739 = vmatprep.subr.bf16.mxu0 0
        %1740 = vmatpush1.bf16.msra.mxu0 0
        %1741 = vmatprep.subr.bf16.mxu0 0
        %1742 = vmatpush1.bf16.msra.mxu0 0
        %1743 = vmatprep.subr.bf16.mxu0 0
        %1744 = vmatpush1.bf16.msra.mxu0 %v1727
        %1745 = vmatprep.subr.bf16.mxu0 0
        %1746 = vmatpush2.bf16.msra.mxu0 0
        %1747 = vmatprep.subr.bf16.mxu0 0
        %1748 = vmatpush2.bf16.msra.mxu0 0
        %1749 = vmatprep.subr.bf16.mxu0 0
        %1750 = vmatpush2.bf16.msra.mxu0 0
        %1751 = vmatprep.subr.bf16.mxu0 0
        %1752 = vmatpush2.bf16.msra.mxu0 0
        %1753 = vmatprep.subr.bf16.mxu0 0
        %1754 = vmatpush2.bf16.msra.mxu0 0
        %1755 = vmatprep.subr.bf16.mxu0 0
        %1756 = vmatpush2.bf16.msra.mxu0 0
        %1757 = vmatprep.subr.bf16.mxu0 0
        %1758 = vmatpush2.bf16.msra.mxu0 0
        %1759 = vmatprep.subr.bf16.mxu0 0
        %1760 = vmatpush2.bf16.msra.mxu0 0
        %1761 = vmatprep.mubr.bf16.mxu0 0
        %1762 = vmatmul.mubr.bf16.gmra.mxu0 %v1724
        %v1763 = vpop.f32.mrf.mxu0
        %v1764 = vadd.f32 0.0, %v1763
        %v1765 = vpop.f32.mrf.mxu0
        %v1766 = vpop.f32.mrf.mxu0
        %v1767 = vpop.f32.mrf.mxu0
        %1768 = vdwg.mxu0
        %1769 = vrot.lane.b32.xlu0 %v1213, 64
        %v1770 = vpop.permute.xlu0 %1769
        %v1772 = vsel %vm917, %v1478, 0
        %v1775 = vsel %vm1485, %v1770, 0
        %1777 = vmatprep.subr.bf16.mxu0 0
        %1778 = vmatpush1.bf16.msra.mxu0 0
        %1779 = vmatprep.subr.bf16.mxu0 0
        %1780 = vmatpush1.bf16.msra.mxu0 0
        %1781 = vmatprep.subr.bf16.mxu0 0
        %1782 = vmatpush1.bf16.msra.mxu0 0
        %1783 = vmatprep.subr.bf16.mxu0 0
        %1784 = vmatpush1.bf16.msra.mxu0 0
        %1785 = vmatprep.subr.bf16.mxu0 0
        %1786 = vmatpush1.bf16.msra.mxu0 0
        %1787 = vmatprep.subr.bf16.mxu0 0
        %1788 = vmatpush1.bf16.msra.mxu0 0
        %1789 = vmatprep.subr.bf16.mxu0 0
        %1790 = vmatpush1.bf16.msra.mxu0 0
        %1791 = vmatprep.subr.bf16.mxu0 0
        %1792 = vmatpush1.bf16.msra.mxu0 %v1775
        %1793 = vmatprep.subr.bf16.mxu0 0
        %1794 = vmatpush2.bf16.msra.mxu0 0
        %1795 = vmatprep.subr.bf16.mxu0 0
        %1796 = vmatpush2.bf16.msra.mxu0 0
        %1797 = vmatprep.subr.bf16.mxu0 0
        %1798 = vmatpush2.bf16.msra.mxu0 0
        %1799 = vmatprep.subr.bf16.mxu0 0
        %1800 = vmatpush2.bf16.msra.mxu0 0
        %1801 = vmatprep.subr.bf16.mxu0 0
        %1802 = vmatpush2.bf16.msra.mxu0 0
        %1803 = vmatprep.subr.bf16.mxu0 0
        %1804 = vmatpush2.bf16.msra.mxu0 0
        %1805 = vmatprep.subr.bf16.mxu0 0
        %1806 = vmatpush2.bf16.msra.mxu0 0
        %1807 = vmatprep.subr.bf16.mxu0 0
        %1808 = vmatpush2.bf16.msra.mxu0 0
        %1809 = vmatprep.mubr.bf16.mxu0 0
        %1810 = vmatmul.mubr.bf16.gmra.mxu0 %v1772
        %v1811 = vpop.f32.mrf.mxu0
        %v1812 = vadd.f32 0.0, %v1811
        %v1813 = vpop.f32.mrf.mxu0
        %v1814 = vpop.f32.mrf.mxu0
        %v1815 = vpop.f32.mrf.mxu0
        %1816 = vdwg.mxu0
        %1817 = vrot.lane.b32.xlu0 %v1263, 64
        %v1818 = vpop.permute.xlu0 %1817
        %v1820 = vsel %vm917, %v1479, 0
        %v1823 = vsel %vm1485, %v1818, 0
        %1825 = vmatprep.subr.bf16.mxu0 0
        %1826 = vmatpush1.bf16.msra.mxu0 0
        %1827 = vmatprep.subr.bf16.mxu0 0
        %1828 = vmatpush1.bf16.msra.mxu0 0
        %1829 = vmatprep.subr.bf16.mxu0 0
        %1830 = vmatpush1.bf16.msra.mxu0 0
        %1831 = vmatprep.subr.bf16.mxu0 0
        %1832 = vmatpush1.bf16.msra.mxu0 0
        %1833 = vmatprep.subr.bf16.mxu0 0
        %1834 = vmatpush1.bf16.msra.mxu0 0
        %1835 = vmatprep.subr.bf16.mxu0 0
        %1836 = vmatpush1.bf16.msra.mxu0 0
        %1837 = vmatprep.subr.bf16.mxu0 0
        %1838 = vmatpush1.bf16.msra.mxu0 0
        %1839 = vmatprep.subr.bf16.mxu0 0
        %1840 = vmatpush1.bf16.msra.mxu0 %v1823
        %1841 = vmatprep.subr.bf16.mxu0 0
        %1842 = vmatpush2.bf16.msra.mxu0 0
        %1843 = vmatprep.subr.bf16.mxu0 0
        %1844 = vmatpush2.bf16.msra.mxu0 0
        %1845 = vmatprep.subr.bf16.mxu0 0
        %1846 = vmatpush2.bf16.msra.mxu0 0
        %1847 = vmatprep.subr.bf16.mxu0 0
        %1848 = vmatpush2.bf16.msra.mxu0 0
        %1849 = vmatprep.subr.bf16.mxu0 0
        %1850 = vmatpush2.bf16.msra.mxu0 0
        %1851 = vmatprep.subr.bf16.mxu0 0
        %1852 = vmatpush2.bf16.msra.mxu0 0
        %1853 = vmatprep.subr.bf16.mxu0 0
        %1854 = vmatpush2.bf16.msra.mxu0 0
        %1855 = vmatprep.subr.bf16.mxu0 0
        %1856 = vmatpush2.bf16.msra.mxu0 0
        %1857 = vmatprep.mubr.bf16.mxu0 0
        %1858 = vmatmul.mubr.bf16.gmra.mxu0 %v1820
        %v1859 = vpop.f32.mrf.mxu0
        %v1860 = vadd.f32 0.0, %v1859
        %v1861 = vpop.f32.mrf.mxu0
        %v1862 = vpop.f32.mrf.mxu0
        %v1863 = vpop.f32.mrf.mxu0
        %1864 = vdwg.mxu0
        %1867 = vrot.lane.b32.xlu0 %v1620, 8
        %v1868 = vpop.permute.xlu0 %1867
        %1869 = vrot.lane.b32.xlu0 %v1668, 8
        %v1870 = vpop.permute.xlu0 %1869
        %1875 = vrot.lane.b32.xlu0 %v1716, 16
        %v1876 = vpop.permute.xlu0 %1875
        %1877 = vrot.lane.b32.xlu0 %v1764, 16
        %v1878 = vpop.permute.xlu0 %1877
        %1883 = vrot.lane.b32.xlu0 %v1812, 24
        %v1884 = vpop.permute.xlu0 %1883
        %1885 = vrot.lane.b32.xlu0 %v1860, 24
        %v1886 = vpop.permute.xlu0 %1885
        %v1889 = vsel %vm917, %v1524, %v1868
        %v1890 = vsel %vm917, %v1572, %v1870
        %vm1891 = vcmask 130048
        %v1892 = vsel %vm1891, %v1889, %v1876
        %v1893 = vsel %vm1891, %v1890, %v1878
        %vm1894 = vcmask 195584
        %v1895 = vsel %vm1894, %v1892, %v1884
        %v1896 = vsel %vm1894, %v1893, %v1886
        %v1897 = vpack.c.bf16 %v1896, %v1895
        %v1898 = vld [vmem:[%s720] sm:$0xf]
        %v1899 = vld [vmem:[%s720 + $0x4] sm:$0xf]
        %v1900 = vld [vmem:[%s720 + $0x8] sm:$0xf]
        %v1901 = vld [vmem:[%s720 + $0xc] sm:$0xf]
        %v1902 = vld [vmem:[%s723] sm:$0x1]
        %v1904 = vlaneseq
        %v1905 = vshrl.u32 %v1904, 7
        %v1906 = vsub.s32 0, %v1905
        %v1907 = vrot.slane %v1902, %v1906
        %v1913 = vunpack.c.l.b16 %v1898
        %v1914 = vunpack.c.l.b16 %v1899
        %v1915 = vunpack.c.l.b16 %v1900
        %v1916 = vunpack.c.l.b16 %v1901
        %v1917 = vpack.c.b16 %v1914, %v1913
        %v1918 = vpack.c.b16 %v1916, %v1915
        %v1922 = vsel %vm771, %v1897, 0
        %1924 = vmatprep.subr.bf16.mxu0 0
        %1925 = vmatpush1.bf16.msra.mxu0 0
        %1926 = vmatprep.subr.bf16.mxu0 0
        %1927 = vmatpush1.bf16.msra.mxu0 0
        %1928 = vmatprep.subr.bf16.mxu0 0
        %1929 = vmatpush1.bf16.msra.mxu0 0
        %1930 = vmatprep.subr.bf16.mxu0 0
        %1931 = vmatpush1.bf16.msra.mxu0 0
        %1932 = vmatprep.subr.bf16.mxu0 0
        %1933 = vmatpush1.bf16.msra.mxu0 0
        %1934 = vmatprep.subr.bf16.mxu0 0
        %1935 = vmatpush1.bf16.msra.mxu0 0
        %1936 = vmatprep.subr.bf16.mxu0 0
        %1937 = vmatpush1.bf16.msra.mxu0 %v1918
        %1938 = vmatprep.subr.bf16.mxu0 0
        %1939 = vmatpush1.bf16.msra.mxu0 %v1917
        %1940 = vmatprep.subr.bf16.mxu0 0
        %1941 = vmatpush2.bf16.msra.mxu0 0
        %1942 = vmatprep.subr.bf16.mxu0 0
        %1943 = vmatpush2.bf16.msra.mxu0 0
        %1944 = vmatprep.subr.bf16.mxu0 0
        %1945 = vmatpush2.bf16.msra.mxu0 0
        %1946 = vmatprep.subr.bf16.mxu0 0
        %1947 = vmatpush2.bf16.msra.mxu0 0
        %1948 = vmatprep.subr.bf16.mxu0 0
        %1949 = vmatpush2.bf16.msra.mxu0 0
        %1950 = vmatprep.subr.bf16.mxu0 0
        %1951 = vmatpush2.bf16.msra.mxu0 0
        %1952 = vmatprep.subr.bf16.mxu0 0
        %1953 = vmatpush2.bf16.msra.mxu0 0
        %1954 = vmatprep.subr.bf16.mxu0 0
        %1955 = vmatpush2.bf16.msra.mxu0 0
        %1956 = vmatprep.mubr.bf16.mxu0 0
        %1957 = vmatmul.mubr.bf16.gmra.mxu0 %v1922
        %v1958 = vpop.f32.mrf.mxu0
        %v1959 = vadd.f32 %v1907, %v1958
        %v1960 = vpop.f32.mrf.mxu0
        %v1961 = vpop.f32.mrf.mxu0
        %v1962 = vadd.f32 %v1907, %v1961
        %v1963 = vpop.f32.mrf.mxu0
        %1964 = vdwg.mxu0
        %v1965 = vadd.f32 %v767, %v1959
        %v1966 = vadd.f32 %v768, %v1962
        %v1967 = vld [vmem:[%s704] sm:$0x1]
        %v1968 = vld [vmem:[%s707] sm:$0x1]
        %v1969 = vsel %vm771, %v1965, 0.0
        %1970 = vadd.xlane.f32.xlu0 %v1969
        %v1971 = vpop.xlane.xlu0 %1970
        %v1972 = vsel %vm771, %v1966, 0.0
        %1973 = vadd.xlane.f32.xlu0 %v1972
        %v1974 = vpop.xlane.xlu0 %1973
        %v1975 = vmul.f32 %v1971, %v778
        %v1976 = vmul.f32 %v1974, %v778
        %v1977 = vsub.f32 %v1965, %v1975
        %v1978 = vsub.f32 %v1966, %v1976
        %v1979 = vmul.f32 %v1977, %v1977
        %v1980 = vmul.f32 %v1978, %v1978
        %v1981 = vsel %vm771, %v1979, 0.0
        %1982 = vadd.xlane.f32.xlu0 %v1981
        %v1983 = vpop.xlane.xlu0 %1982
        %v1984 = vsel %vm771, %v1980, 0.0
        %1985 = vadd.xlane.f32.xlu0 %v1984
        %v1986 = vpop.xlane.xlu0 %1985
        %v1987 = vmul.f32 %v1983, 0.032258064
        %v1988 = vmul.f32 %v1986, 0.032258064
        %v1989 = vrsqrt.pop %v1987
        %v1990 = vmul.f32 %v1987, %v1989
        %vm1991 = vcmp.eq.f32.partialorder %v1987, inf
        %v1992 = vsel %vm1991, %v1987, %v1990
        %vm1993 = vcmp.eq.f32.partialorder %v1987, 0.0
        %v1994 = vand.u32 %v1987, 2147483648
        %v1995 = vsel %vm1993, %v1994, %v1992
        %v1996 = vrsqrt.pop %v1988
        %v1997 = vmul.f32 %v1988, %v1996
        %vm1998 = vcmp.eq.f32.partialorder %v1988, inf
        %v1999 = vsel %vm1998, %v1988, %v1997
        %vm2000 = vcmp.eq.f32.partialorder %v1988, 0.0
        %v2001 = vand.u32 %v1988, 2147483648
        %v2002 = vsel %vm2000, %v2001, %v1999
        %v2004 = vlaneseq
        %v2005 = vshrl.u32 %v2004, 7
        %v2006 = vsub.s32 0, %v2005
        %v2007 = vrot.slane %v1967, %v2006
        %v2009 = vmul.f32 %v2007, %v1977
        %v2010 = vmul.f32 %v2007, %v1978
        %v2011 = vadd.f32 %v1995, 1e-06
        %v2012 = vadd.f32 %v2002, 1e-06
        %v2013 = vrcp.pop %v2011
        %v2014 = vmul.f32 %v2009, %v2013
        %v2015 = vrcp.pop %v2012
        %v2016 = vmul.f32 %v2010, %v2015
        %v2018 = vlaneseq
        %v2019 = vshrl.u32 %v2018, 7
        %v2020 = vsub.s32 0, %v2019
        %v2021 = vrot.slane %v1968, %v2020
        %v2023 = vadd.f32 %v2014, %v2021
        %v2024 = vadd.f32 %v2016, %v2021
        %v2025 = vpack.c.bf16 %v2024, %v2023
        %v2026 = vld [vmem:[%s728] sm:$0xff]
        %v2027 = vld [vmem:[%s728 + $0x8] sm:$0xff]
        %v2028 = vld [vmem:[%s728 + $0x10] sm:$0xff]
        %v2029 = vld [vmem:[%s728 + $0x18] sm:$0xff]
        %v2030 = vld [vmem:[%s728 + $0x20] sm:$0xff]
        %v2031 = vld [vmem:[%s728 + $0x28] sm:$0xff]
        %v2032 = vld [vmem:[%s728 + $0x30] sm:$0xff]
        %v2033 = vld [vmem:[%s728 + $0x38] sm:$0xff]
        %v2034 = vld [vmem:[%s728 + $0x40] sm:$0xff]
        %v2035 = vld [vmem:[%s728 + $0x48] sm:$0xff]
        %v2036 = vld [vmem:[%s728 + $0x50] sm:$0xff]
        %v2037 = vld [vmem:[%s728 + $0x58] sm:$0xff]
        %v2038 = vld [vmem:[%s728 + $0x60] sm:$0xff]
        %v2039 = vld [vmem:[%s728 + $0x68] sm:$0xff]
        %v2040 = vld [vmem:[%s728 + $0x70] sm:$0xff]
        %v2041 = vld [vmem:[%s728 + $0x78] sm:$0xff]
        %v2042 = vld [vmem:[%s728 + $0x80] sm:$0xff]
        %v2043 = vld [vmem:[%s728 + $0x88] sm:$0xff]
        %v2044 = vld [vmem:[%s728 + $0x90] sm:$0xff]
        %v2045 = vld [vmem:[%s728 + $0x98] sm:$0xff]
        %v2046 = vld [vmem:[%s728 + $0xa0] sm:$0xff]
        %v2047 = vld [vmem:[%s728 + $0xa8] sm:$0xff]
        %v2048 = vld [vmem:[%s728 + $0xb0] sm:$0xff]
        %v2049 = vld [vmem:[%s728 + $0xb8] sm:$0xff]
        %v2050 = vld [vmem:[%s728 + $0xc0] sm:$0xff]
        %v2051 = vld [vmem:[%s728 + $0xc8] sm:$0xff]
        %v2052 = vld [vmem:[%s728 + $0xd0] sm:$0xff]
        %v2053 = vld [vmem:[%s728 + $0xd8] sm:$0xff]
        %v2054 = vld [vmem:[%s728 + $0xe0] sm:$0xff]
        %v2055 = vld [vmem:[%s728 + $0xe8] sm:$0xff]
        %v2056 = vld [vmem:[%s728 + $0xf0] sm:$0xff]
        %v2057 = vld [vmem:[%s728 + $0xf8] sm:$0xff]
        %v2058 = vld [vmem:[%s732] sm:$0xff]
        %v2059 = vld [vmem:[%s732 + $0x8] sm:$0xff]
        %v2062 = vlaneseq
        %v2063 = vshrl.u32 %v2062, 7
        %v2064 = vsub.s32 0, %v2063
        %v2065 = vrot.slane %v2058, %v2064
        %v2066 = vlaneseq
        %v2067 = vshrl.u32 %v2066, 7
        %v2068 = vsub.s32 1, %v2067
        %v2069 = vrot.slane %v2058, %v2068
        %v2070 = vlaneseq
        %v2071 = vshrl.u32 %v2070, 7
        %v2072 = vsub.s32 2, %v2071
        %v2073 = vrot.slane %v2058, %v2072
        %v2074 = vlaneseq
        %v2075 = vshrl.u32 %v2074, 7
        %v2076 = vsub.s32 3, %v2075
        %v2077 = vrot.slane %v2058, %v2076
        %v2078 = vlaneseq
        %v2079 = vshrl.u32 %v2078, 7
        %v2080 = vsub.s32 4, %v2079
        %v2081 = vrot.slane %v2058, %v2080
        %v2082 = vlaneseq
        %v2083 = vshrl.u32 %v2082, 7
        %v2084 = vsub.s32 5, %v2083
        %v2085 = vrot.slane %v2058, %v2084
        %v2086 = vlaneseq
        %v2087 = vshrl.u32 %v2086, 7
        %v2088 = vsub.s32 6, %v2087
        %v2089 = vrot.slane %v2058, %v2088
        %v2090 = vlaneseq
        %v2091 = vshrl.u32 %v2090, 7
        %v2092 = vsub.s32 7, %v2091
        %v2093 = vrot.slane %v2058, %v2092
        %v2094 = vlaneseq
        %v2095 = vshrl.u32 %v2094, 7
        %v2096 = vsub.s32 0, %v2095
        %v2097 = vrot.slane %v2059, %v2096
        %v2098 = vlaneseq
        %v2099 = vshrl.u32 %v2098, 7
        %v2100 = vsub.s32 1, %v2099
        %v2101 = vrot.slane %v2059, %v2100
        %v2102 = vlaneseq
        %v2103 = vshrl.u32 %v2102, 7
        %v2104 = vsub.s32 2, %v2103
        %v2105 = vrot.slane %v2059, %v2104
        %v2106 = vlaneseq
        %v2107 = vshrl.u32 %v2106, 7
        %v2108 = vsub.s32 3, %v2107
        %v2109 = vrot.slane %v2059, %v2108
        %v2110 = vlaneseq
        %v2111 = vshrl.u32 %v2110, 7
        %v2112 = vsub.s32 4, %v2111
        %v2113 = vrot.slane %v2059, %v2112
        %v2114 = vlaneseq
        %v2115 = vshrl.u32 %v2114, 7
        %v2116 = vsub.s32 5, %v2115
        %v2117 = vrot.slane %v2059, %v2116
        %v2118 = vlaneseq
        %v2119 = vshrl.u32 %v2118, 7
        %v2120 = vsub.s32 6, %v2119
        %v2121 = vrot.slane %v2059, %v2120
        %v2122 = vlaneseq
        %v2123 = vshrl.u32 %v2122, 7
        %v2124 = vsub.s32 7, %v2123
        %v2125 = vrot.slane %v2059, %v2124
        %v2174 = vunpack.c.l.b16 %v2026
        %v2175 = vunpack.c.h.b16 %v2026
        %v2176 = vunpack.c.l.b16 %v2027
        %v2177 = vunpack.c.h.b16 %v2027
        %v2178 = vunpack.c.l.b16 %v2028
        %v2179 = vunpack.c.h.b16 %v2028
        %v2180 = vunpack.c.l.b16 %v2029
        %v2181 = vunpack.c.h.b16 %v2029
        %v2182 = vunpack.c.l.b16 %v2030
        %v2183 = vunpack.c.h.b16 %v2030
        %v2184 = vunpack.c.l.b16 %v2031
        %v2185 = vunpack.c.h.b16 %v2031
        %v2186 = vunpack.c.l.b16 %v2032
        %v2187 = vunpack.c.h.b16 %v2032
        %v2188 = vunpack.c.l.b16 %v2033
        %v2189 = vunpack.c.h.b16 %v2033
        %v2190 = vunpack.c.l.b16 %v2034
        %v2191 = vunpack.c.h.b16 %v2034
        %v2192 = vunpack.c.l.b16 %v2035
        %v2193 = vunpack.c.h.b16 %v2035
        %v2194 = vunpack.c.l.b16 %v2036
        %v2195 = vunpack.c.h.b16 %v2036
        %v2196 = vunpack.c.l.b16 %v2037
        %v2197 = vunpack.c.h.b16 %v2037
        %v2198 = vunpack.c.l.b16 %v2038
        %v2199 = vunpack.c.h.b16 %v2038
        %v2200 = vunpack.c.l.b16 %v2039
        %v2201 = vunpack.c.h.b16 %v2039
        %v2202 = vunpack.c.l.b16 %v2040
        %v2203 = vunpack.c.h.b16 %v2040
        %v2204 = vunpack.c.l.b16 %v2041
        %v2205 = vunpack.c.h.b16 %v2041
        %v2206 = vunpack.c.l.b16 %v2042
        %v2207 = vunpack.c.h.b16 %v2042
        %v2208 = vunpack.c.l.b16 %v2043
        %v2209 = vunpack.c.h.b16 %v2043
        %v2210 = vunpack.c.l.b16 %v2044
        %v2211 = vunpack.c.h.b16 %v2044
        %v2212 = vunpack.c.l.b16 %v2045
        %v2213 = vunpack.c.h.b16 %v2045
        %v2214 = vunpack.c.l.b16 %v2046
        %v2215 = vunpack.c.h.b16 %v2046
        %v2216 = vunpack.c.l.b16 %v2047
        %v2217 = vunpack.c.h.b16 %v2047
        %v2218 = vunpack.c.l.b16 %v2048
        %v2219 = vunpack.c.h.b16 %v2048
        %v2220 = vunpack.c.l.b16 %v2049
        %v2221 = vunpack.c.h.b16 %v2049
        %v2222 = vunpack.c.l.b16 %v2050
        %v2223 = vunpack.c.h.b16 %v2050
        %v2224 = vunpack.c.l.b16 %v2051
        %v2225 = vunpack.c.h.b16 %v2051
        %v2226 = vunpack.c.l.b16 %v2052
        %v2227 = vunpack.c.h.b16 %v2052
        %v2228 = vunpack.c.l.b16 %v2053
        %v2229 = vunpack.c.h.b16 %v2053
        %v2230 = vunpack.c.l.b16 %v2054
        %v2231 = vunpack.c.h.b16 %v2054
        %v2232 = vunpack.c.l.b16 %v2055
        %v2233 = vunpack.c.h.b16 %v2055
        %v2234 = vunpack.c.l.b16 %v2056
        %v2235 = vunpack.c.h.b16 %v2056
        %v2236 = vunpack.c.l.b16 %v2057
        %v2237 = vunpack.c.h.b16 %v2057
        %v2238 = vpack.c.b16 %v2190, %v2174
        %v2239 = vpack.c.b16 %v2191, %v2175
        %v2240 = vpack.c.b16 %v2192, %v2176
        %v2241 = vpack.c.b16 %v2193, %v2177
        %v2242 = vpack.c.b16 %v2194, %v2178
        %v2243 = vpack.c.b16 %v2195, %v2179
        %v2244 = vpack.c.b16 %v2196, %v2180
        %v2245 = vpack.c.b16 %v2197, %v2181
        %v2246 = vpack.c.b16 %v2198, %v2182
        %v2247 = vpack.c.b16 %v2199, %v2183
        %v2248 = vpack.c.b16 %v2200, %v2184
        %v2249 = vpack.c.b16 %v2201, %v2185
        %v2250 = vpack.c.b16 %v2202, %v2186
        %v2251 = vpack.c.b16 %v2203, %v2187
        %v2252 = vpack.c.b16 %v2204, %v2188
        %v2253 = vpack.c.b16 %v2205, %v2189
        %v2254 = vpack.c.b16 %v2222, %v2206
        %v2255 = vpack.c.b16 %v2223, %v2207
        %v2256 = vpack.c.b16 %v2224, %v2208
        %v2257 = vpack.c.b16 %v2225, %v2209
        %v2258 = vpack.c.b16 %v2226, %v2210
        %v2259 = vpack.c.b16 %v2227, %v2211
        %v2260 = vpack.c.b16 %v2228, %v2212
        %v2261 = vpack.c.b16 %v2229, %v2213
        %v2262 = vpack.c.b16 %v2230, %v2214
        %v2263 = vpack.c.b16 %v2231, %v2215
        %v2264 = vpack.c.b16 %v2232, %v2216
        %v2265 = vpack.c.b16 %v2233, %v2217
        %v2266 = vpack.c.b16 %v2234, %v2218
        %v2267 = vpack.c.b16 %v2235, %v2219
        %v2268 = vpack.c.b16 %v2236, %v2220
        %v2269 = vpack.c.b16 %v2237, %v2221
        %v2303 = vsel %vm771, %v2025, 0
        %2305 = vmatprep.subr.bf16.mxu0 0
        %2306 = vmatpush1.bf16.msra.mxu0 0
        %2307 = vmatprep.subr.bf16.mxu0 0
        %2308 = vmatpush1.bf16.msra.mxu0 0
        %2309 = vmatprep.subr.bf16.mxu0 0
        %2310 = vmatpush1.bf16.msra.mxu0 0
        %2311 = vmatprep.subr.bf16.mxu0 0
        %2312 = vmatpush1.bf16.msra.mxu0 0
        %2313 = vmatprep.subr.bf16.mxu0 0
        %2314 = vmatpush1.bf16.msra.mxu0 0
        %2315 = vmatprep.subr.bf16.mxu0 0
        %2316 = vmatpush1.bf16.msra.mxu0 0
        %2317 = vmatprep.subr.bf16.mxu0 %v2255
        %2318 = vmatpush1.bf16.msra.mxu0 %v2254
        %2319 = vmatprep.subr.bf16.mxu0 %v2239
        %2320 = vmatpush1.bf16.msra.mxu0 %v2238
        %2321 = vmatprep.subr.bf16.mxu0 0
        %2322 = vmatpush2.bf16.msra.mxu0 0
        %2323 = vmatprep.subr.bf16.mxu0 0
        %2324 = vmatpush2.bf16.msra.mxu0 0
        %2325 = vmatprep.subr.bf16.mxu0 0
        %2326 = vmatpush2.bf16.msra.mxu0 0
        %2327 = vmatprep.subr.bf16.mxu0 0
        %2328 = vmatpush2.bf16.msra.mxu0 0
        %2329 = vmatprep.subr.bf16.mxu0 0
        %2330 = vmatpush2.bf16.msra.mxu0 0
        %2331 = vmatprep.subr.bf16.mxu0 0
        %2332 = vmatpush2.bf16.msra.mxu0 0
        %2333 = vmatprep.subr.bf16.mxu0 0
        %2334 = vmatpush2.bf16.msra.mxu0 0
        %2335 = vmatprep.subr.bf16.mxu0 0
        %2336 = vmatpush2.bf16.msra.mxu0 0
        %2337 = vmatprep.mubr.bf16.mxu0 0
        %2338 = vmatmul.mubr.bf16.gmra.mxu0 %v2303
        %v2339 = vpop.f32.mrf.mxu0
        %v2340 = vadd.f32 %v2065, %v2339
        %v2341 = vpop.f32.mrf.mxu0
        %v2342 = vadd.f32 %v2069, %v2341
        %v2343 = vpop.f32.mrf.mxu0
        %v2344 = vadd.f32 %v2065, %v2343
        %v2345 = vpop.f32.mrf.mxu0
        %v2346 = vadd.f32 %v2069, %v2345
        %2347 = vdwg.mxu0
        %2348 = vmatprep.subr.bf16.mxu0 0
        %2349 = vmatpush1.bf16.msra.mxu0 0
        %2350 = vmatprep.subr.bf16.mxu0 0
        %2351 = vmatpush1.bf16.msra.mxu0 0
        %2352 = vmatprep.subr.bf16.mxu0 0
        %2353 = vmatpush1.bf16.msra.mxu0 0
        %2354 = vmatprep.subr.bf16.mxu0 0
        %2355 = vmatpush1.bf16.msra.mxu0 0
        %2356 = vmatprep.subr.bf16.mxu0 0
        %2357 = vmatpush1.bf16.msra.mxu0 0
        %2358 = vmatprep.subr.bf16.mxu0 0
        %2359 = vmatpush1.bf16.msra.mxu0 0
        %2360 = vmatprep.subr.bf16.mxu0 %v2257
        %2361 = vmatpush1.bf16.msra.mxu0 %v2256
        %2362 = vmatprep.subr.bf16.mxu0 %v2241
        %2363 = vmatpush1.bf16.msra.mxu0 %v2240
        %2364 = vmatprep.subr.bf16.mxu0 0
        %2365 = vmatpush2.bf16.msra.mxu0 0
        %2366 = vmatprep.subr.bf16.mxu0 0
        %2367 = vmatpush2.bf16.msra.mxu0 0
        %2368 = vmatprep.subr.bf16.mxu0 0
        %2369 = vmatpush2.bf16.msra.mxu0 0
        %2370 = vmatprep.subr.bf16.mxu0 0
        %2371 = vmatpush2.bf16.msra.mxu0 0
        %2372 = vmatprep.subr.bf16.mxu0 0
        %2373 = vmatpush2.bf16.msra.mxu0 0
        %2374 = vmatprep.subr.bf16.mxu0 0
        %2375 = vmatpush2.bf16.msra.mxu0 0
        %2376 = vmatprep.subr.bf16.mxu0 0
        %2377 = vmatpush2.bf16.msra.mxu0 0
        %2378 = vmatprep.subr.bf16.mxu0 0
        %2379 = vmatpush2.bf16.msra.mxu0 0
        %2380 = vmatprep.mubr.bf16.mxu0 0
        %2381 = vmatmul.mubr.bf16.gmra.mxu0 %v2303
        %v2382 = vpop.f32.mrf.mxu0
        %v2383 = vadd.f32 %v2073, %v2382
        %v2384 = vpop.f32.mrf.mxu0
        %v2385 = vadd.f32 %v2077, %v2384
        %v2386 = vpop.f32.mrf.mxu0
        %v2387 = vadd.f32 %v2073, %v2386
        %v2388 = vpop.f32.mrf.mxu0
        %v2389 = vadd.f32 %v2077, %v2388
        %2390 = vdwg.mxu0
        %2391 = vmatprep.subr.bf16.mxu0 0
        %2392 = vmatpush1.bf16.msra.mxu0 0
        %2393 = vmatprep.subr.bf16.mxu0 0
        %2394 = vmatpush1.bf16.msra.mxu0 0
        %2395 = vmatprep.subr.bf16.mxu0 0
        %2396 = vmatpush1.bf16.msra.mxu0 0
        %2397 = vmatprep.subr.bf16.mxu0 0
        %2398 = vmatpush1.bf16.msra.mxu0 0
        %2399 = vmatprep.subr.bf16.mxu0 0
        %2400 = vmatpush1.bf16.msra.mxu0 0
        %2401 = vmatprep.subr.bf16.mxu0 0
        %2402 = vmatpush1.bf16.msra.mxu0 0
        %2403 = vmatprep.subr.bf16.mxu0 %v2259
        %2404 = vmatpush1.bf16.msra.mxu0 %v2258
        %2405 = vmatprep.subr.bf16.mxu0 %v2243
        %2406 = vmatpush1.bf16.msra.mxu0 %v2242
        %2407 = vmatprep.subr.bf16.mxu0 0
        %2408 = vmatpush2.bf16.msra.mxu0 0
        %2409 = vmatprep.subr.bf16.mxu0 0
        %2410 = vmatpush2.bf16.msra.mxu0 0
        %2411 = vmatprep.subr.bf16.mxu0 0
        %2412 = vmatpush2.bf16.msra.mxu0 0
        %2413 = vmatprep.subr.bf16.mxu0 0
        %2414 = vmatpush2.bf16.msra.mxu0 0
        %2415 = vmatprep.subr.bf16.mxu0 0
        %2416 = vmatpush2.bf16.msra.mxu0 0
        %2417 = vmatprep.subr.bf16.mxu0 0
        %2418 = vmatpush2.bf16.msra.mxu0 0
        %2419 = vmatprep.subr.bf16.mxu0 0
        %2420 = vmatpush2.bf16.msra.mxu0 0
        %2421 = vmatprep.subr.bf16.mxu0 0
        %2422 = vmatpush2.bf16.msra.mxu0 0
        %2423 = vmatprep.mubr.bf16.mxu0 0
        %2424 = vmatmul.mubr.bf16.gmra.mxu0 %v2303
        %v2425 = vpop.f32.mrf.mxu0
        %v2426 = vadd.f32 %v2081, %v2425
        %v2427 = vpop.f32.mrf.mxu0
        %v2428 = vadd.f32 %v2085, %v2427
        %v2429 = vpop.f32.mrf.mxu0
        %v2430 = vadd.f32 %v2081, %v2429
        %v2431 = vpop.f32.mrf.mxu0
        %v2432 = vadd.f32 %v2085, %v2431
        %2433 = vdwg.mxu0
        %2434 = vmatprep.subr.bf16.mxu0 0
        %2435 = vmatpush1.bf16.msra.mxu0 0
        %2436 = vmatprep.subr.bf16.mxu0 0
        %2437 = vmatpush1.bf16.msra.mxu0 0
        %2438 = vmatprep.subr.bf16.mxu0 0
        %2439 = vmatpush1.bf16.msra.mxu0 0
        %2440 = vmatprep.subr.bf16.mxu0 0
        %2441 = vmatpush1.bf16.msra.mxu0 0
        %2442 = vmatprep.subr.bf16.mxu0 0
        %2443 = vmatpush1.bf16.msra.mxu0 0
        %2444 = vmatprep.subr.bf16.mxu0 0
        %2445 = vmatpush1.bf16.msra.mxu0 0
        %2446 = vmatprep.subr.bf16.mxu0 %v2261
        %2447 = vmatpush1.bf16.msra.mxu0 %v2260
        %2448 = vmatprep.subr.bf16.mxu0 %v2245
        %2449 = vmatpush1.bf16.msra.mxu0 %v2244
        %2450 = vmatprep.subr.bf16.mxu0 0
        %2451 = vmatpush2.bf16.msra.mxu0 0
        %2452 = vmatprep.subr.bf16.mxu0 0
        %2453 = vmatpush2.bf16.msra.mxu0 0
        %2454 = vmatprep.subr.bf16.mxu0 0
        %2455 = vmatpush2.bf16.msra.mxu0 0
        %2456 = vmatprep.subr.bf16.mxu0 0
        %2457 = vmatpush2.bf16.msra.mxu0 0
        %2458 = vmatprep.subr.bf16.mxu0 0
        %2459 = vmatpush2.bf16.msra.mxu0 0
        %2460 = vmatprep.subr.bf16.mxu0 0
        %2461 = vmatpush2.bf16.msra.mxu0 0
        %2462 = vmatprep.subr.bf16.mxu0 0
        %2463 = vmatpush2.bf16.msra.mxu0 0
        %2464 = vmatprep.subr.bf16.mxu0 0
        %2465 = vmatpush2.bf16.msra.mxu0 0
        %2466 = vmatprep.mubr.bf16.mxu0 0
        %2467 = vmatmul.mubr.bf16.gmra.mxu0 %v2303
        %v2468 = vpop.f32.mrf.mxu0
        %v2469 = vadd.f32 %v2089, %v2468
        %v2470 = vpop.f32.mrf.mxu0
        %v2471 = vadd.f32 %v2093, %v2470
        %v2472 = vpop.f32.mrf.mxu0
        %v2473 = vadd.f32 %v2089, %v2472
        %v2474 = vpop.f32.mrf.mxu0
        %v2475 = vadd.f32 %v2093, %v2474
        %2476 = vdwg.mxu0
        %2477 = vmatprep.subr.bf16.mxu0 0
        %2478 = vmatpush1.bf16.msra.mxu0 0
        %2479 = vmatprep.subr.bf16.mxu0 0
        %2480 = vmatpush1.bf16.msra.mxu0 0
        %2481 = vmatprep.subr.bf16.mxu0 0
        %2482 = vmatpush1.bf16.msra.mxu0 0
        %2483 = vmatprep.subr.bf16.mxu0 0
        %2484 = vmatpush1.bf16.msra.mxu0 0
        %2485 = vmatprep.subr.bf16.mxu0 0
        %2486 = vmatpush1.bf16.msra.mxu0 0
        %2487 = vmatprep.subr.bf16.mxu0 0
        %2488 = vmatpush1.bf16.msra.mxu0 0
        %2489 = vmatprep.subr.bf16.mxu0 %v2263
        %2490 = vmatpush1.bf16.msra.mxu0 %v2262
        %2491 = vmatprep.subr.bf16.mxu0 %v2247
        %2492 = vmatpush1.bf16.msra.mxu0 %v2246
        %2493 = vmatprep.subr.bf16.mxu0 0
        %2494 = vmatpush2.bf16.msra.mxu0 0
        %2495 = vmatprep.subr.bf16.mxu0 0
        %2496 = vmatpush2.bf16.msra.mxu0 0
        %2497 = vmatprep.subr.bf16.mxu0 0
        %2498 = vmatpush2.bf16.msra.mxu0 0
        %2499 = vmatprep.subr.bf16.mxu0 0
        %2500 = vmatpush2.bf16.msra.mxu0 0
        %2501 = vmatprep.subr.bf16.mxu0 0
        %2502 = vmatpush2.bf16.msra.mxu0 0
        %2503 = vmatprep.subr.bf16.mxu0 0
        %2504 = vmatpush2.bf16.msra.mxu0 0
        %2505 = vmatprep.subr.bf16.mxu0 0
        %2506 = vmatpush2.bf16.msra.mxu0 0
        %2507 = vmatprep.subr.bf16.mxu0 0
        %2508 = vmatpush2.bf16.msra.mxu0 0
        %2509 = vmatprep.mubr.bf16.mxu0 0
        %2510 = vmatmul.mubr.bf16.gmra.mxu0 %v2303
        %v2511 = vpop.f32.mrf.mxu0
        %v2512 = vadd.f32 %v2097, %v2511
        %v2513 = vpop.f32.mrf.mxu0
        %v2514 = vadd.f32 %v2101, %v2513
        %v2515 = vpop.f32.mrf.mxu0
        %v2516 = vadd.f32 %v2097, %v2515
        %v2517 = vpop.f32.mrf.mxu0
        %v2518 = vadd.f32 %v2101, %v2517
        %2519 = vdwg.mxu0
        %2520 = vmatprep.subr.bf16.mxu0 0
        %2521 = vmatpush1.bf16.msra.mxu0 0
        %2522 = vmatprep.subr.bf16.mxu0 0
        %2523 = vmatpush1.bf16.msra.mxu0 0
        %2524 = vmatprep.subr.bf16.mxu0 0
        %2525 = vmatpush1.bf16.msra.mxu0 0
        %2526 = vmatprep.subr.bf16.mxu0 0
        %2527 = vmatpush1.bf16.msra.mxu0 0
        %2528 = vmatprep.subr.bf16.mxu0 0
        %2529 = vmatpush1.bf16.msra.mxu0 0
        %2530 = vmatprep.subr.bf16.mxu0 0
        %2531 = vmatpush1.bf16.msra.mxu0 0
        %2532 = vmatprep.subr.bf16.mxu0 %v2265
        %2533 = vmatpush1.bf16.msra.mxu0 %v2264
        %2534 = vmatprep.subr.bf16.mxu0 %v2249
        %2535 = vmatpush1.bf16.msra.mxu0 %v2248
        %2536 = vmatprep.subr.bf16.mxu0 0
        %2537 = vmatpush2.bf16.msra.mxu0 0
        %2538 = vmatprep.subr.bf16.mxu0 0
        %2539 = vmatpush2.bf16.msra.mxu0 0
        %2540 = vmatprep.subr.bf16.mxu0 0
        %2541 = vmatpush2.bf16.msra.mxu0 0
        %2542 = vmatprep.subr.bf16.mxu0 0
        %2543 = vmatpush2.bf16.msra.mxu0 0
        %2544 = vmatprep.subr.bf16.mxu0 0
        %2545 = vmatpush2.bf16.msra.mxu0 0
        %2546 = vmatprep.subr.bf16.mxu0 0
        %2547 = vmatpush2.bf16.msra.mxu0 0
        %2548 = vmatprep.subr.bf16.mxu0 0
        %2549 = vmatpush2.bf16.msra.mxu0 0
        %2550 = vmatprep.subr.bf16.mxu0 0
        %2551 = vmatpush2.bf16.msra.mxu0 0
        %2552 = vmatprep.mubr.bf16.mxu0 0
        %2553 = vmatmul.mubr.bf16.gmra.mxu0 %v2303
        %v2554 = vpop.f32.mrf.mxu0
        %v2555 = vadd.f32 %v2105, %v2554
        %v2556 = vpop.f32.mrf.mxu0
        %v2557 = vadd.f32 %v2109, %v2556
        %v2558 = vpop.f32.mrf.mxu0
        %v2559 = vadd.f32 %v2105, %v2558
        %v2560 = vpop.f32.mrf.mxu0
        %v2561 = vadd.f32 %v2109, %v2560
        %2562 = vdwg.mxu0
        %2563 = vmatprep.subr.bf16.mxu0 0
        %2564 = vmatpush1.bf16.msra.mxu0 0
        %2565 = vmatprep.subr.bf16.mxu0 0
        %2566 = vmatpush1.bf16.msra.mxu0 0
        %2567 = vmatprep.subr.bf16.mxu0 0
        %2568 = vmatpush1.bf16.msra.mxu0 0
        %2569 = vmatprep.subr.bf16.mxu0 0
        %2570 = vmatpush1.bf16.msra.mxu0 0
        %2571 = vmatprep.subr.bf16.mxu0 0
        %2572 = vmatpush1.bf16.msra.mxu0 0
        %2573 = vmatprep.subr.bf16.mxu0 0
        %2574 = vmatpush1.bf16.msra.mxu0 0
        %2575 = vmatprep.subr.bf16.mxu0 %v2267
        %2576 = vmatpush1.bf16.msra.mxu0 %v2266
        %2577 = vmatprep.subr.bf16.mxu0 %v2251
        %2578 = vmatpush1.bf16.msra.mxu0 %v2250
        %2579 = vmatprep.subr.bf16.mxu0 0
        %2580 = vmatpush2.bf16.msra.mxu0 0
        %2581 = vmatprep.subr.bf16.mxu0 0
        %2582 = vmatpush2.bf16.msra.mxu0 0
        %2583 = vmatprep.subr.bf16.mxu0 0
        %2584 = vmatpush2.bf16.msra.mxu0 0
        %2585 = vmatprep.subr.bf16.mxu0 0
        %2586 = vmatpush2.bf16.msra.mxu0 0
        %2587 = vmatprep.subr.bf16.mxu0 0
        %2588 = vmatpush2.bf16.msra.mxu0 0
        %2589 = vmatprep.subr.bf16.mxu0 0
        %2590 = vmatpush2.bf16.msra.mxu0 0
        %2591 = vmatprep.subr.bf16.mxu0 0
        %2592 = vmatpush2.bf16.msra.mxu0 0
        %2593 = vmatprep.subr.bf16.mxu0 0
        %2594 = vmatpush2.bf16.msra.mxu0 0
        %2595 = vmatprep.mubr.bf16.mxu0 0
        %2596 = vmatmul.mubr.bf16.gmra.mxu0 %v2303
        %v2597 = vpop.f32.mrf.mxu0
        %v2598 = vadd.f32 %v2113, %v2597
        %v2599 = vpop.f32.mrf.mxu0
        %v2600 = vadd.f32 %v2117, %v2599
        %v2601 = vpop.f32.mrf.mxu0
        %v2602 = vadd.f32 %v2113, %v2601
        %v2603 = vpop.f32.mrf.mxu0
        %v2604 = vadd.f32 %v2117, %v2603
        %2605 = vdwg.mxu0
        %2606 = vmatprep.subr.bf16.mxu0 0
        %2607 = vmatpush1.bf16.msra.mxu0 0
        %2608 = vmatprep.subr.bf16.mxu0 0
        %2609 = vmatpush1.bf16.msra.mxu0 0
        %2610 = vmatprep.subr.bf16.mxu0 0
        %2611 = vmatpush1.bf16.msra.mxu0 0
        %2612 = vmatprep.subr.bf16.mxu0 0
        %2613 = vmatpush1.bf16.msra.mxu0 0
        %2614 = vmatprep.subr.bf16.mxu0 0
        %2615 = vmatpush1.bf16.msra.mxu0 0
        %2616 = vmatprep.subr.bf16.mxu0 0
        %2617 = vmatpush1.bf16.msra.mxu0 0
        %2618 = vmatprep.subr.bf16.mxu0 %v2269
        %2619 = vmatpush1.bf16.msra.mxu0 %v2268
        %2620 = vmatprep.subr.bf16.mxu0 %v2253
        %2621 = vmatpush1.bf16.msra.mxu0 %v2252
        %2622 = vmatprep.subr.bf16.mxu0 0
        %2623 = vmatpush2.bf16.msra.mxu0 0
        %2624 = vmatprep.subr.bf16.mxu0 0
        %2625 = vmatpush2.bf16.msra.mxu0 0
        %2626 = vmatprep.subr.bf16.mxu0 0
        %2627 = vmatpush2.bf16.msra.mxu0 0
        %2628 = vmatprep.subr.bf16.mxu0 0
        %2629 = vmatpush2.bf16.msra.mxu0 0
        %2630 = vmatprep.subr.bf16.mxu0 0
        %2631 = vmatpush2.bf16.msra.mxu0 0
        %2632 = vmatprep.subr.bf16.mxu0 0
        %2633 = vmatpush2.bf16.msra.mxu0 0
        %2634 = vmatprep.subr.bf16.mxu0 0
        %2635 = vmatpush2.bf16.msra.mxu0 0
        %2636 = vmatprep.subr.bf16.mxu0 0
        %2637 = vmatpush2.bf16.msra.mxu0 0
        %2638 = vmatprep.mubr.bf16.mxu0 0
        %2639 = vmatmul.mubr.bf16.gmra.mxu0 %v2303
        %v2640 = vpop.f32.mrf.mxu0
        %v2641 = vadd.f32 %v2121, %v2640
        %v2642 = vpop.f32.mrf.mxu0
        %v2643 = vadd.f32 %v2125, %v2642
        %v2644 = vpop.f32.mrf.mxu0
        %v2645 = vadd.f32 %v2121, %v2644
        %v2646 = vpop.f32.mrf.mxu0
        %v2647 = vadd.f32 %v2125, %v2646
        %2648 = vdwg.mxu0
        %v2649 = vmax.f32 %v2340, 0.0
        %v2650 = vmax.f32 %v2342, 0.0
        %v2651 = vmax.f32 %v2383, 0.0
        %v2652 = vmax.f32 %v2385, 0.0
        %v2653 = vmax.f32 %v2426, 0.0
        %v2654 = vmax.f32 %v2428, 0.0
        %v2655 = vmax.f32 %v2469, 0.0
        %v2656 = vmax.f32 %v2471, 0.0
        %v2657 = vmax.f32 %v2512, 0.0
        %v2658 = vmax.f32 %v2514, 0.0
        %v2659 = vmax.f32 %v2555, 0.0
        %v2660 = vmax.f32 %v2557, 0.0
        %v2661 = vmax.f32 %v2598, 0.0
        %v2662 = vmax.f32 %v2600, 0.0
        %v2663 = vmax.f32 %v2641, 0.0
        %v2664 = vmax.f32 %v2643, 0.0
        %v2665 = vmax.f32 %v2344, 0.0
        %v2666 = vmax.f32 %v2346, 0.0
        %v2667 = vmax.f32 %v2387, 0.0
        %v2668 = vmax.f32 %v2389, 0.0
        %v2669 = vmax.f32 %v2430, 0.0
        %v2670 = vmax.f32 %v2432, 0.0
        %v2671 = vmax.f32 %v2473, 0.0
        %v2672 = vmax.f32 %v2475, 0.0
        %v2673 = vmax.f32 %v2516, 0.0
        %v2674 = vmax.f32 %v2518, 0.0
        %v2675 = vmax.f32 %v2559, 0.0
        %v2676 = vmax.f32 %v2561, 0.0
        %v2677 = vmax.f32 %v2602, 0.0
        %v2678 = vmax.f32 %v2604, 0.0
        %v2679 = vmax.f32 %v2645, 0.0
        %v2680 = vmax.f32 %v2647, 0.0
        %v2681 = vpack.c.bf16 %v2665, %v2649
        %v2682 = vpack.c.bf16 %v2666, %v2650
        %v2683 = vpack.c.bf16 %v2667, %v2651
        %v2684 = vpack.c.bf16 %v2668, %v2652
        %v2685 = vpack.c.bf16 %v2669, %v2653
        %v2686 = vpack.c.bf16 %v2670, %v2654
        %v2687 = vpack.c.bf16 %v2671, %v2655
        %v2688 = vpack.c.bf16 %v2672, %v2656
        %v2689 = vpack.c.bf16 %v2673, %v2657
        %v2690 = vpack.c.bf16 %v2674, %v2658
        %v2691 = vpack.c.bf16 %v2675, %v2659
        %v2692 = vpack.c.bf16 %v2676, %v2660
        %v2693 = vpack.c.bf16 %v2677, %v2661
        %v2694 = vpack.c.bf16 %v2678, %v2662
        %v2695 = vpack.c.bf16 %v2679, %v2663
        %v2696 = vpack.c.bf16 %v2680, %v2664
        %v2697 = vld [vmem:[%s737] sm:$0xf]
        %v2698 = vld [vmem:[%s737 + $0x4] sm:$0xf]
        %v2699 = vld [vmem:[%s737 + $0x8] sm:$0xf]
        %v2700 = vld [vmem:[%s737 + $0xc] sm:$0xf]
        %v2701 = vld [vmem:[%s737 + $0x10] sm:$0xf]
        %v2702 = vld [vmem:[%s737 + $0x14] sm:$0xf]
        %v2703 = vld [vmem:[%s737 + $0x18] sm:$0xf]
        %v2704 = vld [vmem:[%s737 + $0x1c] sm:$0xf]
        %v2705 = vld [vmem:[%s737 + $0x20] sm:$0xf]
        %v2706 = vld [vmem:[%s737 + $0x24] sm:$0xf]
        %v2707 = vld [vmem:[%s737 + $0x28] sm:$0xf]
        %v2708 = vld [vmem:[%s737 + $0x2c] sm:$0xf]
        %v2709 = vld [vmem:[%s737 + $0x30] sm:$0xf]
        %v2710 = vld [vmem:[%s737 + $0x34] sm:$0xf]
        %v2711 = vld [vmem:[%s737 + $0x38] sm:$0xf]
        %v2712 = vld [vmem:[%s737 + $0x3c] sm:$0xf]
        %v2713 = vld [vmem:[%s737 + $0x40] sm:$0xf]
        %v2714 = vld [vmem:[%s737 + $0x44] sm:$0xf]
        %v2715 = vld [vmem:[%s737 + $0x48] sm:$0xf]
        %v2716 = vld [vmem:[%s737 + $0x4c] sm:$0xf]
        %v2717 = vld [vmem:[%s737 + $0x50] sm:$0xf]
        %v2718 = vld [vmem:[%s737 + $0x54] sm:$0xf]
        %v2719 = vld [vmem:[%s737 + $0x58] sm:$0xf]
        %v2720 = vld [vmem:[%s737 + $0x5c] sm:$0xf]
        %v2721 = vld [vmem:[%s737 + $0x60] sm:$0xf]
        %v2722 = vld [vmem:[%s737 + $0x64] sm:$0xf]
        %v2723 = vld [vmem:[%s737 + $0x68] sm:$0xf]
        %v2724 = vld [vmem:[%s737 + $0x6c] sm:$0xf]
        %v2725 = vld [vmem:[%s737 + $0x70] sm:$0xf]
        %v2726 = vld [vmem:[%s737 + $0x74] sm:$0xf]
        %v2727 = vld [vmem:[%s737 + $0x78] sm:$0xf]
        %v2728 = vld [vmem:[%s737 + $0x7c] sm:$0xf]
        %v2729 = vld [vmem:[%s737 + $0x80] sm:$0xf]
        %v2730 = vld [vmem:[%s737 + $0x84] sm:$0xf]
        %v2731 = vld [vmem:[%s737 + $0x88] sm:$0xf]
        %v2732 = vld [vmem:[%s737 + $0x8c] sm:$0xf]
        %v2733 = vld [vmem:[%s737 + $0x90] sm:$0xf]
        %v2734 = vld [vmem:[%s737 + $0x94] sm:$0xf]
        %v2735 = vld [vmem:[%s737 + $0x98] sm:$0xf]
        %v2736 = vld [vmem:[%s737 + $0x9c] sm:$0xf]
        %v2737 = vld [vmem:[%s737 + $0xa0] sm:$0xf]
        %v2738 = vld [vmem:[%s737 + $0xa4] sm:$0xf]
        %v2739 = vld [vmem:[%s737 + $0xa8] sm:$0xf]
        %v2740 = vld [vmem:[%s737 + $0xac] sm:$0xf]
        %v2741 = vld [vmem:[%s737 + $0xb0] sm:$0xf]
        %v2742 = vld [vmem:[%s737 + $0xb4] sm:$0xf]
        %v2743 = vld [vmem:[%s737 + $0xb8] sm:$0xf]
        %v2744 = vld [vmem:[%s737 + $0xbc] sm:$0xf]
        %v2745 = vld [vmem:[%s737 + $0xc0] sm:$0xf]
        %v2746 = vld [vmem:[%s737 + $0xc4] sm:$0xf]
        %v2747 = vld [vmem:[%s737 + $0xc8] sm:$0xf]
        %v2748 = vld [vmem:[%s737 + $0xcc] sm:$0xf]
        %v2749 = vld [vmem:[%s737 + $0xd0] sm:$0xf]
        %v2750 = vld [vmem:[%s737 + $0xd4] sm:$0xf]
        %v2751 = vld [vmem:[%s737 + $0xd8] sm:$0xf]
        %v2752 = vld [vmem:[%s737 + $0xdc] sm:$0xf]
        %v2753 = vld [vmem:[%s737 + $0xe0] sm:$0xf]
        %v2754 = vld [vmem:[%s737 + $0xe4] sm:$0xf]
        %v2755 = vld [vmem:[%s737 + $0xe8] sm:$0xf]
        %v2756 = vld [vmem:[%s737 + $0xec] sm:$0xf]
        %v2757 = vld [vmem:[%s737 + $0xf0] sm:$0xf]
        %v2758 = vld [vmem:[%s737 + $0xf4] sm:$0xf]
        %v2759 = vld [vmem:[%s737 + $0xf8] sm:$0xf]
        %v2760 = vld [vmem:[%s737 + $0xfc] sm:$0xf]
        %v2761 = vld [vmem:[%s737 + $0x100] sm:$0xf]
        %v2762 = vld [vmem:[%s737 + $0x104] sm:$0xf]
        %v2763 = vld [vmem:[%s737 + $0x108] sm:$0xf]
        %v2764 = vld [vmem:[%s737 + $0x10c] sm:$0xf]
        %v2765 = vld [vmem:[%s737 + $0x110] sm:$0xf]
        %v2766 = vld [vmem:[%s737 + $0x114] sm:$0xf]
        %v2767 = vld [vmem:[%s737 + $0x118] sm:$0xf]
        %v2768 = vld [vmem:[%s737 + $0x11c] sm:$0xf]
        %v2769 = vld [vmem:[%s737 + $0x120] sm:$0xf]
        %v2770 = vld [vmem:[%s737 + $0x124] sm:$0xf]
        %v2771 = vld [vmem:[%s737 + $0x128] sm:$0xf]
        %v2772 = vld [vmem:[%s737 + $0x12c] sm:$0xf]
        %v2773 = vld [vmem:[%s737 + $0x130] sm:$0xf]
        %v2774 = vld [vmem:[%s737 + $0x134] sm:$0xf]
        %v2775 = vld [vmem:[%s737 + $0x138] sm:$0xf]
        %v2776 = vld [vmem:[%s737 + $0x13c] sm:$0xf]
        %v2777 = vld [vmem:[%s737 + $0x140] sm:$0xf]
        %v2778 = vld [vmem:[%s737 + $0x144] sm:$0xf]
        %v2779 = vld [vmem:[%s737 + $0x148] sm:$0xf]
        %v2780 = vld [vmem:[%s737 + $0x14c] sm:$0xf]
        %v2781 = vld [vmem:[%s737 + $0x150] sm:$0xf]
        %v2782 = vld [vmem:[%s737 + $0x154] sm:$0xf]
        %v2783 = vld [vmem:[%s737 + $0x158] sm:$0xf]
        %v2784 = vld [vmem:[%s737 + $0x15c] sm:$0xf]
        %v2785 = vld [vmem:[%s737 + $0x160] sm:$0xf]
        %v2786 = vld [vmem:[%s737 + $0x164] sm:$0xf]
        %v2787 = vld [vmem:[%s737 + $0x168] sm:$0xf]
        %v2788 = vld [vmem:[%s737 + $0x16c] sm:$0xf]
        %v2789 = vld [vmem:[%s737 + $0x170] sm:$0xf]
        %v2790 = vld [vmem:[%s737 + $0x174] sm:$0xf]
        %v2791 = vld [vmem:[%s737 + $0x178] sm:$0xf]
        %v2792 = vld [vmem:[%s737 + $0x17c] sm:$0xf]
        %v2793 = vld [vmem:[%s737 + $0x180] sm:$0xf]
        %v2794 = vld [vmem:[%s737 + $0x184] sm:$0xf]
        %v2795 = vld [vmem:[%s737 + $0x188] sm:$0xf]
        %v2796 = vld [vmem:[%s737 + $0x18c] sm:$0xf]
        %v2797 = vld [vmem:[%s737 + $0x190] sm:$0xf]
        %v2798 = vld [vmem:[%s737 + $0x194] sm:$0xf]
        %v2799 = vld [vmem:[%s737 + $0x198] sm:$0xf]
        %v2800 = vld [vmem:[%s737 + $0x19c] sm:$0xf]
        %v2801 = vld [vmem:[%s737 + $0x1a0] sm:$0xf]
        %v2802 = vld [vmem:[%s737 + $0x1a4] sm:$0xf]
        %v2803 = vld [vmem:[%s737 + $0x1a8] sm:$0xf]
        %v2804 = vld [vmem:[%s737 + $0x1ac] sm:$0xf]
        %v2805 = vld [vmem:[%s737 + $0x1b0] sm:$0xf]
        %v2806 = vld [vmem:[%s737 + $0x1b4] sm:$0xf]
        %v2807 = vld [vmem:[%s737 + $0x1b8] sm:$0xf]
        %v2808 = vld [vmem:[%s737 + $0x1bc] sm:$0xf]
        %v2809 = vld [vmem:[%s737 + $0x1c0] sm:$0xf]
        %v2810 = vld [vmem:[%s737 + $0x1c4] sm:$0xf]
        %v2811 = vld [vmem:[%s737 + $0x1c8] sm:$0xf]
        %v2812 = vld [vmem:[%s737 + $0x1cc] sm:$0xf]
        %v2813 = vld [vmem:[%s737 + $0x1d0] sm:$0xf]
        %v2814 = vld [vmem:[%s737 + $0x1d4] sm:$0xf]
        %v2815 = vld [vmem:[%s737 + $0x1d8] sm:$0xf]
        %v2816 = vld [vmem:[%s737 + $0x1dc] sm:$0xf]
        %v2817 = vld [vmem:[%s737 + $0x1e0] sm:$0xf]
        %v2818 = vld [vmem:[%s737 + $0x1e4] sm:$0xf]
        %v2819 = vld [vmem:[%s737 + $0x1e8] sm:$0xf]
        %v2820 = vld [vmem:[%s737 + $0x1ec] sm:$0xf]
        %v2821 = vld [vmem:[%s737 + $0x1f0] sm:$0xf]
        %v2822 = vld [vmem:[%s737 + $0x1f4] sm:$0xf]
        %v2823 = vld [vmem:[%s737 + $0x1f8] sm:$0xf]
        %v2824 = vld [vmem:[%s737 + $0x1fc] sm:$0xf]
        %v2825 = vld [vmem:[%s737 + $0x200] sm:$0xf]
        %v2826 = vld [vmem:[%s737 + $0x204] sm:$0xf]
        %v2827 = vld [vmem:[%s737 + $0x208] sm:$0xf]
        %v2828 = vld [vmem:[%s737 + $0x20c] sm:$0xf]
        %v2829 = vld [vmem:[%s737 + $0x210] sm:$0xf]
        %v2830 = vld [vmem:[%s737 + $0x214] sm:$0xf]
        %v2831 = vld [vmem:[%s737 + $0x218] sm:$0xf]
        %v2832 = vld [vmem:[%s737 + $0x21c] sm:$0xf]
        %v2833 = vld [vmem:[%s737 + $0x220] sm:$0xf]
        %v2834 = vld [vmem:[%s737 + $0x224] sm:$0xf]
        %v2835 = vld [vmem:[%s737 + $0x228] sm:$0xf]
        %v2836 = vld [vmem:[%s737 + $0x22c] sm:$0xf]
        %v2837 = vld [vmem:[%s737 + $0x230] sm:$0xf]
        %v2838 = vld [vmem:[%s737 + $0x234] sm:$0xf]
        %v2839 = vld [vmem:[%s737 + $0x238] sm:$0xf]
        %v2840 = vld [vmem:[%s737 + $0x23c] sm:$0xf]
        %v2841 = vld [vmem:[%s737 + $0x240] sm:$0xf]
        %v2842 = vld [vmem:[%s737 + $0x244] sm:$0xf]
        %v2843 = vld [vmem:[%s737 + $0x248] sm:$0xf]
        %v2844 = vld [vmem:[%s737 + $0x24c] sm:$0xf]
        %v2845 = vld [vmem:[%s737 + $0x250] sm:$0xf]
        %v2846 = vld [vmem:[%s737 + $0x254] sm:$0xf]
        %v2847 = vld [vmem:[%s737 + $0x258] sm:$0xf]
        %v2848 = vld [vmem:[%s737 + $0x25c] sm:$0xf]
        %v2849 = vld [vmem:[%s737 + $0x260] sm:$0xf]
        %v2850 = vld [vmem:[%s737 + $0x264] sm:$0xf]
        %v2851 = vld [vmem:[%s737 + $0x268] sm:$0xf]
        %v2852 = vld [vmem:[%s737 + $0x26c] sm:$0xf]
        %v2853 = vld [vmem:[%s737 + $0x270] sm:$0xf]
        %v2854 = vld [vmem:[%s737 + $0x274] sm:$0xf]
        %v2855 = vld [vmem:[%s737 + $0x278] sm:$0xf]
        %v2856 = vld [vmem:[%s737 + $0x27c] sm:$0xf]
        %v2857 = vld [vmem:[%s737 + $0x280] sm:$0xf]
        %v2858 = vld [vmem:[%s737 + $0x284] sm:$0xf]
        %v2859 = vld [vmem:[%s737 + $0x288] sm:$0xf]
        %v2860 = vld [vmem:[%s737 + $0x28c] sm:$0xf]
        %v2861 = vld [vmem:[%s737 + $0x290] sm:$0xf]
        %v2862 = vld [vmem:[%s737 + $0x294] sm:$0xf]
        %v2863 = vld [vmem:[%s737 + $0x298] sm:$0xf]
        %v2864 = vld [vmem:[%s737 + $0x29c] sm:$0xf]
        %v2865 = vld [vmem:[%s737 + $0x2a0] sm:$0xf]
        %v2866 = vld [vmem:[%s737 + $0x2a4] sm:$0xf]
        %v2867 = vld [vmem:[%s737 + $0x2a8] sm:$0xf]
        %v2868 = vld [vmem:[%s737 + $0x2ac] sm:$0xf]
        %v2869 = vld [vmem:[%s737 + $0x2b0] sm:$0xf]
        %v2870 = vld [vmem:[%s737 + $0x2b4] sm:$0xf]
        %v2871 = vld [vmem:[%s737 + $0x2b8] sm:$0xf]
        %v2872 = vld [vmem:[%s737 + $0x2bc] sm:$0xf]
        %v2873 = vld [vmem:[%s737 + $0x2c0] sm:$0xf]
        %v2874 = vld [vmem:[%s737 + $0x2c4] sm:$0xf]
        %v2875 = vld [vmem:[%s737 + $0x2c8] sm:$0xf]
        %v2876 = vld [vmem:[%s737 + $0x2cc] sm:$0xf]
        %v2877 = vld [vmem:[%s737 + $0x2d0] sm:$0xf]
        %v2878 = vld [vmem:[%s737 + $0x2d4] sm:$0xf]
        %v2879 = vld [vmem:[%s737 + $0x2d8] sm:$0xf]
        %v2880 = vld [vmem:[%s737 + $0x2dc] sm:$0xf]
        %v2881 = vld [vmem:[%s737 + $0x2e0] sm:$0xf]
        %v2882 = vld [vmem:[%s737 + $0x2e4] sm:$0xf]
        %v2883 = vld [vmem:[%s737 + $0x2e8] sm:$0xf]
        %v2884 = vld [vmem:[%s737 + $0x2ec] sm:$0xf]
        %v2885 = vld [vmem:[%s737 + $0x2f0] sm:$0xf]
        %v2886 = vld [vmem:[%s737 + $0x2f4] sm:$0xf]
        %v2887 = vld [vmem:[%s737 + $0x2f8] sm:$0xf]
        %v2888 = vld [vmem:[%s737 + $0x2fc] sm:$0xf]
        %v2889 = vld [vmem:[%s737 + $0x300] sm:$0xf]
        %v2890 = vld [vmem:[%s737 + $0x304] sm:$0xf]
        %v2891 = vld [vmem:[%s737 + $0x308] sm:$0xf]
        %v2892 = vld [vmem:[%s737 + $0x30c] sm:$0xf]
        %v2893 = vld [vmem:[%s737 + $0x310] sm:$0xf]
        %v2894 = vld [vmem:[%s737 + $0x314] sm:$0xf]
        %v2895 = vld [vmem:[%s737 + $0x318] sm:$0xf]
        %v2896 = vld [vmem:[%s737 + $0x31c] sm:$0xf]
        %v2897 = vld [vmem:[%s737 + $0x320] sm:$0xf]
        %v2898 = vld [vmem:[%s737 + $0x324] sm:$0xf]
        %v2899 = vld [vmem:[%s737 + $0x328] sm:$0xf]
        %v2900 = vld [vmem:[%s737 + $0x32c] sm:$0xf]
        %v2901 = vld [vmem:[%s737 + $0x330] sm:$0xf]
        %v2902 = vld [vmem:[%s737 + $0x334] sm:$0xf]
        %v2903 = vld [vmem:[%s737 + $0x338] sm:$0xf]
        %v2904 = vld [vmem:[%s737 + $0x33c] sm:$0xf]
        %v2905 = vld [vmem:[%s737 + $0x340] sm:$0xf]
        %v2906 = vld [vmem:[%s737 + $0x344] sm:$0xf]
        %v2907 = vld [vmem:[%s737 + $0x348] sm:$0xf]
        %v2908 = vld [vmem:[%s737 + $0x34c] sm:$0xf]
        %v2909 = vld [vmem:[%s737 + $0x350] sm:$0xf]
        %v2910 = vld [vmem:[%s737 + $0x354] sm:$0xf]
        %v2911 = vld [vmem:[%s737 + $0x358] sm:$0xf]
        %v2912 = vld [vmem:[%s737 + $0x35c] sm:$0xf]
        %v2913 = vld [vmem:[%s737 + $0x360] sm:$0xf]
        %v2914 = vld [vmem:[%s737 + $0x364] sm:$0xf]
        %v2915 = vld [vmem:[%s737 + $0x368] sm:$0xf]
        %v2916 = vld [vmem:[%s737 + $0x36c] sm:$0xf]
        %v2917 = vld [vmem:[%s737 + $0x370] sm:$0xf]
        %v2918 = vld [vmem:[%s737 + $0x374] sm:$0xf]
        %v2919 = vld [vmem:[%s737 + $0x378] sm:$0xf]
        %v2920 = vld [vmem:[%s737 + $0x37c] sm:$0xf]
        %v2921 = vld [vmem:[%s737 + $0x380] sm:$0xf]
        %v2922 = vld [vmem:[%s737 + $0x384] sm:$0xf]
        %v2923 = vld [vmem:[%s737 + $0x388] sm:$0xf]
        %v2924 = vld [vmem:[%s737 + $0x38c] sm:$0xf]
        %v2925 = vld [vmem:[%s737 + $0x390] sm:$0xf]
        %v2926 = vld [vmem:[%s737 + $0x394] sm:$0xf]
        %v2927 = vld [vmem:[%s737 + $0x398] sm:$0xf]
        %v2928 = vld [vmem:[%s737 + $0x39c] sm:$0xf]
        %v2929 = vld [vmem:[%s737 + $0x3a0] sm:$0xf]
        %v2930 = vld [vmem:[%s737 + $0x3a4] sm:$0xf]
        %v2931 = vld [vmem:[%s737 + $0x3a8] sm:$0xf]
        %v2932 = vld [vmem:[%s737 + $0x3ac] sm:$0xf]
        %v2933 = vld [vmem:[%s737 + $0x3b0] sm:$0xf]
        %v2934 = vld [vmem:[%s737 + $0x3b4] sm:$0xf]
        %v2935 = vld [vmem:[%s737 + $0x3b8] sm:$0xf]
        %v2936 = vld [vmem:[%s737 + $0x3bc] sm:$0xf]
        %v2937 = vld [vmem:[%s737 + $0x3c0] sm:$0xf]
        %v2938 = vld [vmem:[%s737 + $0x3c4] sm:$0xf]
        %v2939 = vld [vmem:[%s737 + $0x3c8] sm:$0xf]
        %v2940 = vld [vmem:[%s737 + $0x3cc] sm:$0xf]
        %v2941 = vld [vmem:[%s737 + $0x3d0] sm:$0xf]
        %v2942 = vld [vmem:[%s737 + $0x3d4] sm:$0xf]
        %v2943 = vld [vmem:[%s737 + $0x3d8] sm:$0xf]
        %v2944 = vld [vmem:[%s737 + $0x3dc] sm:$0xf]
        %v2945 = vld [vmem:[%s737 + $0x3e0] sm:$0xf]
        %v2946 = vld [vmem:[%s737 + $0x3e4] sm:$0xf]
        %v2947 = vld [vmem:[%s737 + $0x3e8] sm:$0xf]
        %v2948 = vld [vmem:[%s737 + $0x3ec] sm:$0xf]
        %v2949 = vld [vmem:[%s737 + $0x3f0] sm:$0xf]
        %v2950 = vld [vmem:[%s737 + $0x3f4] sm:$0xf]
        %v2951 = vld [vmem:[%s737 + $0x3f8] sm:$0xf]
        %v2952 = vld [vmem:[%s737 + $0x3fc] sm:$0xf]
        %v2953 = vld [vmem:[%s740] sm:$0x1]
        %v2955 = vlaneseq
        %v2956 = vshrl.u32 %v2955, 7
        %v2957 = vsub.s32 0, %v2956
        %v2958 = vrot.slane %v2953, %v2957
        %v3216 = vunpack.c.l.b16 %v2697
        %v3217 = vunpack.c.l.b16 %v2698
        %v3218 = vunpack.c.l.b16 %v2699
        %v3219 = vunpack.c.l.b16 %v2700
        %v3220 = vunpack.c.l.b16 %v2701
        %v3221 = vunpack.c.l.b16 %v2702
        %v3222 = vunpack.c.l.b16 %v2703
        %v3223 = vunpack.c.l.b16 %v2704
        %v3224 = vunpack.c.l.b16 %v2705
        %v3225 = vunpack.c.l.b16 %v2706
        %v3226 = vunpack.c.l.b16 %v2707
        %v3227 = vunpack.c.l.b16 %v2708
        %v3228 = vunpack.c.l.b16 %v2709
        %v3229 = vunpack.c.l.b16 %v2710
        %v3230 = vunpack.c.l.b16 %v2711
        %v3231 = vunpack.c.l.b16 %v2712
        %v3232 = vunpack.c.l.b16 %v2713
        %v3233 = vunpack.c.l.b16 %v2714
        %v3234 = vunpack.c.l.b16 %v2715
        %v3235 = vunpack.c.l.b16 %v2716
        %v3236 = vunpack.c.l.b16 %v2717
        %v3237 = vunpack.c.l.b16 %v2718
        %v3238 = vunpack.c.l.b16 %v2719
        %v3239 = vunpack.c.l.b16 %v2720
        %v3240 = vunpack.c.l.b16 %v2721
        %v3241 = vunpack.c.l.b16 %v2722
        %v3242 = vunpack.c.l.b16 %v2723
        %v3243 = vunpack.c.l.b16 %v2724
        %v3244 = vunpack.c.l.b16 %v2725
        %v3245 = vunpack.c.l.b16 %v2726
        %v3246 = vunpack.c.l.b16 %v2727
        %v3247 = vunpack.c.l.b16 %v2728
        %v3248 = vunpack.c.l.b16 %v2729
        %v3249 = vunpack.c.l.b16 %v2730
        %v3250 = vunpack.c.l.b16 %v2731
        %v3251 = vunpack.c.l.b16 %v2732
        %v3252 = vunpack.c.l.b16 %v2733
        %v3253 = vunpack.c.l.b16 %v2734
        %v3254 = vunpack.c.l.b16 %v2735
        %v3255 = vunpack.c.l.b16 %v2736
        %v3256 = vunpack.c.l.b16 %v2737
        %v3257 = vunpack.c.l.b16 %v2738
        %v3258 = vunpack.c.l.b16 %v2739
        %v3259 = vunpack.c.l.b16 %v2740
        %v3260 = vunpack.c.l.b16 %v2741
        %v3261 = vunpack.c.l.b16 %v2742
        %v3262 = vunpack.c.l.b16 %v2743
        %v3263 = vunpack.c.l.b16 %v2744
        %v3264 = vunpack.c.l.b16 %v2745
        %v3265 = vunpack.c.l.b16 %v2746
        %v3266 = vunpack.c.l.b16 %v2747
        %v3267 = vunpack.c.l.b16 %v2748
        %v3268 = vunpack.c.l.b16 %v2749
        %v3269 = vunpack.c.l.b16 %v2750
        %v3270 = vunpack.c.l.b16 %v2751
        %v3271 = vunpack.c.l.b16 %v2752
        %v3272 = vunpack.c.l.b16 %v2753
        %v3273 = vunpack.c.l.b16 %v2754
        %v3274 = vunpack.c.l.b16 %v2755
        %v3275 = vunpack.c.l.b16 %v2756
        %v3276 = vunpack.c.l.b16 %v2757
        %v3277 = vunpack.c.l.b16 %v2758
        %v3278 = vunpack.c.l.b16 %v2759
        %v3279 = vunpack.c.l.b16 %v2760
        %v3280 = vunpack.c.l.b16 %v2761
        %v3281 = vunpack.c.l.b16 %v2762
        %v3282 = vunpack.c.l.b16 %v2763
        %v3283 = vunpack.c.l.b16 %v2764
        %v3284 = vunpack.c.l.b16 %v2765
        %v3285 = vunpack.c.l.b16 %v2766
        %v3286 = vunpack.c.l.b16 %v2767
        %v3287 = vunpack.c.l.b16 %v2768
        %v3288 = vunpack.c.l.b16 %v2769
        %v3289 = vunpack.c.l.b16 %v2770
        %v3290 = vunpack.c.l.b16 %v2771
        %v3291 = vunpack.c.l.b16 %v2772
        %v3292 = vunpack.c.l.b16 %v2773
        %v3293 = vunpack.c.l.b16 %v2774
        %v3294 = vunpack.c.l.b16 %v2775
        %v3295 = vunpack.c.l.b16 %v2776
        %v3296 = vunpack.c.l.b16 %v2777
        %v3297 = vunpack.c.l.b16 %v2778
        %v3298 = vunpack.c.l.b16 %v2779
        %v3299 = vunpack.c.l.b16 %v2780
        %v3300 = vunpack.c.l.b16 %v2781
        %v3301 = vunpack.c.l.b16 %v2782
        %v3302 = vunpack.c.l.b16 %v2783
        %v3303 = vunpack.c.l.b16 %v2784
        %v3304 = vunpack.c.l.b16 %v2785
        %v3305 = vunpack.c.l.b16 %v2786
        %v3306 = vunpack.c.l.b16 %v2787
        %v3307 = vunpack.c.l.b16 %v2788
        %v3308 = vunpack.c.l.b16 %v2789
        %v3309 = vunpack.c.l.b16 %v2790
        %v3310 = vunpack.c.l.b16 %v2791
        %v3311 = vunpack.c.l.b16 %v2792
        %v3312 = vunpack.c.l.b16 %v2793
        %v3313 = vunpack.c.l.b16 %v2794
        %v3314 = vunpack.c.l.b16 %v2795
        %v3315 = vunpack.c.l.b16 %v2796
        %v3316 = vunpack.c.l.b16 %v2797
        %v3317 = vunpack.c.l.b16 %v2798
        %v3318 = vunpack.c.l.b16 %v2799
        %v3319 = vunpack.c.l.b16 %v2800
        %v3320 = vunpack.c.l.b16 %v2801
        %v3321 = vunpack.c.l.b16 %v2802
        %v3322 = vunpack.c.l.b16 %v2803
        %v3323 = vunpack.c.l.b16 %v2804
        %v3324 = vunpack.c.l.b16 %v2805
        %v3325 = vunpack.c.l.b16 %v2806
        %v3326 = vunpack.c.l.b16 %v2807
        %v3327 = vunpack.c.l.b16 %v2808
        %v3328 = vunpack.c.l.b16 %v2809
        %v3329 = vunpack.c.l.b16 %v2810
        %v3330 = vunpack.c.l.b16 %v2811
        %v3331 = vunpack.c.l.b16 %v2812
        %v3332 = vunpack.c.l.b16 %v2813
        %v3333 = vunpack.c.l.b16 %v2814
        %v3334 = vunpack.c.l.b16 %v2815
        %v3335 = vunpack.c.l.b16 %v2816
        %v3336 = vunpack.c.l.b16 %v2817
        %v3337 = vunpack.c.l.b16 %v2818
        %v3338 = vunpack.c.l.b16 %v2819
        %v3339 = vunpack.c.l.b16 %v2820
        %v3340 = vunpack.c.l.b16 %v2821
        %v3341 = vunpack.c.l.b16 %v2822
        %v3342 = vunpack.c.l.b16 %v2823
        %v3343 = vunpack.c.l.b16 %v2824
        %v3344 = vunpack.c.l.b16 %v2825
        %v3345 = vunpack.c.l.b16 %v2826
        %v3346 = vunpack.c.l.b16 %v2827
        %v3347 = vunpack.c.l.b16 %v2828
        %v3348 = vunpack.c.l.b16 %v2829
        %v3349 = vunpack.c.l.b16 %v2830
        %v3350 = vunpack.c.l.b16 %v2831
        %v3351 = vunpack.c.l.b16 %v2832
        %v3352 = vunpack.c.l.b16 %v2833
        %v3353 = vunpack.c.l.b16 %v2834
        %v3354 = vunpack.c.l.b16 %v2835
        %v3355 = vunpack.c.l.b16 %v2836
        %v3356 = vunpack.c.l.b16 %v2837
        %v3357 = vunpack.c.l.b16 %v2838
        %v3358 = vunpack.c.l.b16 %v2839
        %v3359 = vunpack.c.l.b16 %v2840
        %v3360 = vunpack.c.l.b16 %v2841
        %v3361 = vunpack.c.l.b16 %v2842
        %v3362 = vunpack.c.l.b16 %v2843
        %v3363 = vunpack.c.l.b16 %v2844
        %v3364 = vunpack.c.l.b16 %v2845
        %v3365 = vunpack.c.l.b16 %v2846
        %v3366 = vunpack.c.l.b16 %v2847
        %v3367 = vunpack.c.l.b16 %v2848
        %v3368 = vunpack.c.l.b16 %v2849
        %v3369 = vunpack.c.l.b16 %v2850
        %v3370 = vunpack.c.l.b16 %v2851
        %v3371 = vunpack.c.l.b16 %v2852
        %v3372 = vunpack.c.l.b16 %v2853
        %v3373 = vunpack.c.l.b16 %v2854
        %v3374 = vunpack.c.l.b16 %v2855
        %v3375 = vunpack.c.l.b16 %v2856
        %v3376 = vunpack.c.l.b16 %v2857
        %v3377 = vunpack.c.l.b16 %v2858
        %v3378 = vunpack.c.l.b16 %v2859
        %v3379 = vunpack.c.l.b16 %v2860
        %v3380 = vunpack.c.l.b16 %v2861
        %v3381 = vunpack.c.l.b16 %v2862
        %v3382 = vunpack.c.l.b16 %v2863
        %v3383 = vunpack.c.l.b16 %v2864
        %v3384 = vunpack.c.l.b16 %v2865
        %v3385 = vunpack.c.l.b16 %v2866
        %v3386 = vunpack.c.l.b16 %v2867
        %v3387 = vunpack.c.l.b16 %v2868
        %v3388 = vunpack.c.l.b16 %v2869
        %v3389 = vunpack.c.l.b16 %v2870
        %v3390 = vunpack.c.l.b16 %v2871
        %v3391 = vunpack.c.l.b16 %v2872
        %v3392 = vunpack.c.l.b16 %v2873
        %v3393 = vunpack.c.l.b16 %v2874
        %v3394 = vunpack.c.l.b16 %v2875
        %v3395 = vunpack.c.l.b16 %v2876
        %v3396 = vunpack.c.l.b16 %v2877
        %v3397 = vunpack.c.l.b16 %v2878
        %v3398 = vunpack.c.l.b16 %v2879
        %v3399 = vunpack.c.l.b16 %v2880
        %v3400 = vunpack.c.l.b16 %v2881
        %v3401 = vunpack.c.l.b16 %v2882
        %v3402 = vunpack.c.l.b16 %v2883
        %v3403 = vunpack.c.l.b16 %v2884
        %v3404 = vunpack.c.l.b16 %v2885
        %v3405 = vunpack.c.l.b16 %v2886
        %v3406 = vunpack.c.l.b16 %v2887
        %v3407 = vunpack.c.l.b16 %v2888
        %v3408 = vunpack.c.l.b16 %v2889
        %v3409 = vunpack.c.l.b16 %v2890
        %v3410 = vunpack.c.l.b16 %v2891
        %v3411 = vunpack.c.l.b16 %v2892
        %v3412 = vunpack.c.l.b16 %v2893
        %v3413 = vunpack.c.l.b16 %v2894
        %v3414 = vunpack.c.l.b16 %v2895
        %v3415 = vunpack.c.l.b16 %v2896
        %v3416 = vunpack.c.l.b16 %v2897
        %v3417 = vunpack.c.l.b16 %v2898
        %v3418 = vunpack.c.l.b16 %v2899
        %v3419 = vunpack.c.l.b16 %v2900
        %v3420 = vunpack.c.l.b16 %v2901
        %v3421 = vunpack.c.l.b16 %v2902
        %v3422 = vunpack.c.l.b16 %v2903
        %v3423 = vunpack.c.l.b16 %v2904
        %v3424 = vunpack.c.l.b16 %v2905
        %v3425 = vunpack.c.l.b16 %v2906
        %v3426 = vunpack.c.l.b16 %v2907
        %v3427 = vunpack.c.l.b16 %v2908
        %v3428 = vunpack.c.l.b16 %v2909
        %v3429 = vunpack.c.l.b16 %v2910
        %v3430 = vunpack.c.l.b16 %v2911
        %v3431 = vunpack.c.l.b16 %v2912
        %v3432 = vunpack.c.l.b16 %v2913
        %v3433 = vunpack.c.l.b16 %v2914
        %v3434 = vunpack.c.l.b16 %v2915
        %v3435 = vunpack.c.l.b16 %v2916
        %v3436 = vunpack.c.l.b16 %v2917
        %v3437 = vunpack.c.l.b16 %v2918
        %v3438 = vunpack.c.l.b16 %v2919
        %v3439 = vunpack.c.l.b16 %v2920
        %v3440 = vunpack.c.l.b16 %v2921
        %v3441 = vunpack.c.l.b16 %v2922
        %v3442 = vunpack.c.l.b16 %v2923
        %v3443 = vunpack.c.l.b16 %v2924
        %v3444 = vunpack.c.l.b16 %v2925
        %v3445 = vunpack.c.l.b16 %v2926
        %v3446 = vunpack.c.l.b16 %v2927
        %v3447 = vunpack.c.l.b16 %v2928
        %v3448 = vunpack.c.l.b16 %v2929
        %v3449 = vunpack.c.l.b16 %v2930
        %v3450 = vunpack.c.l.b16 %v2931
        %v3451 = vunpack.c.l.b16 %v2932
        %v3452 = vunpack.c.l.b16 %v2933
        %v3453 = vunpack.c.l.b16 %v2934
        %v3454 = vunpack.c.l.b16 %v2935
        %v3455 = vunpack.c.l.b16 %v2936
        %v3456 = vunpack.c.l.b16 %v2937
        %v3457 = vunpack.c.l.b16 %v2938
        %v3458 = vunpack.c.l.b16 %v2939
        %v3459 = vunpack.c.l.b16 %v2940
        %v3460 = vunpack.c.l.b16 %v2941
        %v3461 = vunpack.c.l.b16 %v2942
        %v3462 = vunpack.c.l.b16 %v2943
        %v3463 = vunpack.c.l.b16 %v2944
        %v3464 = vunpack.c.l.b16 %v2945
        %v3465 = vunpack.c.l.b16 %v2946
        %v3466 = vunpack.c.l.b16 %v2947
        %v3467 = vunpack.c.l.b16 %v2948
        %v3468 = vunpack.c.l.b16 %v2949
        %v3469 = vunpack.c.l.b16 %v2950
        %v3470 = vunpack.c.l.b16 %v2951
        %v3471 = vunpack.c.l.b16 %v2952
        %v3472 = vpack.c.b16 %v3217, %v3216
        %v3473 = vpack.c.b16 %v3219, %v3218
        %v3474 = vpack.c.b16 %v3221, %v3220
        %v3475 = vpack.c.b16 %v3223, %v3222
        %v3476 = vpack.c.b16 %v3225, %v3224
        %v3477 = vpack.c.b16 %v3227, %v3226
        %v3478 = vpack.c.b16 %v3229, %v3228
        %v3479 = vpack.c.b16 %v3231, %v3230
        %v3480 = vpack.c.b16 %v3233, %v3232
        %v3481 = vpack.c.b16 %v3235, %v3234
        %v3482 = vpack.c.b16 %v3237, %v3236
        %v3483 = vpack.c.b16 %v3239, %v3238
        %v3484 = vpack.c.b16 %v3241, %v3240
        %v3485 = vpack.c.b16 %v3243, %v3242
        %v3486 = vpack.c.b16 %v3245, %v3244
        %v3487 = vpack.c.b16 %v3247, %v3246
        %v3488 = vpack.c.b16 %v3249, %v3248
        %v3489 = vpack.c.b16 %v3251, %v3250
        %v3490 = vpack.c.b16 %v3253, %v3252
        %v3491 = vpack.c.b16 %v3255, %v3254
        %v3492 = vpack.c.b16 %v3257, %v3256
        %v3493 = vpack.c.b16 %v3259, %v3258
        %v3494 = vpack.c.b16 %v3261, %v3260
        %v3495 = vpack.c.b16 %v3263, %v3262
        %v3496 = vpack.c.b16 %v3265, %v3264
        %v3497 = vpack.c.b16 %v3267, %v3266
        %v3498 = vpack.c.b16 %v3269, %v3268
        %v3499 = vpack.c.b16 %v3271, %v3270
        %v3500 = vpack.c.b16 %v3273, %v3272
        %v3501 = vpack.c.b16 %v3275, %v3274
        %v3502 = vpack.c.b16 %v3277, %v3276
        %v3503 = vpack.c.b16 %v3279, %v3278
        %v3504 = vpack.c.b16 %v3281, %v3280
        %v3505 = vpack.c.b16 %v3283, %v3282
        %v3506 = vpack.c.b16 %v3285, %v3284
        %v3507 = vpack.c.b16 %v3287, %v3286
        %v3508 = vpack.c.b16 %v3289, %v3288
        %v3509 = vpack.c.b16 %v3291, %v3290
        %v3510 = vpack.c.b16 %v3293, %v3292
        %v3511 = vpack.c.b16 %v3295, %v3294
        %v3512 = vpack.c.b16 %v3297, %v3296
        %v3513 = vpack.c.b16 %v3299, %v3298
        %v3514 = vpack.c.b16 %v3301, %v3300
        %v3515 = vpack.c.b16 %v3303, %v3302
        %v3516 = vpack.c.b16 %v3305, %v3304
        %v3517 = vpack.c.b16 %v3307, %v3306
        %v3518 = vpack.c.b16 %v3309, %v3308
        %v3519 = vpack.c.b16 %v3311, %v3310
        %v3520 = vpack.c.b16 %v3313, %v3312
        %v3521 = vpack.c.b16 %v3315, %v3314
        %v3522 = vpack.c.b16 %v3317, %v3316
        %v3523 = vpack.c.b16 %v3319, %v3318
        %v3524 = vpack.c.b16 %v3321, %v3320
        %v3525 = vpack.c.b16 %v3323, %v3322
        %v3526 = vpack.c.b16 %v3325, %v3324
        %v3527 = vpack.c.b16 %v3327, %v3326
        %v3528 = vpack.c.b16 %v3329, %v3328
        %v3529 = vpack.c.b16 %v3331, %v3330
        %v3530 = vpack.c.b16 %v3333, %v3332
        %v3531 = vpack.c.b16 %v3335, %v3334
        %v3532 = vpack.c.b16 %v3337, %v3336
        %v3533 = vpack.c.b16 %v3339, %v3338
        %v3534 = vpack.c.b16 %v3341, %v3340
        %v3535 = vpack.c.b16 %v3343, %v3342
        %v3536 = vpack.c.b16 %v3345, %v3344
        %v3537 = vpack.c.b16 %v3347, %v3346
        %v3538 = vpack.c.b16 %v3349, %v3348
        %v3539 = vpack.c.b16 %v3351, %v3350
        %v3540 = vpack.c.b16 %v3353, %v3352
        %v3541 = vpack.c.b16 %v3355, %v3354
        %v3542 = vpack.c.b16 %v3357, %v3356
        %v3543 = vpack.c.b16 %v3359, %v3358
        %v3544 = vpack.c.b16 %v3361, %v3360
        %v3545 = vpack.c.b16 %v3363, %v3362
        %v3546 = vpack.c.b16 %v3365, %v3364
        %v3547 = vpack.c.b16 %v3367, %v3366
        %v3548 = vpack.c.b16 %v3369, %v3368
        %v3549 = vpack.c.b16 %v3371, %v3370
        %v3550 = vpack.c.b16 %v3373, %v3372
        %v3551 = vpack.c.b16 %v3375, %v3374
        %v3552 = vpack.c.b16 %v3377, %v3376
        %v3553 = vpack.c.b16 %v3379, %v3378
        %v3554 = vpack.c.b16 %v3381, %v3380
        %v3555 = vpack.c.b16 %v3383, %v3382
        %v3556 = vpack.c.b16 %v3385, %v3384
        %v3557 = vpack.c.b16 %v3387, %v3386
        %v3558 = vpack.c.b16 %v3389, %v3388
        %v3559 = vpack.c.b16 %v3391, %v3390
        %v3560 = vpack.c.b16 %v3393, %v3392
        %v3561 = vpack.c.b16 %v3395, %v3394
        %v3562 = vpack.c.b16 %v3397, %v3396
        %v3563 = vpack.c.b16 %v3399, %v3398
        %v3564 = vpack.c.b16 %v3401, %v3400
        %v3565 = vpack.c.b16 %v3403, %v3402
        %v3566 = vpack.c.b16 %v3405, %v3404
        %v3567 = vpack.c.b16 %v3407, %v3406
        %v3568 = vpack.c.b16 %v3409, %v3408
        %v3569 = vpack.c.b16 %v3411, %v3410
        %v3570 = vpack.c.b16 %v3413, %v3412
        %v3571 = vpack.c.b16 %v3415, %v3414
        %v3572 = vpack.c.b16 %v3417, %v3416
        %v3573 = vpack.c.b16 %v3419, %v3418
        %v3574 = vpack.c.b16 %v3421, %v3420
        %v3575 = vpack.c.b16 %v3423, %v3422
        %v3576 = vpack.c.b16 %v3425, %v3424
        %v3577 = vpack.c.b16 %v3427, %v3426
        %v3578 = vpack.c.b16 %v3429, %v3428
        %v3579 = vpack.c.b16 %v3431, %v3430
        %v3580 = vpack.c.b16 %v3433, %v3432
        %v3581 = vpack.c.b16 %v3435, %v3434
        %v3582 = vpack.c.b16 %v3437, %v3436
        %v3583 = vpack.c.b16 %v3439, %v3438
        %v3584 = vpack.c.b16 %v3441, %v3440
        %v3585 = vpack.c.b16 %v3443, %v3442
        %v3586 = vpack.c.b16 %v3445, %v3444
        %v3587 = vpack.c.b16 %v3447, %v3446
        %v3588 = vpack.c.b16 %v3449, %v3448
        %v3589 = vpack.c.b16 %v3451, %v3450
        %v3590 = vpack.c.b16 %v3453, %v3452
        %v3591 = vpack.c.b16 %v3455, %v3454
        %v3592 = vpack.c.b16 %v3457, %v3456
        %v3593 = vpack.c.b16 %v3459, %v3458
        %v3594 = vpack.c.b16 %v3461, %v3460
        %v3595 = vpack.c.b16 %v3463, %v3462
        %v3596 = vpack.c.b16 %v3465, %v3464
        %v3597 = vpack.c.b16 %v3467, %v3466
        %v3598 = vpack.c.b16 %v3469, %v3468
        %v3599 = vpack.c.b16 %v3471, %v3470
        %3728 = vmatprep.subr.bf16.mxu0 0
        %3729 = vmatpush1.bf16.msra.mxu0 %v3479
        %3730 = vmatprep.subr.bf16.mxu0 0
        %3731 = vmatpush1.bf16.msra.mxu0 %v3478
        %3732 = vmatprep.subr.bf16.mxu0 0
        %3733 = vmatpush1.bf16.msra.mxu0 %v3477
        %3734 = vmatprep.subr.bf16.mxu0 0
        %3735 = vmatpush1.bf16.msra.mxu0 %v3476
        %3736 = vmatprep.subr.bf16.mxu0 0
        %3737 = vmatpush1.bf16.msra.mxu0 %v3475
        %3738 = vmatprep.subr.bf16.mxu0 0
        %3739 = vmatpush1.bf16.msra.mxu0 %v3474
        %3740 = vmatprep.subr.bf16.mxu0 0
        %3741 = vmatpush1.bf16.msra.mxu0 %v3473
        %3742 = vmatprep.subr.bf16.mxu0 0
        %3743 = vmatpush1.bf16.msra.mxu0 %v3472
        %3744 = vmatprep.subr.bf16.mxu0 0
        %3745 = vmatpush2.bf16.msra.mxu0 %v3487
        %3746 = vmatprep.subr.bf16.mxu0 0
        %3747 = vmatpush2.bf16.msra.mxu0 %v3486
        %3748 = vmatprep.subr.bf16.mxu0 0
        %3749 = vmatpush2.bf16.msra.mxu0 %v3485
        %3750 = vmatprep.subr.bf16.mxu0 0
        %3751 = vmatpush2.bf16.msra.mxu0 %v3484
        %3752 = vmatprep.subr.bf16.mxu0 0
        %3753 = vmatpush2.bf16.msra.mxu0 %v3483
        %3754 = vmatprep.subr.bf16.mxu0 0
        %3755 = vmatpush2.bf16.msra.mxu0 %v3482
        %3756 = vmatprep.subr.bf16.mxu0 0
        %3757 = vmatpush2.bf16.msra.mxu0 %v3481
        %3758 = vmatprep.subr.bf16.mxu0 0
        %3759 = vmatpush2.bf16.msra.mxu0 %v3480
        %3760 = vmatprep.mubr.bf16.mxu0 %v2682
        %3761 = vmatmul.mubr.bf16.gmra.mxu0 %v2681
        %v3762 = vpop.f32.mrf.mxu0
        %v3763 = vadd.f32 %v2958, %v3762
        %v3764 = vpop.f32.mrf.mxu0
        %v3765 = vpop.f32.mrf.mxu0
        %v3766 = vadd.f32 %v2958, %v3765
        %v3767 = vpop.f32.mrf.mxu0
        %3768 = vdwg.mxu0
        %3769 = vmatprep.subr.bf16.mxu0 0
        %3770 = vmatpush1.bf16.msra.mxu0 %v3495
        %3771 = vmatprep.subr.bf16.mxu0 0
        %3772 = vmatpush1.bf16.msra.mxu0 %v3494
        %3773 = vmatprep.subr.bf16.mxu0 0
        %3774 = vmatpush1.bf16.msra.mxu0 %v3493
        %3775 = vmatprep.subr.bf16.mxu0 0
        %3776 = vmatpush1.bf16.msra.mxu0 %v3492
        %3777 = vmatprep.subr.bf16.mxu0 0
        %3778 = vmatpush1.bf16.msra.mxu0 %v3491
        %3779 = vmatprep.subr.bf16.mxu0 0
        %3780 = vmatpush1.bf16.msra.mxu0 %v3490
        %3781 = vmatprep.subr.bf16.mxu0 0
        %3782 = vmatpush1.bf16.msra.mxu0 %v3489
        %3783 = vmatprep.subr.bf16.mxu0 0
        %3784 = vmatpush1.bf16.msra.mxu0 %v3488
        %3785 = vmatprep.subr.bf16.mxu0 0
        %3786 = vmatpush2.bf16.msra.mxu0 %v3503
        %3787 = vmatprep.subr.bf16.mxu0 0
        %3788 = vmatpush2.bf16.msra.mxu0 %v3502
        %3789 = vmatprep.subr.bf16.mxu0 0
        %3790 = vmatpush2.bf16.msra.mxu0 %v3501
        %3791 = vmatprep.subr.bf16.mxu0 0
        %3792 = vmatpush2.bf16.msra.mxu0 %v3500
        %3793 = vmatprep.subr.bf16.mxu0 0
        %3794 = vmatpush2.bf16.msra.mxu0 %v3499
        %3795 = vmatprep.subr.bf16.mxu0 0
        %3796 = vmatpush2.bf16.msra.mxu0 %v3498
        %3797 = vmatprep.subr.bf16.mxu0 0
        %3798 = vmatpush2.bf16.msra.mxu0 %v3497
        %3799 = vmatprep.subr.bf16.mxu0 0
        %3800 = vmatpush2.bf16.msra.mxu0 %v3496
        %3801 = vmatprep.mubr.bf16.mxu0 %v2684
        %3802 = vmatmul.mubr.bf16.gmra.mxu0 %v2683
        %v3803 = vpop.f32.mrf.mxu0
        %v3804 = vadd.f32 %v3763, %v3803
        %v3805 = vpop.f32.mrf.mxu0
        %v3806 = vpop.f32.mrf.mxu0
        %v3807 = vadd.f32 %v3766, %v3806
        %v3808 = vpop.f32.mrf.mxu0
        %3809 = vdwg.mxu0
        %3810 = vmatprep.subr.bf16.mxu0 0
        %3811 = vmatpush1.bf16.msra.mxu0 %v3511
        %3812 = vmatprep.subr.bf16.mxu0 0
        %3813 = vmatpush1.bf16.msra.mxu0 %v3510
        %3814 = vmatprep.subr.bf16.mxu0 0
        %3815 = vmatpush1.bf16.msra.mxu0 %v3509
        %3816 = vmatprep.subr.bf16.mxu0 0
        %3817 = vmatpush1.bf16.msra.mxu0 %v3508
        %3818 = vmatprep.subr.bf16.mxu0 0
        %3819 = vmatpush1.bf16.msra.mxu0 %v3507
        %3820 = vmatprep.subr.bf16.mxu0 0
        %3821 = vmatpush1.bf16.msra.mxu0 %v3506
        %3822 = vmatprep.subr.bf16.mxu0 0
        %3823 = vmatpush1.bf16.msra.mxu0 %v3505
        %3824 = vmatprep.subr.bf16.mxu0 0
        %3825 = vmatpush1.bf16.msra.mxu0 %v3504
        %3826 = vmatprep.subr.bf16.mxu0 0
        %3827 = vmatpush2.bf16.msra.mxu0 %v3519
        %3828 = vmatprep.subr.bf16.mxu0 0
        %3829 = vmatpush2.bf16.msra.mxu0 %v3518
        %3830 = vmatprep.subr.bf16.mxu0 0
        %3831 = vmatpush2.bf16.msra.mxu0 %v3517
        %3832 = vmatprep.subr.bf16.mxu0 0
        %3833 = vmatpush2.bf16.msra.mxu0 %v3516
        %3834 = vmatprep.subr.bf16.mxu0 0
        %3835 = vmatpush2.bf16.msra.mxu0 %v3515
        %3836 = vmatprep.subr.bf16.mxu0 0
        %3837 = vmatpush2.bf16.msra.mxu0 %v3514
        %3838 = vmatprep.subr.bf16.mxu0 0
        %3839 = vmatpush2.bf16.msra.mxu0 %v3513
        %3840 = vmatprep.subr.bf16.mxu0 0
        %3841 = vmatpush2.bf16.msra.mxu0 %v3512
        %3842 = vmatprep.mubr.bf16.mxu0 %v2686
        %3843 = vmatmul.mubr.bf16.gmra.mxu0 %v2685
        %v3844 = vpop.f32.mrf.mxu0
        %v3845 = vadd.f32 %v3804, %v3844
        %v3846 = vpop.f32.mrf.mxu0
        %v3847 = vpop.f32.mrf.mxu0
        %v3848 = vadd.f32 %v3807, %v3847
        %v3849 = vpop.f32.mrf.mxu0
        %3850 = vdwg.mxu0
        %3851 = vmatprep.subr.bf16.mxu0 0
        %3852 = vmatpush1.bf16.msra.mxu0 %v3527
        %3853 = vmatprep.subr.bf16.mxu0 0
        %3854 = vmatpush1.bf16.msra.mxu0 %v3526
        %3855 = vmatprep.subr.bf16.mxu0 0
        %3856 = vmatpush1.bf16.msra.mxu0 %v3525
        %3857 = vmatprep.subr.bf16.mxu0 0
        %3858 = vmatpush1.bf16.msra.mxu0 %v3524
        %3859 = vmatprep.subr.bf16.mxu0 0
        %3860 = vmatpush1.bf16.msra.mxu0 %v3523
        %3861 = vmatprep.subr.bf16.mxu0 0
        %3862 = vmatpush1.bf16.msra.mxu0 %v3522
        %3863 = vmatprep.subr.bf16.mxu0 0
        %3864 = vmatpush1.bf16.msra.mxu0 %v3521
        %3865 = vmatprep.subr.bf16.mxu0 0
        %3866 = vmatpush1.bf16.msra.mxu0 %v3520
        %3867 = vmatprep.subr.bf16.mxu0 0
        %3868 = vmatpush2.bf16.msra.mxu0 %v3535
        %3869 = vmatprep.subr.bf16.mxu0 0
        %3870 = vmatpush2.bf16.msra.mxu0 %v3534
        %3871 = vmatprep.subr.bf16.mxu0 0
        %3872 = vmatpush2.bf16.msra.mxu0 %v3533
        %3873 = vmatprep.subr.bf16.mxu0 0
        %3874 = vmatpush2.bf16.msra.mxu0 %v3532
        %3875 = vmatprep.subr.bf16.mxu0 0
        %3876 = vmatpush2.bf16.msra.mxu0 %v3531
        %3877 = vmatprep.subr.bf16.mxu0 0
        %3878 = vmatpush2.bf16.msra.mxu0 %v3530
        %3879 = vmatprep.subr.bf16.mxu0 0
        %3880 = vmatpush2.bf16.msra.mxu0 %v3529
        %3881 = vmatprep.subr.bf16.mxu0 0
        %3882 = vmatpush2.bf16.msra.mxu0 %v3528
        %3883 = vmatprep.mubr.bf16.mxu0 %v2688
        %3884 = vmatmul.mubr.bf16.gmra.mxu0 %v2687
        %v3885 = vpop.f32.mrf.mxu0
        %v3886 = vadd.f32 %v3845, %v3885
        %v3887 = vpop.f32.mrf.mxu0
        %v3888 = vpop.f32.mrf.mxu0
        %v3889 = vadd.f32 %v3848, %v3888
        %v3890 = vpop.f32.mrf.mxu0
        %3891 = vdwg.mxu0
        %3892 = vmatprep.subr.bf16.mxu0 0
        %3893 = vmatpush1.bf16.msra.mxu0 %v3543
        %3894 = vmatprep.subr.bf16.mxu0 0
        %3895 = vmatpush1.bf16.msra.mxu0 %v3542
        %3896 = vmatprep.subr.bf16.mxu0 0
        %3897 = vmatpush1.bf16.msra.mxu0 %v3541
        %3898 = vmatprep.subr.bf16.mxu0 0
        %3899 = vmatpush1.bf16.msra.mxu0 %v3540
        %3900 = vmatprep.subr.bf16.mxu0 0
        %3901 = vmatpush1.bf16.msra.mxu0 %v3539
        %3902 = vmatprep.subr.bf16.mxu0 0
        %3903 = vmatpush1.bf16.msra.mxu0 %v3538
        %3904 = vmatprep.subr.bf16.mxu0 0
        %3905 = vmatpush1.bf16.msra.mxu0 %v3537
        %3906 = vmatprep.subr.bf16.mxu0 0
        %3907 = vmatpush1.bf16.msra.mxu0 %v3536
        %3908 = vmatprep.subr.bf16.mxu0 0
        %3909 = vmatpush2.bf16.msra.mxu0 %v3551
        %3910 = vmatprep.subr.bf16.mxu0 0
        %3911 = vmatpush2.bf16.msra.mxu0 %v3550
        %3912 = vmatprep.subr.bf16.mxu0 0
        %3913 = vmatpush2.bf16.msra.mxu0 %v3549
        %3914 = vmatprep.subr.bf16.mxu0 0
        %3915 = vmatpush2.bf16.msra.mxu0 %v3548
        %3916 = vmatprep.subr.bf16.mxu0 0
        %3917 = vmatpush2.bf16.msra.mxu0 %v3547
        %3918 = vmatprep.subr.bf16.mxu0 0
        %3919 = vmatpush2.bf16.msra.mxu0 %v3546
        %3920 = vmatprep.subr.bf16.mxu0 0
        %3921 = vmatpush2.bf16.msra.mxu0 %v3545
        %3922 = vmatprep.subr.bf16.mxu0 0
        %3923 = vmatpush2.bf16.msra.mxu0 %v3544
        %3924 = vmatprep.mubr.bf16.mxu0 %v2690
        %3925 = vmatmul.mubr.bf16.gmra.mxu0 %v2689
        %v3926 = vpop.f32.mrf.mxu0
        %v3927 = vadd.f32 %v3886, %v3926
        %v3928 = vpop.f32.mrf.mxu0
        %v3929 = vpop.f32.mrf.mxu0
        %v3930 = vadd.f32 %v3889, %v3929
        %v3931 = vpop.f32.mrf.mxu0
        %3932 = vdwg.mxu0
        %3933 = vmatprep.subr.bf16.mxu0 0
        %3934 = vmatpush1.bf16.msra.mxu0 %v3559
        %3935 = vmatprep.subr.bf16.mxu0 0
        %3936 = vmatpush1.bf16.msra.mxu0 %v3558
        %3937 = vmatprep.subr.bf16.mxu0 0
        %3938 = vmatpush1.bf16.msra.mxu0 %v3557
        %3939 = vmatprep.subr.bf16.mxu0 0
        %3940 = vmatpush1.bf16.msra.mxu0 %v3556
        %3941 = vmatprep.subr.bf16.mxu0 0
        %3942 = vmatpush1.bf16.msra.mxu0 %v3555
        %3943 = vmatprep.subr.bf16.mxu0 0
        %3944 = vmatpush1.bf16.msra.mxu0 %v3554
        %3945 = vmatprep.subr.bf16.mxu0 0
        %3946 = vmatpush1.bf16.msra.mxu0 %v3553
        %3947 = vmatprep.subr.bf16.mxu0 0
        %3948 = vmatpush1.bf16.msra.mxu0 %v3552
        %3949 = vmatprep.subr.bf16.mxu0 0
        %3950 = vmatpush2.bf16.msra.mxu0 %v3567
        %3951 = vmatprep.subr.bf16.mxu0 0
        %3952 = vmatpush2.bf16.msra.mxu0 %v3566
        %3953 = vmatprep.subr.bf16.mxu0 0
        %3954 = vmatpush2.bf16.msra.mxu0 %v3565
        %3955 = vmatprep.subr.bf16.mxu0 0
        %3956 = vmatpush2.bf16.msra.mxu0 %v3564
        %3957 = vmatprep.subr.bf16.mxu0 0
        %3958 = vmatpush2.bf16.msra.mxu0 %v3563
        %3959 = vmatprep.subr.bf16.mxu0 0
        %3960 = vmatpush2.bf16.msra.mxu0 %v3562
        %3961 = vmatprep.subr.bf16.mxu0 0
        %3962 = vmatpush2.bf16.msra.mxu0 %v3561
        %3963 = vmatprep.subr.bf16.mxu0 0
        %3964 = vmatpush2.bf16.msra.mxu0 %v3560
        %3965 = vmatprep.mubr.bf16.mxu0 %v2692
        %3966 = vmatmul.mubr.bf16.gmra.mxu0 %v2691
        %v3967 = vpop.f32.mrf.mxu0
        %v3968 = vadd.f32 %v3927, %v3967
        %v3969 = vpop.f32.mrf.mxu0
        %v3970 = vpop.f32.mrf.mxu0
        %v3971 = vadd.f32 %v3930, %v3970
        %v3972 = vpop.f32.mrf.mxu0
        %3973 = vdwg.mxu0
        %3974 = vmatprep.subr.bf16.mxu0 0
        %3975 = vmatpush1.bf16.msra.mxu0 %v3575
        %3976 = vmatprep.subr.bf16.mxu0 0
        %3977 = vmatpush1.bf16.msra.mxu0 %v3574
        %3978 = vmatprep.subr.bf16.mxu0 0
        %3979 = vmatpush1.bf16.msra.mxu0 %v3573
        %3980 = vmatprep.subr.bf16.mxu0 0
        %3981 = vmatpush1.bf16.msra.mxu0 %v3572
        %3982 = vmatprep.subr.bf16.mxu0 0
        %3983 = vmatpush1.bf16.msra.mxu0 %v3571
        %3984 = vmatprep.subr.bf16.mxu0 0
        %3985 = vmatpush1.bf16.msra.mxu0 %v3570
        %3986 = vmatprep.subr.bf16.mxu0 0
        %3987 = vmatpush1.bf16.msra.mxu0 %v3569
        %3988 = vmatprep.subr.bf16.mxu0 0
        %3989 = vmatpush1.bf16.msra.mxu0 %v3568
        %3990 = vmatprep.subr.bf16.mxu0 0
        %3991 = vmatpush2.bf16.msra.mxu0 %v3583
        %3992 = vmatprep.subr.bf16.mxu0 0
        %3993 = vmatpush2.bf16.msra.mxu0 %v3582
        %3994 = vmatprep.subr.bf16.mxu0 0
        %3995 = vmatpush2.bf16.msra.mxu0 %v3581
        %3996 = vmatprep.subr.bf16.mxu0 0
        %3997 = vmatpush2.bf16.msra.mxu0 %v3580
        %3998 = vmatprep.subr.bf16.mxu0 0
        %3999 = vmatpush2.bf16.msra.mxu0 %v3579
        %4000 = vmatprep.subr.bf16.mxu0 0
        %4001 = vmatpush2.bf16.msra.mxu0 %v3578
        %4002 = vmatprep.subr.bf16.mxu0 0
        %4003 = vmatpush2.bf16.msra.mxu0 %v3577
        %4004 = vmatprep.subr.bf16.mxu0 0
        %4005 = vmatpush2.bf16.msra.mxu0 %v3576
        %4006 = vmatprep.mubr.bf16.mxu0 %v2694
        %4007 = vmatmul.mubr.bf16.gmra.mxu0 %v2693
        %v4008 = vpop.f32.mrf.mxu0
        %v4009 = vadd.f32 %v3968, %v4008
        %v4010 = vpop.f32.mrf.mxu0
        %v4011 = vpop.f32.mrf.mxu0
        %v4012 = vadd.f32 %v3971, %v4011
        %v4013 = vpop.f32.mrf.mxu0
        %4014 = vdwg.mxu0
        %4015 = vmatprep.subr.bf16.mxu0 0
        %4016 = vmatpush1.bf16.msra.mxu0 %v3591
        %4017 = vmatprep.subr.bf16.mxu0 0
        %4018 = vmatpush1.bf16.msra.mxu0 %v3590
        %4019 = vmatprep.subr.bf16.mxu0 0
        %4020 = vmatpush1.bf16.msra.mxu0 %v3589
        %4021 = vmatprep.subr.bf16.mxu0 0
        %4022 = vmatpush1.bf16.msra.mxu0 %v3588
        %4023 = vmatprep.subr.bf16.mxu0 0
        %4024 = vmatpush1.bf16.msra.mxu0 %v3587
        %4025 = vmatprep.subr.bf16.mxu0 0
        %4026 = vmatpush1.bf16.msra.mxu0 %v3586
        %4027 = vmatprep.subr.bf16.mxu0 0
        %4028 = vmatpush1.bf16.msra.mxu0 %v3585
        %4029 = vmatprep.subr.bf16.mxu0 0
        %4030 = vmatpush1.bf16.msra.mxu0 %v3584
        %4031 = vmatprep.subr.bf16.mxu0 0
        %4032 = vmatpush2.bf16.msra.mxu0 %v3599
        %4033 = vmatprep.subr.bf16.mxu0 0
        %4034 = vmatpush2.bf16.msra.mxu0 %v3598
        %4035 = vmatprep.subr.bf16.mxu0 0
        %4036 = vmatpush2.bf16.msra.mxu0 %v3597
        %4037 = vmatprep.subr.bf16.mxu0 0
        %4038 = vmatpush2.bf16.msra.mxu0 %v3596
        %4039 = vmatprep.subr.bf16.mxu0 0
        %4040 = vmatpush2.bf16.msra.mxu0 %v3595
        %4041 = vmatprep.subr.bf16.mxu0 0
        %4042 = vmatpush2.bf16.msra.mxu0 %v3594
        %4043 = vmatprep.subr.bf16.mxu0 0
        %4044 = vmatpush2.bf16.msra.mxu0 %v3593
        %4045 = vmatprep.subr.bf16.mxu0 0
        %4046 = vmatpush2.bf16.msra.mxu0 %v3592
        %4047 = vmatprep.mubr.bf16.mxu0 %v2696
        %4048 = vmatmul.mubr.bf16.gmra.mxu0 %v2695
        %v4049 = vpop.f32.mrf.mxu0
        %v4050 = vadd.f32 %v4009, %v4049
        %v4051 = vpop.f32.mrf.mxu0
        %v4052 = vpop.f32.mrf.mxu0
        %v4053 = vadd.f32 %v4012, %v4052
        %v4054 = vpop.f32.mrf.mxu0
        %4055 = vdwg.mxu0
        %v4056 = vadd.f32 %v1965, %v4050
        %v4057 = vadd.f32 %v1966, %v4053
        %4058 = vst.msk [vmem:[#allocation2] sm:$0xff] %vm771, %v4056
        %4059 = vst.msk [vmem:[#allocation2 + $0x8] sm:$0xff] %vm771, %v4057
        %p4060 = scmp.eq.s32.totalorder %s33, 1
        // Predicated region
        $region89: #{tpu_custom_call.1} parent=83 // pred_check
          %p4061 = pneg %p4060
        $region90: #{tpu_custom_call.1} parent=83 // pred_check_branch
          %4063 = sbr.rel (%p4061) target = $region92
        $region91: #{tpu_custom_call.1} parent=83 // pred_region
          %v4064 = vld [vmem:[%s14] sm:$0x1]
          %v4065 = vld [vmem:[%s15] sm:$0x1]
          %v4066 = vsel %vm771, %v4056, 0.0
          %4067 = vadd.xlane.f32.xlu0 %v4066
          %v4068 = vpop.xlane.xlu0 %4067
          %v4069 = vsel %vm771, %v4057, 0.0
          %4070 = vadd.xlane.f32.xlu0 %v4069
          %v4071 = vpop.xlane.xlu0 %4070
          %v4072 = vmul.f32 %v4068, %v778
          %v4073 = vmul.f32 %v4071, %v778
          %v4074 = vsub.f32 %v4056, %v4072
          %v4075 = vsub.f32 %v4057, %v4073
          %v4076 = vmul.f32 %v4074, %v4074
          %v4077 = vmul.f32 %v4075, %v4075
          %v4078 = vsel %vm771, %v4076, 0.0
          %4079 = vadd.xlane.f32.xlu0 %v4078
          %v4080 = vpop.xlane.xlu0 %4079
          %v4081 = vsel %vm771, %v4077, 0.0
          %4082 = vadd.xlane.f32.xlu0 %v4081
          %v4083 = vpop.xlane.xlu0 %4082
          %v4084 = vmul.f32 %v4080, 0.032258064
          %v4085 = vmul.f32 %v4083, 0.032258064
          %v4086 = vrsqrt.pop %v4084
          %v4087 = vmul.f32 %v4084, %v4086
          %vm4088 = vcmp.eq.f32.partialorder %v4084, inf
          %v4089 = vsel %vm4088, %v4084, %v4087
          %vm4090 = vcmp.eq.f32.partialorder %v4084, 0.0
          %v4091 = vand.u32 %v4084, 2147483648
          %v4092 = vsel %vm4090, %v4091, %v4089
          %v4093 = vrsqrt.pop %v4085
          %v4094 = vmul.f32 %v4085, %v4093
          %vm4095 = vcmp.eq.f32.partialorder %v4085, inf
          %v4096 = vsel %vm4095, %v4085, %v4094
          %vm4097 = vcmp.eq.f32.partialorder %v4085, 0.0
          %v4098 = vand.u32 %v4085, 2147483648
          %v4099 = vsel %vm4097, %v4098, %v4096
          %v4101 = vlaneseq
          %v4102 = vshrl.u32 %v4101, 7
          %v4103 = vsub.s32 0, %v4102
          %v4104 = vrot.slane %v4064, %v4103
          %v4106 = vmul.f32 %v4104, %v4074
          %v4107 = vmul.f32 %v4104, %v4075
          %v4108 = vadd.f32 %v4092, 1e-06
          %v4109 = vadd.f32 %v4099, 1e-06
          %v4110 = vrcp.pop %v4108
          %v4111 = vmul.f32 %v4106, %v4110
          %v4112 = vrcp.pop %v4109
          %v4113 = vmul.f32 %v4107, %v4112
          %v4115 = vlaneseq
          %v4116 = vshrl.u32 %v4115, 7
          %v4117 = vsub.s32 0, %v4116
          %v4118 = vrot.slane %v4065, %v4117
          %v4120 = vadd.f32 %v4111, %v4118
          %v4121 = vadd.f32 %v4113, %v4118
          %4122 = vst.msk [vmem:[#allocation4] sm:$0xff] %vm771, %v4120
          %4123 = vst.msk [vmem:[#allocation4 + $0x8] sm:$0xff] %vm771, %v4121
        $region92: #{tpu_custom_call.1} parent=83 // pred_fallthru
          _
        // Predicated region
        $region93: #{tpu_custom_call.1} parent=83 // pred_check
          %p4124 = pneg %p464
        $region94: #{tpu_custom_call.1} parent=83 // pred_check_branch
          %4126 = sbr.rel (%p4124) target = $region96
        $region95: #{tpu_custom_call.1} parent=83 // pred_region
          %s4127 = smul.u32 2, %s32
          %s4129 = ssub.s32 256, 256
          %4130 = vsyncadd [#allocation5], %s4129
          %s4131 = smul.addr %s4127, 128
          %s4132 = scalar_lea.hbm %s16, %s4131
          %s4133 = sshll.u32 [#allocation4], 4
          %s4134 = int_to_ptr.vmem [resolvable:$true] %s4133
          %4139 = dma.vmem_to_hbm [thread:$0]  %s4134, 256, %s4132, [#allocation5], 128, 128, 8
        $region96: #{tpu_custom_call.1} parent=83 // pred_fallthru
          _
        // Predicated region
        $region97: #{tpu_custom_call.1} parent=83 // pred_check
          %p4140 = pneg %p464
        $region98: #{tpu_custom_call.1} parent=83 // pred_check_branch
          %4142 = sbr.rel (%p4140) target = $region100
        $region99: #{tpu_custom_call.1} parent=83 // pred_region
          %4143 = dma.done [#allocation5], 256
        $region100: #{tpu_custom_call.1} parent=83 // pred_fallthru
          _
      $region84: #{tpu_custom_call.1} parent=5 // pred_fallthru
        _
      %p4144 = scmp.le.s32.totalorder 2, %s23
      // Predicated region
      $region101: #{tpu_custom_call.1} parent=5 // pred_check
        %p4145 = pneg %p4144
      $region102: #{tpu_custom_call.1} parent=5 // pred_check_branch
        %4147 = sbr.rel (%p4145) target = $region104
      $region103: #{tpu_custom_call.1} parent=5 // pred_region
        %s4148 = ssub.s32 %s23, 2
      $region104: #{tpu_custom_call.1} parent=5 // pred_fallthru
        _
    $region6: #{tpu_custom_call.1} parent=1 // loop_footer
      %s27 = sadd.s32 1, %s23
    $region7: #{tpu_custom_call.1} parent=1 // loop_footer_branch
      %22 = sbr.rel target = $region3
    $region8: #{tpu_custom_call.1} parent=1 // loop_exit
      _
    %4149 = vsyncpa [#allocation5], 1
    %s4150 = scalar_lea.sflag [#allocation5], 1
    %4151 = vsyncpa %s4150, 1

</llo_original>
